<compile_context>
chip_gen: v7x
topology: tpu7x:2x2x1
jax: 0.10.0
libtpu: 0.0.40
codegen_flags: <defaults>
</compile_context>

<pallas_src>
import functools

import jax
import jax.numpy as jnp
from jax.experimental import pallas as pl
from jax.experimental.pallas import tpu as pltpu


def _round_up(x, m):
    return ((x + m - 1) // m) * m


def _pick_tile_h(h):
    """Largest convenient H-strip size that divides H (prefers >=2 strips)."""
    for t in (32, 16, 8, 4, 2):
        if h % t == 0 and h // t >= 2:
            return t
    return h


# ----------------------------------------------------------------------------
# Fused kernel: [3x3 conv + folded BN + ReLU] x 2 on one (batch, H-strip) tile.
# ----------------------------------------------------------------------------
def _double_conv_kernel(x_ref, mask_ref, w1_ref, s1_ref, b1_ref,
                        w2_ref, s2_ref, b2_ref, o_ref,
                        lhs1_ref, mid_ref, lhs2_ref,
                        *, Wi, R1, R2, Cpi, Cpm):
    # x_ref   : (Si, Cpi)     f32  flattened (TH+4, Wi) input strip (+slack rows)
    # mask_ref: (R1, 1)       f32  1.0 where mid is a real interior value
    # w1_ref  : (9*Cpi, Cpm)  bf16 ; s1/b1 : (1, Cpm) f32
    # w2_ref  : (9*Cpm, Cpo)  bf16 ; s2/b2 : (1, Cpo) f32
    # o_ref   : (R2, Cpo)     f32  flattened (TH, Wi) output tile
    # scratch : lhs1 (R1, 9*Cpi) f32, mid (R1, Cpm) f32, lhs2 (R2, 9*Cpm) f32

    # ---- conv1: pack the 9 taps along the contraction dim -> one MXU matmul --
    for t in range(9):
        dy, dx = divmod(t, 3)
        lhs1_ref[:, t * Cpi:(t + 1) * Cpi] = x_ref[pl.ds(dy * Wi + dx, R1), :]
    acc1 = jnp.dot(lhs1_ref[...].astype(jnp.bfloat16), w1_ref[...],
                   preferred_element_type=jnp.float32)            # (R1, Cpm)
    mid = jnp.maximum(acc1 * s1_ref[...] + b1_ref[...], 0.0)      # BN + ReLU
    # Zero the halo / padding ring so conv2 sees proper SAME zero-padding.
    mid_ref[...] = mid * mask_ref[...]

    # ---- conv2: same tap packing on the VMEM-resident mid activation ---------
    for t in range(9):
        dy, dx = divmod(t, 3)
        lhs2_ref[:, t * Cpm:(t + 1) * Cpm] = mid_ref[pl.ds(dy * Wi + dx, R2), :]
    acc2 = jnp.dot(lhs2_ref[...].astype(jnp.bfloat16), w2_ref[...],
                   preferred_element_type=jnp.float32)            # (R2, Cpo)
    y = jnp.maximum(acc2 * s2_ref[...] + b2_ref[...], 0.0)
    o_ref[...] = y.astype(o_ref.dtype)                            # lane-dense vst


def _pack_conv_params(w_hwio, scale, bias, cpi, cpo):
    """(3,3,Cin,Cout) -> (9*Cpi, Cpo) bf16; scale/bias -> (1, Cpo) f32 (zero-padded)."""
    kh, kw, cin, cout = w_hwio.shape
    w = jnp.pad(w_hwio, ((0, 0), (0, 0), (0, cpi - cin), (0, cpo - cout)))
    w = w.reshape(kh * kw * cpi, cpo).astype(jnp.bfloat16)
    s = jnp.pad(scale, (0, cpo - cout)).reshape(1, cpo).astype(jnp.float32)
    b = jnp.pad(bias, (0, cpo - cout)).reshape(1, cpo).astype(jnp.float32)
    return w, s, b


def double_conv_pallas(x_nhwc, params):
    """Fused (conv3x3 + BN + ReLU) x 2 on an NHWC tensor via one pallas_call."""
    N, H, W, Cin = x_nhwc.shape
    Cmid = params['w1'].shape[-1]
    Cout = params['w2'].shape[-1]
    Cpi = _round_up(Cin, 8)
    Cpm = _round_up(Cmid, 8)
    Cpo = _round_up(Cout, 128)          # lane-dense output stores

    TH = _pick_tile_h(H)
    n_h = H // TH
    Wi = W + 4                          # 2 halo/zero-pad columns each side
    R1 = (TH + 2) * Wi + 8              # mid rows computed per strip (+slack)
    R2 = TH * Wi                        # output rows per strip
    Si = R1 + 2 * Wi + 8                # input rows per strip (+slack)

    # --- input prep: channel+spatial pad, halo'd H-strips, flatten (rows, C) --
    xp = jnp.pad(x_nhwc, ((0, 0), (2, 2), (2, 2), (0, Cpi - Cin)))
    strips = jnp.stack([xp[:, i * TH:i * TH + TH + 4] for i in range(n_h)],
                       axis=1)                                   # (N,n_h,TH+4,Wi,Cpi)
    strips = strips.reshape(N, n_h, (TH + 4) * Wi, Cpi)
    strips = jnp.pad(strips, ((0, 0), (0, 0), (0, Si - (TH + 4) * Wi), (0, 0)))
    strips = strips.astype(jnp.float32)

    # --- per-strip validity mask for the mid activation (conv2 zero ring) -----
    r = jnp.arange(R1) // Wi
    c = jnp.arange(R1) % Wi
    col_ok = (c >= 1) & (c <= W) & (r < TH + 2)
    masks = []
    for h in range(n_h):
        gl = r + h * TH - 1
        masks.append(col_ok & (gl >= 0) & (gl < H))
    mask = jnp.stack(masks).astype(jnp.float32).reshape(n_h, R1, 1)

    # --- packed / BN-folded parameters ---------------------------------------
    w1p, s1, b1 = _pack_conv_params(params['w1'], params['scale1'],
                                    params['bias1'], Cpi, Cpm)
    w2p, s2, b2 = _pack_conv_params(params['w2'], params['scale2'],
                                    params['bias2'], Cpm, Cpo)

    kernel = functools.partial(_double_conv_kernel, Wi=Wi, R1=R1, R2=R2,
                               Cpi=Cpi, Cpm=Cpm)

    out = pl.pallas_call(
        kernel,
        out_shape=jax.ShapeDtypeStruct((N, n_h, R2, Cpo), jnp.float32),
        grid=(N, n_h),
        in_specs=[
            pl.BlockSpec((None, None, Si, Cpi), lambda n, h: (n, h, 0, 0)),
            pl.BlockSpec((None, R1, 1), lambda n, h: (h, 0, 0)),
            pl.BlockSpec((9 * Cpi, Cpm), lambda n, h: (0, 0)),
            pl.BlockSpec((1, Cpm), lambda n, h: (0, 0)),
            pl.BlockSpec((1, Cpm), lambda n, h: (0, 0)),
            pl.BlockSpec((9 * Cpm, Cpo), lambda n, h: (0, 0)),
            pl.BlockSpec((1, Cpo), lambda n, h: (0, 0)),
            pl.BlockSpec((1, Cpo), lambda n, h: (0, 0)),
        ],
        out_specs=pl.BlockSpec((None, None, R2, Cpo), lambda n, h: (n, h, 0, 0)),
        scratch_shapes=[
            pltpu.VMEM((R1, 9 * Cpi), jnp.float32),   # packed conv1 LHS
            pltpu.VMEM((R1, Cpm), jnp.float32),       # mid activation
            pltpu.VMEM((R2, 9 * Cpm), jnp.float32),   # packed conv2 LHS
        ],
        compiler_params=pltpu.CompilerParams(
            dimension_semantics=("parallel", "parallel")),
    )(strips, mask, w1p, s1, b1, w2p, s2, b2)

    # (N, n_h, TH*Wi, Cpo) -> (N, H, W, Cout): drop pad columns / pad channels.
    out = out.reshape(N, n_h, TH, Wi, Cpo)[:, :, :, :W, :Cout]
    return out.reshape(N, H, W, Cout)


# ----------------------------------------------------------------------------
# Glue: bilinear upsample (align_corners=True), pad, concat  (plain JAX, NHWC)
# ----------------------------------------------------------------------------
def _bilinear_matrix(n_in, n_out):
    idx = jnp.arange(n_out, dtype=jnp.float32)
    denom = max(n_out - 1, 1)
    src = idx * (n_in - 1) / denom
    lo = jnp.floor(src).astype(jnp.int32)
    hi = jnp.minimum(lo + 1, n_in - 1)
    frac = src - lo.astype(jnp.float32)
    A = jnp.zeros((n_out, n_in), jnp.float32)
    A = A.at[jnp.arange(n_out), lo].add(1.0 - frac)
    A = A.at[jnp.arange(n_out), hi].add(frac)
    return A


def _up_pad_concat_nhwc(x1_nchw, x2_nchw):
    """Upsample x1 2x (bilinear, align_corners=True), pad to x2, concat -> NHWC."""
    _, _, H1, W1 = x1_nchw.shape
    _, _, H2, W2 = x2_nchw.shape
    Ah = _bilinear_matrix(H1, 2 * H1)
    Aw = _bilinear_matrix(W1, 2 * W1)
    x1_up = jnp.einsum('ph,nchw,qw->npqc', Ah, x1_nchw, Aw)  # straight to NHWC
    diffY = H2 - x1_up.shape[1]
    diffX = W2 - x1_up.shape[2]
    x1_up = jnp.pad(x1_up, ((0, 0),
                            (diffY // 2, diffY - diffY // 2),
                            (diffX // 2, diffX - diffX // 2),
                            (0, 0)))
    x2_nhwc = jnp.transpose(x2_nchw, (0, 2, 3, 1))
    return jnp.concatenate([x2_nhwc, x1_up], axis=-1)        # [x2, x1] like torch


# ----------------------------------------------------------------------------
# UpModified forward (Pallas) and a pure-JAX reference
# ----------------------------------------------------------------------------
def up_modified_forward(params, x1, x2):
    x = _up_pad_concat_nhwc(x1, x2)           # (N, H, W, Cin) f32
    y = double_conv_pallas(x, params)         # (N, H, W, Cout)
    return jnp.transpose(y, (0, 3, 1, 2))     # back to NCHW (module interface)


def _ref_conv_bn_relu(x_nhwc, w_hwio, scale, bias):
    y = jax.lax.conv_general_dilated(
        x_nhwc, w_hwio, window_strides=(1, 1), padding='SAME',
        dimension_numbers=('NHWC', 'HWIO', 'NHWC'))
    return jnp.maximum(y * scale + bias, 0.0)


def up_modified_reference(params, x1, x2):
    x = _up_pad_concat_nhwc(x1, x2)
    y = _ref_conv_bn_relu(x, params['w1'], params['scale1'], params['bias1'])
    y = _ref_conv_bn_relu(y, params['w2'], params['scale2'], params['bias2'])
    return jnp.transpose(y, (0, 3, 1, 2))


# ----------------------------------------------------------------------------
# Deterministic parameter init (DoubleConv(in, out, mid=in//2), BN eval mode)
# ----------------------------------------------------------------------------
def init_params(key, in_channels, out_channels):
    mid = in_channels // 2
    eps = 1e-5
    ks = jax.random.split(key, 12)

    def conv_w(k, cin, cout):
        b = 1.0 / jnp.sqrt(cin * 9.0)
        return jax.random.uniform(k, (3, 3, cin, cout), jnp.float32, -b, b)

    def bn_fold(k_list, conv_bias, c):
        gamma = 1.0 + 0.1 * jax.random.normal(k_list[0], (c,), jnp.float32)
        beta = 0.1 * jax.random.normal(k_list[1], (c,), jnp.float32)
        mean = 0.1 * jax.random.normal(k_list[2], (c,), jnp.float32)
        var = 1.0 + 0.1 * jnp.abs(jax.random.normal(k_list[3], (c,), jnp.float32))
        scale = gamma / jnp.sqrt(var + eps)
        bias = (conv_bias - mean) * scale + beta
        return scale, bias

    w1 = conv_w(ks[0], in_channels, mid)
    b1 = jax.random.uniform(ks[1], (mid,), jnp.float32, -0.1, 0.1)
    scale1, bias1 = bn_fold(ks[2:6], b1, mid)

    w2 = conv_w(ks[6], mid, out_channels)
    b2 = jax.random.uniform(ks[7], (out_channels,), jnp.float32, -0.1, 0.1)
    scale2, bias2 = bn_fold(ks[8:12], b2, out_channels)

    return dict(w1=w1, scale1=scale1, bias1=bias1,
                w2=w2, scale2=scale2, bias2=bias2)


# ----------------------------------------------------------------------------
if __name__ == "__main__":
    key = jax.random.PRNGKey(0)
    k1, k2, kp = jax.random.split(key, 3)

    in_channels, out_channels = 8, 4            # DoubleConv(8 -> mid=4 -> 4)
    # x1: deeper feature (in_channels//2 ch, half spatial); x2: skip connection.
    x1 = jax.random.normal(k1, (2, in_channels // 2, 8, 8), jnp.float32)
    x2 = jax.random.normal(k2, (2, in_channels // 2, 16, 16), jnp.float32)

    params = init_params(kp, in_channels, out_channels)

    fwd = jax.jit(functools.partial(up_modified_forward, params))
    out = jax.block_until_ready(fwd(x1, x2))

    ref = up_modified_reference(params, x1, x2)
    assert out.shape == (2, out_channels, 16, 16), out.shape
    max_err = float(jnp.max(jnp.abs(out - ref)))
    # bf16 matmul operands (f32 accumulate) vs an all-f32 reference.
    assert jnp.allclose(out, ref, atol=3e-2, rtol=3e-2), f"max_err={max_err}"

    print("KERNEL_OK")
</pallas_src>

<mosaic_0001>
module attributes {stable_mosaic.version = 11 : i64} {
  func.func private @main(%arg0: i32) attributes {dimension_semantics = [#tpu.dimension_semantics<core_parallel>], iteration_bounds = array<i64: 2>, tpu.core_type = #tpu.core_type<sc_scalar_subcore>, window_params = []} {
    return
  }
}

module attributes {stable_mosaic.version = 11 : i64} {
  func.func private @main(%arg0: i32) attributes {dimension_semantics = [#tpu.dimension_semantics<core_parallel>], iteration_bounds = array<i64: 2>, tpu.core_type = #tpu.core_type<sc_scalar_subcore>, window_params = []} {
    return
  }
}

module attributes {stable_mosaic.version = 11 : i64} {
  func.func @_double_conv_kernel(%arg0: i32, %arg1: i32, %arg2: memref<1x1x256x8xf32, #tpu.memory_space<vmem>>, %arg3: memref<1x208x1xf32, #tpu.memory_space<vmem>>, %arg4: memref<72x8xbf16, #tpu.memory_space<vmem>>, %arg5: memref<1x8xf32, #tpu.memory_space<vmem>>, %arg6: memref<1x8xf32, #tpu.memory_space<vmem>>, %arg7: memref<72x128xbf16, #tpu.memory_space<vmem>>, %arg8: memref<1x128xf32, #tpu.memory_space<vmem>>, %arg9: memref<1x128xf32, #tpu.memory_space<vmem>>, %arg10: memref<1x1x160x128xf32, #tpu.memory_space<vmem>>, %arg11: memref<208x72xf32, #tpu.memory_space<vmem>>, %arg12: memref<208x8xf32, #tpu.memory_space<vmem>>, %arg13: memref<160x72xf32, #tpu.memory_space<vmem>>) attributes {dimension_semantics = [#tpu.dimension_semantics<parallel>, #tpu.dimension_semantics<parallel>], iteration_bounds = array<i64: 2, 2>, scalar_prefetch = 0 : i64, scratch_operands = 3 : i64, tpu.core_type = #tpu.core_type<tc>, window_params = [{transform_indices = @transform_0, window_bounds = array<i64: 1, 1, 256, 8>}, {transform_indices = @transform_1, window_bounds = array<i64: 1, 208, 1>}, {pipeline_mode = #tpu.pipeline_mode<synchronous>, transform_indices = @transform_2, window_bounds = array<i64: 72, 8>}, {pipeline_mode = #tpu.pipeline_mode<synchronous>, transform_indices = @transform_3, window_bounds = array<i64: 1, 8>}, {pipeline_mode = #tpu.pipeline_mode<synchronous>, transform_indices = @transform_4, window_bounds = array<i64: 1, 8>}, {pipeline_mode = #tpu.pipeline_mode<synchronous>, transform_indices = @transform_5, window_bounds = array<i64: 72, 128>}, {pipeline_mode = #tpu.pipeline_mode<synchronous>, transform_indices = @transform_6, window_bounds = array<i64: 1, 128>}, {pipeline_mode = #tpu.pipeline_mode<synchronous>, transform_indices = @transform_7, window_bounds = array<i64: 1, 128>}, {transform_indices = @transform_8, window_bounds = array<i64: 1, 1, 160, 128>}]} {
    %c0 = arith.constant 0 : index
    %c0_0 = arith.constant 0 : index
    %c0_1 = arith.constant 0 : index
    %c0_2 = arith.constant 0 : index
    %0 = vector.load %arg2[%c0, %c0_0, %c0_1, %c0_2] : memref<1x1x256x8xf32, #tpu.memory_space<vmem>>, vector<1x1x208x8xf32>
    %1 = vector.shape_cast %0 : vector<1x1x208x8xf32> to vector<208x8xf32>
    %c0_3 = arith.constant 0 : index
    %c0_4 = arith.constant 0 : index
    %2 = vector.load %arg11[%c0_3, %c0_4] : memref<208x72xf32, #tpu.memory_space<vmem>>, vector<208x8xf32>
    tpu.vector_store %arg11[%c0_3, %c0_4], %1 {strides = array<i32>} : memref<208x72xf32, #tpu.memory_space<vmem>>, vector<208x8xf32>,
    %c0_5 = arith.constant 0 : index
    %c0_6 = arith.constant 0 : index
    %c1 = arith.constant 1 : index
    %c0_7 = arith.constant 0 : index
    %3 = vector.load %arg2[%c0_5, %c0_6, %c1, %c0_7] : memref<1x1x256x8xf32, #tpu.memory_space<vmem>>, vector<1x1x208x8xf32>
    %4 = vector.shape_cast %3 : vector<1x1x208x8xf32> to vector<208x8xf32>
    %c0_8 = arith.constant 0 : index
    %c8 = arith.constant 8 : index
    %5 = vector.load %arg11[%c0_8, %c8] : memref<208x72xf32, #tpu.memory_space<vmem>>, vector<208x8xf32>
    tpu.vector_store %arg11[%c0_8, %c8], %4 {strides = array<i32>} : memref<208x72xf32, #tpu.memory_space<vmem>>, vector<208x8xf32>,
    %c0_9 = arith.constant 0 : index
    %c0_10 = arith.constant 0 : index
    %c2 = arith.constant 2 : index
    %c0_11 = arith.constant 0 : index
    %6 = vector.load %arg2[%c0_9, %c0_10, %c2, %c0_11] : memref<1x1x256x8xf32, #tpu.memory_space<vmem>>, vector<1x1x208x8xf32>
    %7 = vector.shape_cast %6 : vector<1x1x208x8xf32> to vector<208x8xf32>
    %c0_12 = arith.constant 0 : index
    %c16 = arith.constant 16 : index
    %8 = vector.load %arg11[%c0_12, %c16] : memref<208x72xf32, #tpu.memory_space<vmem>>, vector<208x8xf32>
    tpu.vector_store %arg11[%c0_12, %c16], %7 {strides = array<i32>} : memref<208x72xf32, #tpu.memory_space<vmem>>, vector<208x8xf32>,
    %c0_13 = arith.constant 0 : index
    %c0_14 = arith.constant 0 : index
    %c20 = arith.constant 20 : index
    %c0_15 = arith.constant 0 : index
    %9 = vector.load %arg2[%c0_13, %c0_14, %c20, %c0_15] : memref<1x1x256x8xf32, #tpu.memory_space<vmem>>, vector<1x1x208x8xf32>
    %10 = vector.shape_cast %9 : vector<1x1x208x8xf32> to vector<208x8xf32>
    %c0_16 = arith.constant 0 : index
    %c24 = arith.constant 24 : index
    %11 = vector.load %arg11[%c0_16, %c24] : memref<208x72xf32, #tpu.memory_space<vmem>>, vector<208x8xf32>
    tpu.vector_store %arg11[%c0_16, %c24], %10 {strides = array<i32>} : memref<208x72xf32, #tpu.memory_space<vmem>>, vector<208x8xf32>,
    %c0_17 = arith.constant 0 : index
    %c0_18 = arith.constant 0 : index
    %c21 = arith.constant 21 : index
    %c0_19 = arith.constant 0 : index
    %12 = vector.load %arg2[%c0_17, %c0_18, %c21, %c0_19] : memref<1x1x256x8xf32, #tpu.memory_space<vmem>>, vector<1x1x208x8xf32>
    %13 = vector.shape_cast %12 : vector<1x1x208x8xf32> to vector<208x8xf32>
    %c0_20 = arith.constant 0 : index
    %c32 = arith.constant 32 : index
    %14 = vector.load %arg11[%c0_20, %c32] : memref<208x72xf32, #tpu.memory_space<vmem>>, vector<208x8xf32>
    tpu.vector_store %arg11[%c0_20, %c32], %13 {strides = array<i32>} : memref<208x72xf32, #tpu.memory_space<vmem>>, vector<208x8xf32>,
    %c0_21 = arith.constant 0 : index
    %c0_22 = arith.constant 0 : index
    %c22 = arith.constant 22 : index
    %c0_23 = arith.constant 0 : index
    %15 = vector.load %arg2[%c0_21, %c0_22, %c22, %c0_23] : memref<1x1x256x8xf32, #tpu.memory_space<vmem>>, vector<1x1x208x8xf32>
    %16 = vector.shape_cast %15 : vector<1x1x208x8xf32> to vector<208x8xf32>
    %c0_24 = arith.constant 0 : index
    %c40 = arith.constant 40 : index
    %17 = vector.load %arg11[%c0_24, %c40] : memref<208x72xf32, #tpu.memory_space<vmem>>, vector<208x8xf32>
    tpu.vector_store %arg11[%c0_24, %c40], %16 {strides = array<i32>} : memref<208x72xf32, #tpu.memory_space<vmem>>, vector<208x8xf32>,
    %c0_25 = arith.constant 0 : index
    %c0_26 = arith.constant 0 : index
    %c40_27 = arith.constant 40 : index
    %c0_28 = arith.constant 0 : index
    %18 = vector.load %arg2[%c0_25, %c0_26, %c40_27, %c0_28] : memref<1x1x256x8xf32, #tpu.memory_space<vmem>>, vector<1x1x208x8xf32>
    %19 = vector.shape_cast %18 : vector<1x1x208x8xf32> to vector<208x8xf32>
    %c0_29 = arith.constant 0 : index
    %c48 = arith.constant 48 : index
    %20 = vector.load %arg11[%c0_29, %c48] : memref<208x72xf32, #tpu.memory_space<vmem>>, vector<208x8xf32>
    tpu.vector_store %arg11[%c0_29, %c48], %19 {strides = array<i32>} : memref<208x72xf32, #tpu.memory_space<vmem>>, vector<208x8xf32>,
    %c0_30 = arith.constant 0 : index
    %c0_31 = arith.constant 0 : index
    %c41 = arith.constant 41 : index
    %c0_32 = arith.constant 0 : index
    %21 = vector.load %arg2[%c0_30, %c0_31, %c41, %c0_32] : memref<1x1x256x8xf32, #tpu.memory_space<vmem>>, vector<1x1x208x8xf32>
    %22 = vector.shape_cast %21 : vector<1x1x208x8xf32> to vector<208x8xf32>
    %c0_33 = arith.constant 0 : index
    %c56 = arith.constant 56 : index
    %23 = vector.load %arg11[%c0_33, %c56] : memref<208x72xf32, #tpu.memory_space<vmem>>, vector<208x8xf32>
    tpu.vector_store %arg11[%c0_33, %c56], %22 {strides = array<i32>} : memref<208x72xf32, #tpu.memory_space<vmem>>, vector<208x8xf32>,
    %c0_34 = arith.constant 0 : index
    %c0_35 = arith.constant 0 : index
    %c42 = arith.constant 42 : index
    %c0_36 = arith.constant 0 : index
    %24 = vector.load %arg2[%c0_34, %c0_35, %c42, %c0_36] : memref<1x1x256x8xf32, #tpu.memory_space<vmem>>, vector<1x1x208x8xf32>
    %25 = vector.shape_cast %24 : vector<1x1x208x8xf32> to vector<208x8xf32>
    %c0_37 = arith.constant 0 : index
    %c64 = arith.constant 64 : index
    %26 = vector.load %arg11[%c0_37, %c64] : memref<208x72xf32, #tpu.memory_space<vmem>>, vector<208x8xf32>
    tpu.vector_store %arg11[%c0_37, %c64], %25 {strides = array<i32>} : memref<208x72xf32, #tpu.memory_space<vmem>>, vector<208x8xf32>,
    %c0_38 = arith.constant 0 : index
    %c0_39 = arith.constant 0 : index
    %27 = vector.load %arg11[%c0_38, %c0_39] : memref<208x72xf32, #tpu.memory_space<vmem>>, vector<208x72xf32>
    %28 = arith.truncf %27 : vector<208x72xf32> to vector<208x72xbf16>
    %c0_40 = arith.constant 0 : index
    %c0_41 = arith.constant 0 : index
    %29 = vector.load %arg4[%c0_40, %c0_41] : memref<72x8xbf16, #tpu.memory_space<vmem>>, vector<72x8xbf16>
    %cst = arith.constant dense<0.000000e+00> : vector<208x8xf32>
    %30 = tpu.matmul %28, %29, %cst {dimension_numbers = #tpu.dot_dimension_numbers<[1], [0], [0], [1], [0, 0, 1, 1], [], []>} : vector<208x72xbf16>, vector<72x8xbf16>, vector<208x8xf32> -> vector<208x8xf32>
    %c0_42 = arith.constant 0 : index
    %c0_43 = arith.constant 0 : index
    %31 = vector.load %arg5[%c0_42, %c0_43] : memref<1x8xf32, #tpu.memory_space<vmem>>, vector<1x8xf32>
    %32 = vector.broadcast %31 : vector<1x8xf32> to vector<208x8xf32>
    %33 = arith.mulf %30, %32 : vector<208x8xf32>
    %c0_44 = arith.constant 0 : index
    %c0_45 = arith.constant 0 : index
    %34 = vector.load %arg6[%c0_44, %c0_45] : memref<1x8xf32, #tpu.memory_space<vmem>>, vector<1x8xf32>
    %35 = vector.broadcast %34 : vector<1x8xf32> to vector<208x8xf32>
    %36 = arith.addf %33, %35 : vector<208x8xf32>
    %cst_46 = arith.constant 0.000000e+00 : f32
    %37 = vector.broadcast %cst_46 : f32 to vector<208x8xf32>
    %38 = arith.maximumf %36, %37 : vector<208x8xf32>
    %c0_47 = arith.constant 0 : index
    %c0_48 = arith.constant 0 : index
    %c0_49 = arith.constant 0 : index
    %39 = vector.load %arg3[%c0_47, %c0_48, %c0_49] : memref<1x208x1xf32, #tpu.memory_space<vmem>>, vector<1x208x1xf32>
    %40 = vector.shape_cast %39 : vector<1x208x1xf32> to vector<208x1xf32>
    %41 = vector.broadcast %40 : vector<208x1xf32> to vector<208x8xf32>
    %42 = arith.mulf %38, %41 : vector<208x8xf32>
    %c0_50 = arith.constant 0 : index
    %c0_51 = arith.constant 0 : index
    %43 = vector.load %arg12[%c0_50, %c0_51] : memref<208x8xf32, #tpu.memory_space<vmem>>, vector<208x8xf32>
    tpu.vector_store %arg12[%c0_50, %c0_51], %42 {strides = array<i32>} : memref<208x8xf32, #tpu.memory_space<vmem>>, vector<208x8xf32>,
    %c0_52 = arith.constant 0 : index
    %c0_53 = arith.constant 0 : index
    %44 = vector.load %arg12[%c0_52, %c0_53] : memref<208x8xf32, #tpu.memory_space<vmem>>, vector<160x8xf32>
    %c0_54 = arith.constant 0 : index
    %c0_55 = arith.constant 0 : index
    %45 = vector.load %arg13[%c0_54, %c0_55] : memref<160x72xf32, #tpu.memory_space<vmem>>, vector<160x8xf32>
    tpu.vector_store %arg13[%c0_54, %c0_55], %44 {strides = array<i32>} : memref<160x72xf32, #tpu.memory_space<vmem>>, vector<160x8xf32>,
    %c1_56 = arith.constant 1 : index
    %c0_57 = arith.constant 0 : index
    %46 = vector.load %arg12[%c1_56, %c0_57] : memref<208x8xf32, #tpu.memory_space<vmem>>, vector<160x8xf32>
    %c0_58 = arith.constant 0 : index
    %c8_59 = arith.constant 8 : index
    %47 = vector.load %arg13[%c0_58, %c8_59] : memref<160x72xf32, #tpu.memory_space<vmem>>, vector<160x8xf32>
    tpu.vector_store %arg13[%c0_58, %c8_59], %46 {strides = array<i32>} : memref<160x72xf32, #tpu.memory_space<vmem>>, vector<160x8xf32>,
    %c2_60 = arith.constant 2 : index
    %c0_61 = arith.constant 0 : index
    %48 = vector.load %arg12[%c2_60, %c0_61] : memref<208x8xf32, #tpu.memory_space<vmem>>, vector<160x8xf32>
    %c0_62 = arith.constant 0 : index
    %c16_63 = arith.constant 16 : index
    %49 = vector.load %arg13[%c0_62, %c16_63] : memref<160x72xf32, #tpu.memory_space<vmem>>, vector<160x8xf32>
    tpu.vector_store %arg13[%c0_62, %c16_63], %48 {strides = array<i32>} : memref<160x72xf32, #tpu.memory_space<vmem>>, vector<160x8xf32>,
    %c20_64 = arith.constant 20 : index
    %c0_65 = arith.constant 0 : index
    %50 = vector.load %arg12[%c20_64, %c0_65] : memref<208x8xf32, #tpu.memory_space<vmem>>, vector<160x8xf32>
    %c0_66 = arith.constant 0 : index
    %c24_67 = arith.constant 24 : index
    %51 = vector.load %arg13[%c0_66, %c24_67] : memref<160x72xf32, #tpu.memory_space<vmem>>, vector<160x8xf32>
    tpu.vector_store %arg13[%c0_66, %c24_67], %50 {strides = array<i32>} : memref<160x72xf32, #tpu.memory_space<vmem>>, vector<160x8xf32>,
    %c21_68 = arith.constant 21 : index
    %c0_69 = arith.constant 0 : index
    %52 = vector.load %arg12[%c21_68, %c0_69] : memref<208x8xf32, #tpu.memory_space<vmem>>, vector<160x8xf32>
    %c0_70 = arith.constant 0 : index
    %c32_71 = arith.constant 32 : index
    %53 = vector.load %arg13[%c0_70, %c32_71] : memref<160x72xf32, #tpu.memory_space<vmem>>, vector<160x8xf32>
    tpu.vector_store %arg13[%c0_70, %c32_71], %52 {strides = array<i32>} : memref<160x72xf32, #tpu.memory_space<vmem>>, vector<160x8xf32>,
    %c22_72 = arith.constant 22 : index
    %c0_73 = arith.constant 0 : index
    %54 = vector.load %arg12[%c22_72, %c0_73] : memref<208x8xf32, #tpu.memory_space<vmem>>, vector<160x8xf32>
    %c0_74 = arith.constant 0 : index
    %c40_75 = arith.constant 40 : index
    %55 = vector.load %arg13[%c0_74, %c40_75] : memref<160x72xf32, #tpu.memory_space<vmem>>, vector<160x8xf32>
    tpu.vector_store %arg13[%c0_74, %c40_75], %54 {strides = array<i32>} : memref<160x72xf32, #tpu.memory_space<vmem>>, vector<160x8xf32>,
    %c40_76 = arith.constant 40 : index
    %c0_77 = arith.constant 0 : index
    %56 = vector.load %arg12[%c40_76, %c0_77] : memref<208x8xf32, #tpu.memory_space<vmem>>, vector<160x8xf32>
    %c0_78 = arith.constant 0 : index
    %c48_79 = arith.constant 48 : index
    %57 = vector.load %arg13[%c0_78, %c48_79] : memref<160x72xf32, #tpu.memory_space<vmem>>, vector<160x8xf32>
    tpu.vector_store %arg13[%c0_78, %c48_79], %56 {strides = array<i32>} : memref<160x72xf32, #tpu.memory_space<vmem>>, vector<160x8xf32>,
    %c41_80 = arith.constant 41 : index
    %c0_81 = arith.constant 0 : index
    %58 = vector.load %arg12[%c41_80, %c0_81] : memref<208x8xf32, #tpu.memory_space<vmem>>, vector<160x8xf32>
    %c0_82 = arith.constant 0 : index
    %c56_83 = arith.constant 56 : index
    %59 = vector.load %arg13[%c0_82, %c56_83] : memref<160x72xf32, #tpu.memory_space<vmem>>, vector<160x8xf32>
    tpu.vector_store %arg13[%c0_82, %c56_83], %58 {strides = array<i32>} : memref<160x72xf32, #tpu.memory_space<vmem>>, vector<160x8xf32>,
    %c42_84 = arith.constant 42 : index
    %c0_85 = arith.constant 0 : index
    %60 = vector.load %arg12[%c42_84, %c0_85] : memref<208x8xf32, #tpu.memory_space<vmem>>, vector<160x8xf32>
    %c0_86 = arith.constant 0 : index
    %c64_87 = arith.constant 64 : index
    %61 = vector.load %arg13[%c0_86, %c64_87] : memref<160x72xf32, #tpu.memory_space<vmem>>, vector<160x8xf32>
    tpu.vector_store %arg13[%c0_86, %c64_87], %60 {strides = array<i32>} : memref<160x72xf32, #tpu.memory_space<vmem>>, vector<160x8xf32>,
    %c0_88 = arith.constant 0 : index
    %c0_89 = arith.constant 0 : index
    %62 = vector.load %arg13[%c0_88, %c0_89] : memref<160x72xf32, #tpu.memory_space<vmem>>, vector<160x72xf32>
    %63 = arith.truncf %62 : vector<160x72xf32> to vector<160x72xbf16>
    %c0_90 = arith.constant 0 : index
    %c0_91 = arith.constant 0 : index
    %64 = vector.load %arg7[%c0_90, %c0_91] : memref<72x128xbf16, #tpu.memory_space<vmem>>, vector<72x128xbf16>
    %cst_92 = arith.constant dense<0.000000e+00> : vector<160x128xf32>
    %65 = tpu.matmul %63, %64, %cst_92 {dimension_numbers = #tpu.dot_dimension_numbers<[1], [0], [0], [1], [0, 0, 1, 1], [], []>} : vector<160x72xbf16>, vector<72x128xbf16>, vector<160x128xf32> -> vector<160x128xf32>
    %c0_93 = arith.constant 0 : index
    %c0_94 = arith.constant 0 : index
    %66 = vector.load %arg8[%c0_93, %c0_94] : memref<1x128xf32, #tpu.memory_space<vmem>>, vector<1x128xf32>
    %67 = vector.broadcast %66 : vector<1x128xf32> to vector<160x128xf32>
    %68 = arith.mulf %65, %67 : vector<160x128xf32>
    %c0_95 = arith.constant 0 : index
    %c0_96 = arith.constant 0 : index
    %69 = vector.load %arg9[%c0_95, %c0_96] : memref<1x128xf32, #tpu.memory_space<vmem>>, vector<1x128xf32>
    %70 = vector.broadcast %69 : vector<1x128xf32> to vector<160x128xf32>
    %71 = arith.addf %68, %70 : vector<160x128xf32>
    %cst_97 = arith.constant 0.000000e+00 : f32
    %72 = vector.broadcast %cst_97 : f32 to vector<160x128xf32>
    %73 = arith.maximumf %71, %72 : vector<160x128xf32>
    %c0_98 = arith.constant 0 : index
    %c0_99 = arith.constant 0 : index
    %c0_100 = arith.constant 0 : index
    %c0_101 = arith.constant 0 : index
    %74 = vector.load %arg10[%c0_98, %c0_99, %c0_100, %c0_101] : memref<1x1x160x128xf32, #tpu.memory_space<vmem>>, vector<1x1x160x128xf32>
    %75 = vector.shape_cast %74 : vector<1x1x160x128xf32> to vector<160x128xf32>
    %76 = vector.shape_cast %73 : vector<160x128xf32> to vector<1x1x160x128xf32>
    tpu.vector_store %arg10[%c0_98, %c0_99, %c0_100, %c0_101], %76 {strides = array<i32>} : memref<1x1x160x128xf32, #tpu.memory_space<vmem>>, vector<1x1x160x128xf32>,
    return
  }
  func.func @transform_0(%arg0: i32, %arg1: i32) -> (i32, i32, i32, i32) {
    %c0_i32 = arith.constant 0 : i32
    %c0_i32_0 = arith.constant 0 : i32
    %c0_i32_1 = arith.constant 0 : i32
    return %arg0, %arg1, %c0_i32, %c0_i32_0 : i32, i32, i32, i32
  }
  func.func @transform_1(%arg0: i32, %arg1: i32) -> (i32, i32, i32) {
    %c0_i32 = arith.constant 0 : i32
    %c0_i32_0 = arith.constant 0 : i32
    %c0_i32_1 = arith.constant 0 : i32
    return %arg1, %c0_i32, %c0_i32_0 : i32, i32, i32
  }
  func.func @transform_2(%arg0: i32, %arg1: i32) -> (i32, i32) {
    %c0_i32 = arith.constant 0 : i32
    %c0_i32_0 = arith.constant 0 : i32
    %c0_i32_1 = arith.constant 0 : i32
    return %c0_i32, %c0_i32_0 : i32, i32
  }
  func.func @transform_3(%arg0: i32, %arg1: i32) -> (i32, i32) {
    %c0_i32 = arith.constant 0 : i32
    %c0_i32_0 = arith.constant 0 : i32
    %c0_i32_1 = arith.constant 0 : i32
    return %c0_i32, %c0_i32_0 : i32, i32
  }
  func.func @transform_4(%arg0: i32, %arg1: i32) -> (i32, i32) {
    %c0_i32 = arith.constant 0 : i32
    %c0_i32_0 = arith.constant 0 : i32
    %c0_i32_1 = arith.constant 0 : i32
    return %c0_i32, %c0_i32_0 : i32, i32
  }
  func.func @transform_5(%arg0: i32, %arg1: i32) -> (i32, i32) {
    %c0_i32 = arith.constant 0 : i32
    %c0_i32_0 = arith.constant 0 : i32
    %c0_i32_1 = arith.constant 0 : i32
    return %c0_i32, %c0_i32_0 : i32, i32
  }
  func.func @transform_6(%arg0: i32, %arg1: i32) -> (i32, i32) {
    %c0_i32 = arith.constant 0 : i32
    %c0_i32_0 = arith.constant 0 : i32
    %c0_i32_1 = arith.constant 0 : i32
    return %c0_i32, %c0_i32_0 : i32, i32
  }
  func.func @transform_7(%arg0: i32, %arg1: i32) -> (i32, i32) {
    %c0_i32 = arith.constant 0 : i32
    %c0_i32_0 = arith.constant 0 : i32
    %c0_i32_1 = arith.constant 0 : i32
    return %c0_i32, %c0_i32_0 : i32, i32
  }
  func.func @transform_8(%arg0: i32, %arg1: i32) -> (i32, i32, i32, i32) {
    %c0_i32 = arith.constant 0 : i32
    %c0_i32_0 = arith.constant 0 : i32
    %c0_i32_1 = arith.constant 0 : i32
    return %arg0, %arg1, %c0_i32, %c0_i32_0 : i32, i32, i32, i32
  }
}

</mosaic_0001>

<llo_original>
// kernel: up_modified_forward.1
$region0: #{up_modified_forward.1}
  #allocation0 [shape = 'u32[]', space=smem, size = 0x4, offset = 0x4, fixed_abs, tag = 'smem constant byte address 0x4 - core index']
  #allocation1 [shape = 'u32[144,128]{1,0:T(1,128)}', space=vmem, size = 0x12000, scoped, tag = 'internal scratch']
  #allocation2 [shape = 'f32[208,72]{1,0:T(8,128)}', space=vmem, size = 0x1a000, scoped, tag = 'scratch operand']
  #allocation3 [shape = 'f32[208,8]{1,0:T(8,128)}', space=vmem, size = 0x1a000, scoped, tag = 'scratch operand']
  #allocation4 [shape = 'f32[160,72]{1,0:T(8,128)}', space=vmem, size = 0x14000, scoped, tag = 'scratch operand']
  %s0 = inlined_call_operand.vmem [shape: f32[2,2,256,8], index: 0, kind: input, shape index: {}]
  %s1 = inlined_call_operand.vmem [shape: f32[2,208,1], index: 1, kind: input, shape index: {}]
  %s2 = inlined_call_operand.vmem [shape: bf16[72,8], index: 2, kind: input, shape index: {}]
  %s3 = inlined_call_operand.vmem [shape: f32[1,8], index: 3, kind: input, shape index: {}]
  %s4 = inlined_call_operand.vmem [shape: f32[1,8], index: 4, kind: input, shape index: {}]
  %s5 = inlined_call_operand.vmem [shape: bf16[72,128], index: 5, kind: input, shape index: {}]
  %s6 = inlined_call_operand.vmem [shape: f32[1,128], index: 6, kind: input, shape index: {}]
  %s7 = inlined_call_operand.vmem [shape: f32[1,128], index: 7, kind: input, shape index: {}]
  %s8 = inlined_call_operand.vmem [shape: f32[2,2,160,128], index: 8, kind: output, shape index: {}]
  %s9 = sld [smem:[#allocation0]]
  $region65: #{up_modified_forward.1} parent=0
    _
  %s11 = ssub.s32 1, %s9
  %s12 = scalar_select 0, %s11, %s9
  loop: start=0, step=1, limit=6
  $region2: #{up_modified_forward.1} parent=0 // loop_pre_header
    _
  $region3: #{up_modified_forward.1} parent=0 // loop_header
    %s14 = sphi 0, %s18
    %p15 = scmp.ge.s32.totalorder %s14, 6
    %s21 = sphi 0, %s33
    %s22 = sphi 0, %s29
    %s23 = sphi 0, %s21
    %s24 = sphi 0, %s22
    %s25 = sphi 0, %s23
    %s26 = sphi 0, %s24
    %s38 = sphi 0, %s40
    %s41 = sphi 0, %s38
    %s42 = sphi 0, %s41
    %s58 = sphi 0, %s42
    %s64 = sphi 0, %s66
    %s67 = sphi 0, %s64
    %s68 = sphi 0, %s67
    %s84 = sphi 0, %s68
    %s88 = sphi 0, %s88
    %s90 = sphi 0, %s88
    %s91 = sphi 0, %s90
    %s105 = sphi 0, %s91
    %s109 = sphi 0, %s109
    %s111 = sphi 0, %s109
    %s112 = sphi 0, %s111
    %s126 = sphi 0, %s112
    %s130 = sphi 0, %s130
    %s132 = sphi 0, %s130
    %s133 = sphi 0, %s132
    %s147 = sphi 0, %s133
    %s151 = sphi 0, %s151
    %s153 = sphi 0, %s151
    %s154 = sphi 0, %s153
    %s168 = sphi 0, %s154
    %s172 = sphi 0, %s172
    %s174 = sphi 0, %s172
    %s175 = sphi 0, %s174
    %s189 = sphi 0, %s175
    %s193 = sphi 0, %s193
    %s195 = sphi 0, %s193
    %s196 = sphi 0, %s195
    %s210 = sphi 0, %s196
    %s218 = sphi 0, %s220
    %s221 = sphi 0, %s218
    %s222 = sphi 0, %s221
    %s238 = sphi 0, %s222
  $region4: #{up_modified_forward.1} parent=0 // loop_header_branch
    %17 = sbr.rel (%p15) target = $region8
  $region5: #{up_modified_forward.1} parent=0 // loop_body
    %s19 = ssub.s32 %s14, 1
    %s20 = ssub.s32 %s14, 2
    %s27 = sadd.s32 1, %s22
    %p28 = scmp.ge.s32.totalorder %s27, 2
    %s29 = scalar_select %p28, 0, %s27
    %s30 = sadd.s32 1, %s21
    %s31 = scalar_select %p28, %s30, %s21
    %p32 = scmp.ge.s32.totalorder %s31, 2
    %s33 = scalar_select %p32, 0, %s31
    %s34 = ssub.s32 %s21, %s33
    %s35 = ssub.s32 %s22, %s29
    %s36 = sor.u32 %s34, %s35
    %p37 = scmp.eq.s32.totalorder %s36, 0
    %s39 = sadd.s32 %s38, 1
    %s40 = scalar_select %p37, %s38, %s39
    %p43 = pneg %p37
    %p44 = scmp.eq.s32.totalorder %s14, 3
    %p45 = por %p43, %p44
    %p46 = scmp.ne.s32.totalorder %s38, %s41
    %p47 = scmp.eq.s32.totalorder %s14, 0
    %p48 = por %p46, %p47
    %p49 = scmp.ne.s32.totalorder %s38, %s41
    %p50 = scmp.eq.s32.totalorder %s19, 3
    %p51 = por %p49, %p50
    %p52 = scmp.ne.s32.totalorder %s41, %s42
    %p53 = scmp.eq.s32.totalorder %s19, 0
    %p54 = por %p52, %p53
    %p55 = scmp.ne.s32.totalorder %s41, %s42
    %p56 = scmp.eq.s32.totalorder %s20, 3
    %p57 = por %p55, %p56
    %p59 = scmp.ne.s32.totalorder %s42, %s58
    %p60 = scmp.eq.s32.totalorder %s20, 0
    %p61 = por %p59, %p60
    %s62 = ssub.s32 %s22, %s29
    %p63 = scmp.eq.s32.totalorder %s62, 0
    %s65 = sadd.s32 %s64, 1
    %s66 = scalar_select %p63, %s64, %s65
    %p69 = pneg %p63
    %p70 = scmp.eq.s32.totalorder %s14, 3
    %p71 = por %p69, %p70
    %p72 = scmp.ne.s32.totalorder %s64, %s67
    %p73 = scmp.eq.s32.totalorder %s14, 0
    %p74 = por %p72, %p73
    %p75 = scmp.ne.s32.totalorder %s64, %s67
    %p76 = scmp.eq.s32.totalorder %s19, 3
    %p77 = por %p75, %p76
    %p78 = scmp.ne.s32.totalorder %s67, %s68
    %p79 = scmp.eq.s32.totalorder %s19, 0
    %p80 = por %p78, %p79
    %p81 = scmp.ne.s32.totalorder %s67, %s68
    %p82 = scmp.eq.s32.totalorder %s20, 3
    %p83 = por %p81, %p82
    %p85 = scmp.ne.s32.totalorder %s68, %s84
    %p86 = scmp.eq.s32.totalorder %s20, 0
    %p87 = por %p85, %p86
    %s89 = sadd.s32 %s88, 1
    %p92 = scmp.eq.s32.totalorder %s14, 3
    %p93 = scmp.ne.s32.totalorder %s88, %s90
    %p94 = scmp.eq.s32.totalorder %s14, 0
    %p95 = por %p93, %p94
    %p96 = scmp.ne.s32.totalorder %s88, %s90
    %p97 = scmp.eq.s32.totalorder %s19, 3
    %p98 = por %p96, %p97
    %p99 = scmp.ne.s32.totalorder %s90, %s91
    %p100 = scmp.eq.s32.totalorder %s19, 0
    %p101 = por %p99, %p100
    %p102 = scmp.ne.s32.totalorder %s90, %s91
    %p103 = scmp.eq.s32.totalorder %s20, 3
    %p104 = por %p102, %p103
    %p106 = scmp.ne.s32.totalorder %s91, %s105
    %p107 = scmp.eq.s32.totalorder %s20, 0
    %p108 = por %p106, %p107
    %s110 = sadd.s32 %s109, 1
    %p113 = scmp.eq.s32.totalorder %s14, 3
    %p114 = scmp.ne.s32.totalorder %s109, %s111
    %p115 = scmp.eq.s32.totalorder %s14, 0
    %p116 = por %p114, %p115
    %p117 = scmp.ne.s32.totalorder %s109, %s111
    %p118 = scmp.eq.s32.totalorder %s19, 3
    %p119 = por %p117, %p118
    %p120 = scmp.ne.s32.totalorder %s111, %s112
    %p121 = scmp.eq.s32.totalorder %s19, 0
    %p122 = por %p120, %p121
    %p123 = scmp.ne.s32.totalorder %s111, %s112
    %p124 = scmp.eq.s32.totalorder %s20, 3
    %p125 = por %p123, %p124
    %p127 = scmp.ne.s32.totalorder %s112, %s126
    %p128 = scmp.eq.s32.totalorder %s20, 0
    %p129 = por %p127, %p128
    %s131 = sadd.s32 %s130, 1
    %p134 = scmp.eq.s32.totalorder %s14, 3
    %p135 = scmp.ne.s32.totalorder %s130, %s132
    %p136 = scmp.eq.s32.totalorder %s14, 0
    %p137 = por %p135, %p136
    %p138 = scmp.ne.s32.totalorder %s130, %s132
    %p139 = scmp.eq.s32.totalorder %s19, 3
    %p140 = por %p138, %p139
    %p141 = scmp.ne.s32.totalorder %s132, %s133
    %p142 = scmp.eq.s32.totalorder %s19, 0
    %p143 = por %p141, %p142
    %p144 = scmp.ne.s32.totalorder %s132, %s133
    %p145 = scmp.eq.s32.totalorder %s20, 3
    %p146 = por %p144, %p145
    %p148 = scmp.ne.s32.totalorder %s133, %s147
    %p149 = scmp.eq.s32.totalorder %s20, 0
    %p150 = por %p148, %p149
    %s152 = sadd.s32 %s151, 1
    %p155 = scmp.eq.s32.totalorder %s14, 3
    %p156 = scmp.ne.s32.totalorder %s151, %s153
    %p157 = scmp.eq.s32.totalorder %s14, 0
    %p158 = por %p156, %p157
    %p159 = scmp.ne.s32.totalorder %s151, %s153
    %p160 = scmp.eq.s32.totalorder %s19, 3
    %p161 = por %p159, %p160
    %p162 = scmp.ne.s32.totalorder %s153, %s154
    %p163 = scmp.eq.s32.totalorder %s19, 0
    %p164 = por %p162, %p163
    %p165 = scmp.ne.s32.totalorder %s153, %s154
    %p166 = scmp.eq.s32.totalorder %s20, 3
    %p167 = por %p165, %p166
    %p169 = scmp.ne.s32.totalorder %s154, %s168
    %p170 = scmp.eq.s32.totalorder %s20, 0
    %p171 = por %p169, %p170
    %s173 = sadd.s32 %s172, 1
    %p176 = scmp.eq.s32.totalorder %s14, 3
    %p177 = scmp.ne.s32.totalorder %s172, %s174
    %p178 = scmp.eq.s32.totalorder %s14, 0
    %p179 = por %p177, %p178
    %p180 = scmp.ne.s32.totalorder %s172, %s174
    %p181 = scmp.eq.s32.totalorder %s19, 3
    %p182 = por %p180, %p181
    %p183 = scmp.ne.s32.totalorder %s174, %s175
    %p184 = scmp.eq.s32.totalorder %s19, 0
    %p185 = por %p183, %p184
    %p186 = scmp.ne.s32.totalorder %s174, %s175
    %p187 = scmp.eq.s32.totalorder %s20, 3
    %p188 = por %p186, %p187
    %p190 = scmp.ne.s32.totalorder %s175, %s189
    %p191 = scmp.eq.s32.totalorder %s20, 0
    %p192 = por %p190, %p191
    %s194 = sadd.s32 %s193, 1
    %p197 = scmp.eq.s32.totalorder %s14, 3
    %p198 = scmp.ne.s32.totalorder %s193, %s195
    %p199 = scmp.eq.s32.totalorder %s14, 0
    %p200 = por %p198, %p199
    %p201 = scmp.ne.s32.totalorder %s193, %s195
    %p202 = scmp.eq.s32.totalorder %s19, 3
    %p203 = por %p201, %p202
    %p204 = scmp.ne.s32.totalorder %s195, %s196
    %p205 = scmp.eq.s32.totalorder %s19, 0
    %p206 = por %p204, %p205
    %p207 = scmp.ne.s32.totalorder %s195, %s196
    %p208 = scmp.eq.s32.totalorder %s20, 3
    %p209 = por %p207, %p208
    %p211 = scmp.ne.s32.totalorder %s196, %s210
    %p212 = scmp.eq.s32.totalorder %s20, 0
    %p213 = por %p211, %p212
    %s214 = ssub.s32 %s21, %s33
    %s215 = ssub.s32 %s22, %s29
    %s216 = sor.u32 %s214, %s215
    %p217 = scmp.eq.s32.totalorder %s216, 0
    %s219 = sadd.s32 %s218, 1
    %s220 = scalar_select %p217, %s218, %s219
    %p223 = pneg %p217
    %p224 = scmp.eq.s32.totalorder %s14, 3
    %p225 = por %p223, %p224
    %p226 = scmp.ne.s32.totalorder %s218, %s221
    %p227 = scmp.eq.s32.totalorder %s14, 0
    %p228 = por %p226, %p227
    %p229 = scmp.ne.s32.totalorder %s218, %s221
    %p230 = scmp.eq.s32.totalorder %s19, 3
    %p231 = por %p229, %p230
    %p232 = scmp.ne.s32.totalorder %s221, %s222
    %p233 = scmp.eq.s32.totalorder %s19, 0
    %p234 = por %p232, %p233
    %p235 = scmp.ne.s32.totalorder %s221, %s222
    %p236 = scmp.eq.s32.totalorder %s20, 3
    %p237 = por %p235, %p236
    %p239 = scmp.ne.s32.totalorder %s222, %s238
    %p240 = scmp.eq.s32.totalorder %s20, 0
    %p241 = por %p239, %p240
    %p242 = scmp.le.s32.totalorder 1, %s14
    %p243 = scmp.lt.s32.totalorder %s14, 5
    %p244 = pnand %p242, %p243
    %p245 = pneg %p244
    // Predicated region
    $region9: #{up_modified_forward.1} parent=5 // pred_check
      _
    $region10: #{up_modified_forward.1} parent=5 // pred_check_branch
      %247 = sbr.rel (%p244) target = $region12
    $region11: #{up_modified_forward.1} parent=5 // pred_region
      %s248 = ssub.s32 %s14, 1
      // Predicated region
      $region13: #{up_modified_forward.1} parent=11 // pred_check
        %p249 = pneg %p101
      $region14: #{up_modified_forward.1} parent=11 // pred_check_branch
        %251 = sbr.rel (%p249) target = $region16
      $region15: #{up_modified_forward.1} parent=11 // pred_region
        _
      $region16: #{up_modified_forward.1} parent=11 // pred_fallthru
        _
      // Predicated region
      $region17: #{up_modified_forward.1} parent=11 // pred_check
        %p252 = pneg %p122
      $region18: #{up_modified_forward.1} parent=11 // pred_check_branch
        %254 = sbr.rel (%p252) target = $region20
      $region19: #{up_modified_forward.1} parent=11 // pred_region
        _
      $region20: #{up_modified_forward.1} parent=11 // pred_fallthru
        _
      // Predicated region
      $region21: #{up_modified_forward.1} parent=11 // pred_check
        %p255 = pneg %p143
      $region22: #{up_modified_forward.1} parent=11 // pred_check_branch
        %257 = sbr.rel (%p255) target = $region24
      $region23: #{up_modified_forward.1} parent=11 // pred_region
        _
      $region24: #{up_modified_forward.1} parent=11 // pred_fallthru
        _
      // Predicated region
      $region25: #{up_modified_forward.1} parent=11 // pred_check
        %p258 = pneg %p164
      $region26: #{up_modified_forward.1} parent=11 // pred_check_branch
        %260 = sbr.rel (%p258) target = $region28
      $region27: #{up_modified_forward.1} parent=11 // pred_region
        _
      $region28: #{up_modified_forward.1} parent=11 // pred_fallthru
        _
      // Predicated region
      $region29: #{up_modified_forward.1} parent=11 // pred_check
        %p261 = pneg %p185
      $region30: #{up_modified_forward.1} parent=11 // pred_check_branch
        %263 = sbr.rel (%p261) target = $region32
      $region31: #{up_modified_forward.1} parent=11 // pred_region
        _
      $region32: #{up_modified_forward.1} parent=11 // pred_fallthru
        _
      // Predicated region
      $region33: #{up_modified_forward.1} parent=11 // pred_check
        %p264 = pneg %p206
      $region34: #{up_modified_forward.1} parent=11 // pred_check_branch
        %266 = sbr.rel (%p264) target = $region36
      $region35: #{up_modified_forward.1} parent=11 // pred_region
        _
      $region36: #{up_modified_forward.1} parent=11 // pred_fallthru
        _
    $region12: #{up_modified_forward.1} parent=5 // pred_fallthru
      _
    %p267 = scmp.lt.s32.totalorder %s14, 4
    // Predicated region
    $region37: #{up_modified_forward.1} parent=5 // pred_check
      %p268 = pneg %p267
    $region38: #{up_modified_forward.1} parent=5 // pred_check_branch
      %270 = sbr.rel (%p268) target = $region40
    $region39: #{up_modified_forward.1} parent=5 // pred_region
      // Predicated region
      $region41: #{up_modified_forward.1} parent=39 // pred_check
        %p271 = pneg %p48
      $region42: #{up_modified_forward.1} parent=39 // pred_check_branch
        %273 = sbr.rel (%p271) target = $region44
      $region43: #{up_modified_forward.1} parent=39 // pred_region
        %p274 = scmp.lt.s32.totalorder %s21, 1
        %s275 = scalar_select %p274, %s21, 1
        %p276 = scmp.lt.s32.totalorder %s22, 1
        %s277 = scalar_select %p276, %s22, 1
        %s278 = smul.addr %s277, 32
        %s279 = smul.addr %s275, 64
        %s280 = sadd.s32 %s278, %s279
        %s281 = smul.addr %s280, 8
        %s282 = scalar_lea.vmem %s0, %s281
      $region44: #{up_modified_forward.1} parent=39 // pred_fallthru
        _
      // Predicated region
      $region45: #{up_modified_forward.1} parent=39 // pred_check
        %p283 = pneg %p74
      $region46: #{up_modified_forward.1} parent=39 // pred_check_branch
        %285 = sbr.rel (%p283) target = $region48
      $region47: #{up_modified_forward.1} parent=39 // pred_region
        %p286 = scmp.lt.s32.totalorder %s22, 1
        %s287 = scalar_select %p286, %s22, 1
        %s288 = smul.addr %s287, 26
        %s289 = smul.addr %s288, 8
        %s290 = scalar_lea.vmem %s1, %s289
      $region48: #{up_modified_forward.1} parent=39 // pred_fallthru
        _
    $region40: #{up_modified_forward.1} parent=5 // pred_fallthru
      _
    %p291 = scmp.le.s32.totalorder 1, %s14
    %p292 = scmp.lt.s32.totalorder %s14, 5
    %p293 = pnand %p291, %p292
    %p294 = pneg %p293
    // Predicated region
    $region49: #{up_modified_forward.1} parent=5 // pred_check
      _
    $region50: #{up_modified_forward.1} parent=5 // pred_check_branch
      %296 = sbr.rel (%p293) target = $region52
    $region51: #{up_modified_forward.1} parent=5 // pred_region
      %s297 = ssub.s32 %s14, 1
      %p298 = scmp.lt.s32.totalorder %s23, 1
      %s299 = scalar_select %p298, %s23, 1
      %p300 = scmp.lt.s32.totalorder %s24, 1
      %s301 = scalar_select %p300, %s24, 1
      %s302 = smul.addr %s301, 32
      %s303 = smul.addr %s299, 64
      %s304 = sadd.s32 %s302, %s303
      %s305 = smul.addr %s304, 8
      %s306 = scalar_lea.vmem %s0, %s305
      %p307 = pneg %p54
      %p308 = pneg %p51
      %p309 = scmp.lt.s32.totalorder %s24, 1
      %s310 = scalar_select %p309, %s24, 1
      %s311 = smul.addr %s310, 26
      %s312 = smul.addr %s311, 8
      %s313 = scalar_lea.vmem %s1, %s312
      %p314 = pneg %p80
      %p315 = pneg %p77
      %p316 = pneg %p101
      %p317 = pneg %p98
      %p318 = pneg %p122
      %p319 = pneg %p119
      %p320 = pneg %p143
      %p321 = pneg %p140
      %p322 = pneg %p164
      %p323 = pneg %p161
      %p324 = pneg %p185
      %p325 = pneg %p182
      %p326 = pneg %p206
      %p327 = pneg %p203
      %p328 = pneg %p234
      %p329 = pneg %p231
      %p330 = scmp.lt.s32.totalorder %s23, 1
      %s331 = scalar_select %p330, %s23, 1
      %p332 = scmp.lt.s32.totalorder %s24, 1
      %s333 = scalar_select %p332, %s24, 1
      %s334 = smul.addr %s333, 20
      %s335 = smul.addr %s331, 40
      %s336 = sadd.s32 %s334, %s335
      %s337 = smul.addr %s336, 8
      %s338 = scalar_lea.vmem %s8, %s337
      %p339 = scmp.lt.s32.totalorder %s23, 1
      %s340 = scalar_select %p339, %s23, 1
      %p341 = scmp.lt.s32.totalorder %s24, 1
      %s342 = scalar_select %p341, %s24, 1
      %s343 = smul.addr %s342, 32
      %s344 = smul.addr %s340, 64
      %s345 = sadd.s32 %s343, %s344
      %s346 = smul.addr %s345, 8
      %s347 = scalar_lea.vmem %s0, %s346
      %p348 = scmp.lt.s32.totalorder %s24, 1
      %s349 = scalar_select %p348, %s24, 1
      %s350 = smul.addr %s349, 26
      %s351 = smul.addr %s350, 8
      %s352 = scalar_lea.vmem %s1, %s351
      %p353 = scmp.lt.s32.totalorder %s23, 1
      %s354 = scalar_select %p353, %s23, 1
      %p355 = scmp.lt.s32.totalorder %s24, 1
      %s356 = scalar_select %p355, %s24, 1
      %s357 = smul.addr %s356, 20
      %s358 = smul.addr %s354, 40
      %s359 = sadd.s32 %s357, %s358
      %s360 = smul.addr %s359, 8
      %s361 = scalar_lea.vmem %s8, %s360
      %v363 = vld [vmem:[%s347] sm:$0xff]
      %v364 = vld [vmem:[%s347 + $0x8] sm:$0xff]
      %v365 = vld [vmem:[%s347 + $0x10] sm:$0xff]
      %v366 = vld [vmem:[%s347 + $0x18] sm:$0xff]
      %v367 = vld [vmem:[%s347 + $0x20] sm:$0xff]
      %v368 = vld [vmem:[%s347 + $0x28] sm:$0xff]
      %v369 = vld [vmem:[%s347 + $0x30] sm:$0xff]
      %v370 = vld [vmem:[%s347 + $0x38] sm:$0xff]
      %v371 = vld [vmem:[%s347 + $0x40] sm:$0xff]
      %v372 = vld [vmem:[%s347 + $0x48] sm:$0xff]
      %v373 = vld [vmem:[%s347 + $0x50] sm:$0xff]
      %v374 = vld [vmem:[%s347 + $0x58] sm:$0xff]
      %v375 = vld [vmem:[%s347 + $0x60] sm:$0xff]
      %v376 = vld [vmem:[%s347 + $0x68] sm:$0xff]
      %v377 = vld [vmem:[%s347 + $0x70] sm:$0xff]
      %v378 = vld [vmem:[%s347 + $0x78] sm:$0xff]
      %v379 = vld [vmem:[%s347 + $0x80] sm:$0xff]
      %v380 = vld [vmem:[%s347 + $0x88] sm:$0xff]
      %v381 = vld [vmem:[%s347 + $0x90] sm:$0xff]
      %v382 = vld [vmem:[%s347 + $0x98] sm:$0xff]
      %v383 = vld [vmem:[%s347 + $0xa0] sm:$0xff]
      %v384 = vld [vmem:[%s347 + $0xa8] sm:$0xff]
      %v385 = vld [vmem:[%s347 + $0xb0] sm:$0xff]
      %v386 = vld [vmem:[%s347 + $0xb8] sm:$0xff]
      %v387 = vld [vmem:[%s347 + $0xc0] sm:$0xff]
      %v388 = vld [vmem:[%s347 + $0xc8] sm:$0xff]
      %vm389 = vcmask 64512
      %390 = vst.msk [vmem:[#allocation2] sm:$0xff] %vm389, %v363
      %391 = vst.msk [vmem:[#allocation2 + $0x8] sm:$0xff] %vm389, %v364
      %392 = vst.msk [vmem:[#allocation2 + $0x10] sm:$0xff] %vm389, %v365
      %393 = vst.msk [vmem:[#allocation2 + $0x18] sm:$0xff] %vm389, %v366
      %394 = vst.msk [vmem:[#allocation2 + $0x20] sm:$0xff] %vm389, %v367
      %395 = vst.msk [vmem:[#allocation2 + $0x28] sm:$0xff] %vm389, %v368
      %396 = vst.msk [vmem:[#allocation2 + $0x30] sm:$0xff] %vm389, %v369
      %397 = vst.msk [vmem:[#allocation2 + $0x38] sm:$0xff] %vm389, %v370
      %398 = vst.msk [vmem:[#allocation2 + $0x40] sm:$0xff] %vm389, %v371
      %399 = vst.msk [vmem:[#allocation2 + $0x48] sm:$0xff] %vm389, %v372
      %400 = vst.msk [vmem:[#allocation2 + $0x50] sm:$0xff] %vm389, %v373
      %401 = vst.msk [vmem:[#allocation2 + $0x58] sm:$0xff] %vm389, %v374
      %402 = vst.msk [vmem:[#allocation2 + $0x60] sm:$0xff] %vm389, %v375
      %403 = vst.msk [vmem:[#allocation2 + $0x68] sm:$0xff] %vm389, %v376
      %404 = vst.msk [vmem:[#allocation2 + $0x70] sm:$0xff] %vm389, %v377
      %405 = vst.msk [vmem:[#allocation2 + $0x78] sm:$0xff] %vm389, %v378
      %406 = vst.msk [vmem:[#allocation2 + $0x80] sm:$0xff] %vm389, %v379
      %407 = vst.msk [vmem:[#allocation2 + $0x88] sm:$0xff] %vm389, %v380
      %408 = vst.msk [vmem:[#allocation2 + $0x90] sm:$0xff] %vm389, %v381
      %409 = vst.msk [vmem:[#allocation2 + $0x98] sm:$0xff] %vm389, %v382
      %410 = vst.msk [vmem:[#allocation2 + $0xa0] sm:$0xff] %vm389, %v383
      %411 = vst.msk [vmem:[#allocation2 + $0xa8] sm:$0xff] %vm389, %v384
      %412 = vst.msk [vmem:[#allocation2 + $0xb0] sm:$0xff] %vm389, %v385
      %413 = vst.msk [vmem:[#allocation2 + $0xb8] sm:$0xff] %vm389, %v386
      %414 = vst.msk [vmem:[#allocation2 + $0xc0] sm:$0xff] %vm389, %v387
      %415 = vst.msk [vmem:[#allocation2 + $0xc8] sm:$0xff] %vm389, %v388
      %v416 = vld [vmem:[%s347 + $0x1] sm:$0xff]
      %v417 = vld [vmem:[%s347 + $0x9] sm:$0xff]
      %v418 = vld [vmem:[%s347 + $0x11] sm:$0xff]
      %v419 = vld [vmem:[%s347 + $0x19] sm:$0xff]
      %v420 = vld [vmem:[%s347 + $0x21] sm:$0xff]
      %v421 = vld [vmem:[%s347 + $0x29] sm:$0xff]
      %v422 = vld [vmem:[%s347 + $0x31] sm:$0xff]
      %v423 = vld [vmem:[%s347 + $0x39] sm:$0xff]
      %v424 = vld [vmem:[%s347 + $0x41] sm:$0xff]
      %v425 = vld [vmem:[%s347 + $0x49] sm:$0xff]
      %v426 = vld [vmem:[%s347 + $0x51] sm:$0xff]
      %v427 = vld [vmem:[%s347 + $0x59] sm:$0xff]
      %v428 = vld [vmem:[%s347 + $0x61] sm:$0xff]
      %v429 = vld [vmem:[%s347 + $0x69] sm:$0xff]
      %v430 = vld [vmem:[%s347 + $0x71] sm:$0xff]
      %v431 = vld [vmem:[%s347 + $0x79] sm:$0xff]
      %v432 = vld [vmem:[%s347 + $0x81] sm:$0xff]
      %v433 = vld [vmem:[%s347 + $0x89] sm:$0xff]
      %v434 = vld [vmem:[%s347 + $0x91] sm:$0xff]
      %v435 = vld [vmem:[%s347 + $0x99] sm:$0xff]
      %v436 = vld [vmem:[%s347 + $0xa1] sm:$0xff]
      %v437 = vld [vmem:[%s347 + $0xa9] sm:$0xff]
      %v438 = vld [vmem:[%s347 + $0xb1] sm:$0xff]
      %v439 = vld [vmem:[%s347 + $0xb9] sm:$0xff]
      %v440 = vld [vmem:[%s347 + $0xc1] sm:$0xff]
      %v441 = vld [vmem:[%s347 + $0xc9] sm:$0xff]
      %468 = vrot.lane.b32.xlu0 %v416, 8
      %v469 = vpop.permute.xlu0 %468
      %470 = vrot.lane.b32.xlu0 %v417, 8
      %v471 = vpop.permute.xlu0 %470
      %472 = vrot.lane.b32.xlu0 %v418, 8
      %v473 = vpop.permute.xlu0 %472
      %474 = vrot.lane.b32.xlu0 %v419, 8
      %v475 = vpop.permute.xlu0 %474
      %476 = vrot.lane.b32.xlu0 %v420, 8
      %v477 = vpop.permute.xlu0 %476
      %478 = vrot.lane.b32.xlu0 %v421, 8
      %v479 = vpop.permute.xlu0 %478
      %480 = vrot.lane.b32.xlu0 %v422, 8
      %v481 = vpop.permute.xlu0 %480
      %482 = vrot.lane.b32.xlu0 %v423, 8
      %v483 = vpop.permute.xlu0 %482
      %484 = vrot.lane.b32.xlu0 %v424, 8
      %v485 = vpop.permute.xlu0 %484
      %486 = vrot.lane.b32.xlu0 %v425, 8
      %v487 = vpop.permute.xlu0 %486
      %488 = vrot.lane.b32.xlu0 %v426, 8
      %v489 = vpop.permute.xlu0 %488
      %490 = vrot.lane.b32.xlu0 %v427, 8
      %v491 = vpop.permute.xlu0 %490
      %492 = vrot.lane.b32.xlu0 %v428, 8
      %v493 = vpop.permute.xlu0 %492
      %494 = vrot.lane.b32.xlu0 %v429, 8
      %v495 = vpop.permute.xlu0 %494
      %496 = vrot.lane.b32.xlu0 %v430, 8
      %v497 = vpop.permute.xlu0 %496
      %498 = vrot.lane.b32.xlu0 %v431, 8
      %v499 = vpop.permute.xlu0 %498
      %500 = vrot.lane.b32.xlu0 %v432, 8
      %v501 = vpop.permute.xlu0 %500
      %502 = vrot.lane.b32.xlu0 %v433, 8
      %v503 = vpop.permute.xlu0 %502
      %504 = vrot.lane.b32.xlu0 %v434, 8
      %v505 = vpop.permute.xlu0 %504
      %506 = vrot.lane.b32.xlu0 %v435, 8
      %v507 = vpop.permute.xlu0 %506
      %508 = vrot.lane.b32.xlu0 %v436, 8
      %v509 = vpop.permute.xlu0 %508
      %510 = vrot.lane.b32.xlu0 %v437, 8
      %v511 = vpop.permute.xlu0 %510
      %512 = vrot.lane.b32.xlu0 %v438, 8
      %v513 = vpop.permute.xlu0 %512
      %514 = vrot.lane.b32.xlu0 %v439, 8
      %v515 = vpop.permute.xlu0 %514
      %516 = vrot.lane.b32.xlu0 %v440, 8
      %v517 = vpop.permute.xlu0 %516
      %518 = vrot.lane.b32.xlu0 %v441, 8
      %v519 = vpop.permute.xlu0 %518
      %vm546 = vcmask 130112
      %547 = vst.msk [vmem:[#allocation2] sm:$0xff] %vm546, %v469
      %548 = vst.msk [vmem:[#allocation2 + $0x8] sm:$0xff] %vm546, %v471
      %549 = vst.msk [vmem:[#allocation2 + $0x10] sm:$0xff] %vm546, %v473
      %550 = vst.msk [vmem:[#allocation2 + $0x18] sm:$0xff] %vm546, %v475
      %551 = vst.msk [vmem:[#allocation2 + $0x20] sm:$0xff] %vm546, %v477
      %552 = vst.msk [vmem:[#allocation2 + $0x28] sm:$0xff] %vm546, %v479
      %553 = vst.msk [vmem:[#allocation2 + $0x30] sm:$0xff] %vm546, %v481
      %554 = vst.msk [vmem:[#allocation2 + $0x38] sm:$0xff] %vm546, %v483
      %555 = vst.msk [vmem:[#allocation2 + $0x40] sm:$0xff] %vm546, %v485
      %556 = vst.msk [vmem:[#allocation2 + $0x48] sm:$0xff] %vm546, %v487
      %557 = vst.msk [vmem:[#allocation2 + $0x50] sm:$0xff] %vm546, %v489
      %558 = vst.msk [vmem:[#allocation2 + $0x58] sm:$0xff] %vm546, %v491
      %559 = vst.msk [vmem:[#allocation2 + $0x60] sm:$0xff] %vm546, %v493
      %560 = vst.msk [vmem:[#allocation2 + $0x68] sm:$0xff] %vm546, %v495
      %561 = vst.msk [vmem:[#allocation2 + $0x70] sm:$0xff] %vm546, %v497
      %562 = vst.msk [vmem:[#allocation2 + $0x78] sm:$0xff] %vm546, %v499
      %563 = vst.msk [vmem:[#allocation2 + $0x80] sm:$0xff] %vm546, %v501
      %564 = vst.msk [vmem:[#allocation2 + $0x88] sm:$0xff] %vm546, %v503
      %565 = vst.msk [vmem:[#allocation2 + $0x90] sm:$0xff] %vm546, %v505
      %566 = vst.msk [vmem:[#allocation2 + $0x98] sm:$0xff] %vm546, %v507
      %567 = vst.msk [vmem:[#allocation2 + $0xa0] sm:$0xff] %vm546, %v509
      %568 = vst.msk [vmem:[#allocation2 + $0xa8] sm:$0xff] %vm546, %v511
      %569 = vst.msk [vmem:[#allocation2 + $0xb0] sm:$0xff] %vm546, %v513
      %570 = vst.msk [vmem:[#allocation2 + $0xb8] sm:$0xff] %vm546, %v515
      %571 = vst.msk [vmem:[#allocation2 + $0xc0] sm:$0xff] %vm546, %v517
      %572 = vst.msk [vmem:[#allocation2 + $0xc8] sm:$0xff] %vm546, %v519
      %v573 = vld [vmem:[%s347 + $0x2] sm:$0xff]
      %v574 = vld [vmem:[%s347 + $0xa] sm:$0xff]
      %v575 = vld [vmem:[%s347 + $0x12] sm:$0xff]
      %v576 = vld [vmem:[%s347 + $0x1a] sm:$0xff]
      %v577 = vld [vmem:[%s347 + $0x22] sm:$0xff]
      %v578 = vld [vmem:[%s347 + $0x2a] sm:$0xff]
      %v579 = vld [vmem:[%s347 + $0x32] sm:$0xff]
      %v580 = vld [vmem:[%s347 + $0x3a] sm:$0xff]
      %v581 = vld [vmem:[%s347 + $0x42] sm:$0xff]
      %v582 = vld [vmem:[%s347 + $0x4a] sm:$0xff]
      %v583 = vld [vmem:[%s347 + $0x52] sm:$0xff]
      %v584 = vld [vmem:[%s347 + $0x5a] sm:$0xff]
      %v585 = vld [vmem:[%s347 + $0x62] sm:$0xff]
      %v586 = vld [vmem:[%s347 + $0x6a] sm:$0xff]
      %v587 = vld [vmem:[%s347 + $0x72] sm:$0xff]
      %v588 = vld [vmem:[%s347 + $0x7a] sm:$0xff]
      %v589 = vld [vmem:[%s347 + $0x82] sm:$0xff]
      %v590 = vld [vmem:[%s347 + $0x8a] sm:$0xff]
      %v591 = vld [vmem:[%s347 + $0x92] sm:$0xff]
      %v592 = vld [vmem:[%s347 + $0x9a] sm:$0xff]
      %v593 = vld [vmem:[%s347 + $0xa2] sm:$0xff]
      %v594 = vld [vmem:[%s347 + $0xaa] sm:$0xff]
      %v595 = vld [vmem:[%s347 + $0xb2] sm:$0xff]
      %v596 = vld [vmem:[%s347 + $0xba] sm:$0xff]
      %v597 = vld [vmem:[%s347 + $0xc2] sm:$0xff]
      %v598 = vld [vmem:[%s347 + $0xca] sm:$0xff]
      %625 = vrot.lane.b32.xlu0 %v573, 16
      %v626 = vpop.permute.xlu0 %625
      %627 = vrot.lane.b32.xlu0 %v574, 16
      %v628 = vpop.permute.xlu0 %627
      %629 = vrot.lane.b32.xlu0 %v575, 16
      %v630 = vpop.permute.xlu0 %629
      %631 = vrot.lane.b32.xlu0 %v576, 16
      %v632 = vpop.permute.xlu0 %631
      %633 = vrot.lane.b32.xlu0 %v577, 16
      %v634 = vpop.permute.xlu0 %633
      %635 = vrot.lane.b32.xlu0 %v578, 16
      %v636 = vpop.permute.xlu0 %635
      %637 = vrot.lane.b32.xlu0 %v579, 16
      %v638 = vpop.permute.xlu0 %637
      %639 = vrot.lane.b32.xlu0 %v580, 16
      %v640 = vpop.permute.xlu0 %639
      %641 = vrot.lane.b32.xlu0 %v581, 16
      %v642 = vpop.permute.xlu0 %641
      %643 = vrot.lane.b32.xlu0 %v582, 16
      %v644 = vpop.permute.xlu0 %643
      %645 = vrot.lane.b32.xlu0 %v583, 16
      %v646 = vpop.permute.xlu0 %645
      %647 = vrot.lane.b32.xlu0 %v584, 16
      %v648 = vpop.permute.xlu0 %647
      %649 = vrot.lane.b32.xlu0 %v585, 16
      %v650 = vpop.permute.xlu0 %649
      %651 = vrot.lane.b32.xlu0 %v586, 16
      %v652 = vpop.permute.xlu0 %651
      %653 = vrot.lane.b32.xlu0 %v587, 16
      %v654 = vpop.permute.xlu0 %653
      %655 = vrot.lane.b32.xlu0 %v588, 16
      %v656 = vpop.permute.xlu0 %655
      %657 = vrot.lane.b32.xlu0 %v589, 16
      %v658 = vpop.permute.xlu0 %657
      %659 = vrot.lane.b32.xlu0 %v590, 16
      %v660 = vpop.permute.xlu0 %659
      %661 = vrot.lane.b32.xlu0 %v591, 16
      %v662 = vpop.permute.xlu0 %661
      %663 = vrot.lane.b32.xlu0 %v592, 16
      %v664 = vpop.permute.xlu0 %663
      %665 = vrot.lane.b32.xlu0 %v593, 16
      %v666 = vpop.permute.xlu0 %665
      %667 = vrot.lane.b32.xlu0 %v594, 16
      %v668 = vpop.permute.xlu0 %667
      %669 = vrot.lane.b32.xlu0 %v595, 16
      %v670 = vpop.permute.xlu0 %669
      %671 = vrot.lane.b32.xlu0 %v596, 16
      %v672 = vpop.permute.xlu0 %671
      %673 = vrot.lane.b32.xlu0 %v597, 16
      %v674 = vpop.permute.xlu0 %673
      %675 = vrot.lane.b32.xlu0 %v598, 16
      %v676 = vpop.permute.xlu0 %675
      %vm703 = vcmask 195712
      %704 = vst.msk [vmem:[#allocation2] sm:$0xff] %vm703, %v626
      %705 = vst.msk [vmem:[#allocation2 + $0x8] sm:$0xff] %vm703, %v628
      %706 = vst.msk [vmem:[#allocation2 + $0x10] sm:$0xff] %vm703, %v630
      %707 = vst.msk [vmem:[#allocation2 + $0x18] sm:$0xff] %vm703, %v632
      %708 = vst.msk [vmem:[#allocation2 + $0x20] sm:$0xff] %vm703, %v634
      %709 = vst.msk [vmem:[#allocation2 + $0x28] sm:$0xff] %vm703, %v636
      %710 = vst.msk [vmem:[#allocation2 + $0x30] sm:$0xff] %vm703, %v638
      %711 = vst.msk [vmem:[#allocation2 + $0x38] sm:$0xff] %vm703, %v640
      %712 = vst.msk [vmem:[#allocation2 + $0x40] sm:$0xff] %vm703, %v642
      %713 = vst.msk [vmem:[#allocation2 + $0x48] sm:$0xff] %vm703, %v644
      %714 = vst.msk [vmem:[#allocation2 + $0x50] sm:$0xff] %vm703, %v646
      %715 = vst.msk [vmem:[#allocation2 + $0x58] sm:$0xff] %vm703, %v648
      %716 = vst.msk [vmem:[#allocation2 + $0x60] sm:$0xff] %vm703, %v650
      %717 = vst.msk [vmem:[#allocation2 + $0x68] sm:$0xff] %vm703, %v652
      %718 = vst.msk [vmem:[#allocation2 + $0x70] sm:$0xff] %vm703, %v654
      %719 = vst.msk [vmem:[#allocation2 + $0x78] sm:$0xff] %vm703, %v656
      %720 = vst.msk [vmem:[#allocation2 + $0x80] sm:$0xff] %vm703, %v658
      %721 = vst.msk [vmem:[#allocation2 + $0x88] sm:$0xff] %vm703, %v660
      %722 = vst.msk [vmem:[#allocation2 + $0x90] sm:$0xff] %vm703, %v662
      %723 = vst.msk [vmem:[#allocation2 + $0x98] sm:$0xff] %vm703, %v664
      %724 = vst.msk [vmem:[#allocation2 + $0xa0] sm:$0xff] %vm703, %v666
      %725 = vst.msk [vmem:[#allocation2 + $0xa8] sm:$0xff] %vm703, %v668
      %726 = vst.msk [vmem:[#allocation2 + $0xb0] sm:$0xff] %vm703, %v670
      %727 = vst.msk [vmem:[#allocation2 + $0xb8] sm:$0xff] %vm703, %v672
      %728 = vst.msk [vmem:[#allocation2 + $0xc0] sm:$0xff] %vm703, %v674
      %729 = vst.msk [vmem:[#allocation2 + $0xc8] sm:$0xff] %vm703, %v676
      %v730 = vld [vmem:[%s347 + $0x14] sm:$0xff]
      %v731 = vld [vmem:[%s347 + $0x1c] sm:$0xff]
      %v732 = vld [vmem:[%s347 + $0x24] sm:$0xff]
      %v733 = vld [vmem:[%s347 + $0x2c] sm:$0xff]
      %v734 = vld [vmem:[%s347 + $0x34] sm:$0xff]
      %v735 = vld [vmem:[%s347 + $0x3c] sm:$0xff]
      %v736 = vld [vmem:[%s347 + $0x44] sm:$0xff]
      %v737 = vld [vmem:[%s347 + $0x4c] sm:$0xff]
      %v738 = vld [vmem:[%s347 + $0x54] sm:$0xff]
      %v739 = vld [vmem:[%s347 + $0x5c] sm:$0xff]
      %v740 = vld [vmem:[%s347 + $0x64] sm:$0xff]
      %v741 = vld [vmem:[%s347 + $0x6c] sm:$0xff]
      %v742 = vld [vmem:[%s347 + $0x74] sm:$0xff]
      %v743 = vld [vmem:[%s347 + $0x7c] sm:$0xff]
      %v744 = vld [vmem:[%s347 + $0x84] sm:$0xff]
      %v745 = vld [vmem:[%s347 + $0x8c] sm:$0xff]
      %v746 = vld [vmem:[%s347 + $0x94] sm:$0xff]
      %v747 = vld [vmem:[%s347 + $0x9c] sm:$0xff]
      %v748 = vld [vmem:[%s347 + $0xa4] sm:$0xff]
      %v749 = vld [vmem:[%s347 + $0xac] sm:$0xff]
      %v750 = vld [vmem:[%s347 + $0xb4] sm:$0xff]
      %v751 = vld [vmem:[%s347 + $0xbc] sm:$0xff]
      %v752 = vld [vmem:[%s347 + $0xc4] sm:$0xff]
      %v753 = vld [vmem:[%s347 + $0xcc] sm:$0xff]
      %v754 = vld [vmem:[%s347 + $0xd4] sm:$0xff]
      %v755 = vld [vmem:[%s347 + $0xdc] sm:$0xff]
      %782 = vrot.lane.b32.xlu0 %v730, 24
      %v783 = vpop.permute.xlu0 %782
      %784 = vrot.lane.b32.xlu0 %v731, 24
      %v785 = vpop.permute.xlu0 %784
      %786 = vrot.lane.b32.xlu0 %v732, 24
      %v787 = vpop.permute.xlu0 %786
      %788 = vrot.lane.b32.xlu0 %v733, 24
      %v789 = vpop.permute.xlu0 %788
      %790 = vrot.lane.b32.xlu0 %v734, 24
      %v791 = vpop.permute.xlu0 %790
      %792 = vrot.lane.b32.xlu0 %v735, 24
      %v793 = vpop.permute.xlu0 %792
      %794 = vrot.lane.b32.xlu0 %v736, 24
      %v795 = vpop.permute.xlu0 %794
      %796 = vrot.lane.b32.xlu0 %v737, 24
      %v797 = vpop.permute.xlu0 %796
      %798 = vrot.lane.b32.xlu0 %v738, 24
      %v799 = vpop.permute.xlu0 %798
      %800 = vrot.lane.b32.xlu0 %v739, 24
      %v801 = vpop.permute.xlu0 %800
      %802 = vrot.lane.b32.xlu0 %v740, 24
      %v803 = vpop.permute.xlu0 %802
      %804 = vrot.lane.b32.xlu0 %v741, 24
      %v805 = vpop.permute.xlu0 %804
      %806 = vrot.lane.b32.xlu0 %v742, 24
      %v807 = vpop.permute.xlu0 %806
      %808 = vrot.lane.b32.xlu0 %v743, 24
      %v809 = vpop.permute.xlu0 %808
      %810 = vrot.lane.b32.xlu0 %v744, 24
      %v811 = vpop.permute.xlu0 %810
      %812 = vrot.lane.b32.xlu0 %v745, 24
      %v813 = vpop.permute.xlu0 %812
      %814 = vrot.lane.b32.xlu0 %v746, 24
      %v815 = vpop.permute.xlu0 %814
      %816 = vrot.lane.b32.xlu0 %v747, 24
      %v817 = vpop.permute.xlu0 %816
      %818 = vrot.lane.b32.xlu0 %v748, 24
      %v819 = vpop.permute.xlu0 %818
      %820 = vrot.lane.b32.xlu0 %v749, 24
      %v821 = vpop.permute.xlu0 %820
      %822 = vrot.lane.b32.xlu0 %v750, 24
      %v823 = vpop.permute.xlu0 %822
      %824 = vrot.lane.b32.xlu0 %v751, 24
      %v825 = vpop.permute.xlu0 %824
      %826 = vrot.lane.b32.xlu0 %v752, 24
      %v827 = vpop.permute.xlu0 %826
      %828 = vrot.lane.b32.xlu0 %v753, 24
      %v829 = vpop.permute.xlu0 %828
      %830 = vrot.lane.b32.xlu0 %v754, 24
      %v831 = vpop.permute.xlu0 %830
      %832 = vrot.lane.b32.xlu0 %v755, 24
      %v833 = vpop.permute.xlu0 %832
      %vm860 = vcmask 261312
      %861 = vst.msk [vmem:[#allocation2] sm:$0xff] %vm860, %v783
      %862 = vst.msk [vmem:[#allocation2 + $0x8] sm:$0xff] %vm860, %v785
      %863 = vst.msk [vmem:[#allocation2 + $0x10] sm:$0xff] %vm860, %v787
      %864 = vst.msk [vmem:[#allocation2 + $0x18] sm:$0xff] %vm860, %v789
      %865 = vst.msk [vmem:[#allocation2 + $0x20] sm:$0xff] %vm860, %v791
      %866 = vst.msk [vmem:[#allocation2 + $0x28] sm:$0xff] %vm860, %v793
      %867 = vst.msk [vmem:[#allocation2 + $0x30] sm:$0xff] %vm860, %v795
      %868 = vst.msk [vmem:[#allocation2 + $0x38] sm:$0xff] %vm860, %v797
      %869 = vst.msk [vmem:[#allocation2 + $0x40] sm:$0xff] %vm860, %v799
      %870 = vst.msk [vmem:[#allocation2 + $0x48] sm:$0xff] %vm860, %v801
      %871 = vst.msk [vmem:[#allocation2 + $0x50] sm:$0xff] %vm860, %v803
      %872 = vst.msk [vmem:[#allocation2 + $0x58] sm:$0xff] %vm860, %v805
      %873 = vst.msk [vmem:[#allocation2 + $0x60] sm:$0xff] %vm860, %v807
      %874 = vst.msk [vmem:[#allocation2 + $0x68] sm:$0xff] %vm860, %v809
      %875 = vst.msk [vmem:[#allocation2 + $0x70] sm:$0xff] %vm860, %v811
      %876 = vst.msk [vmem:[#allocation2 + $0x78] sm:$0xff] %vm860, %v813
      %877 = vst.msk [vmem:[#allocation2 + $0x80] sm:$0xff] %vm860, %v815
      %878 = vst.msk [vmem:[#allocation2 + $0x88] sm:$0xff] %vm860, %v817
      %879 = vst.msk [vmem:[#allocation2 + $0x90] sm:$0xff] %vm860, %v819
      %880 = vst.msk [vmem:[#allocation2 + $0x98] sm:$0xff] %vm860, %v821
      %881 = vst.msk [vmem:[#allocation2 + $0xa0] sm:$0xff] %vm860, %v823
      %882 = vst.msk [vmem:[#allocation2 + $0xa8] sm:$0xff] %vm860, %v825
      %883 = vst.msk [vmem:[#allocation2 + $0xb0] sm:$0xff] %vm860, %v827
      %884 = vst.msk [vmem:[#allocation2 + $0xb8] sm:$0xff] %vm860, %v829
      %885 = vst.msk [vmem:[#allocation2 + $0xc0] sm:$0xff] %vm860, %v831
      %886 = vst.msk [vmem:[#allocation2 + $0xc8] sm:$0xff] %vm860, %v833
      %v887 = vld [vmem:[%s347 + $0x15] sm:$0xff]
      %v888 = vld [vmem:[%s347 + $0x1d] sm:$0xff]
      %v889 = vld [vmem:[%s347 + $0x25] sm:$0xff]
      %v890 = vld [vmem:[%s347 + $0x2d] sm:$0xff]
      %v891 = vld [vmem:[%s347 + $0x35] sm:$0xff]
      %v892 = vld [vmem:[%s347 + $0x3d] sm:$0xff]
      %v893 = vld [vmem:[%s347 + $0x45] sm:$0xff]
      %v894 = vld [vmem:[%s347 + $0x4d] sm:$0xff]
      %v895 = vld [vmem:[%s347 + $0x55] sm:$0xff]
      %v896 = vld [vmem:[%s347 + $0x5d] sm:$0xff]
      %v897 = vld [vmem:[%s347 + $0x65] sm:$0xff]
      %v898 = vld [vmem:[%s347 + $0x6d] sm:$0xff]
      %v899 = vld [vmem:[%s347 + $0x75] sm:$0xff]
      %v900 = vld [vmem:[%s347 + $0x7d] sm:$0xff]
      %v901 = vld [vmem:[%s347 + $0x85] sm:$0xff]
      %v902 = vld [vmem:[%s347 + $0x8d] sm:$0xff]
      %v903 = vld [vmem:[%s347 + $0x95] sm:$0xff]
      %v904 = vld [vmem:[%s347 + $0x9d] sm:$0xff]
      %v905 = vld [vmem:[%s347 + $0xa5] sm:$0xff]
      %v906 = vld [vmem:[%s347 + $0xad] sm:$0xff]
      %v907 = vld [vmem:[%s347 + $0xb5] sm:$0xff]
      %v908 = vld [vmem:[%s347 + $0xbd] sm:$0xff]
      %v909 = vld [vmem:[%s347 + $0xc5] sm:$0xff]
      %v910 = vld [vmem:[%s347 + $0xcd] sm:$0xff]
      %v911 = vld [vmem:[%s347 + $0xd5] sm:$0xff]
      %v912 = vld [vmem:[%s347 + $0xdd] sm:$0xff]
      %939 = vrot.lane.b32.xlu0 %v887, 32
      %v940 = vpop.permute.xlu0 %939
      %941 = vrot.lane.b32.xlu0 %v888, 32
      %v942 = vpop.permute.xlu0 %941
      %943 = vrot.lane.b32.xlu0 %v889, 32
      %v944 = vpop.permute.xlu0 %943
      %945 = vrot.lane.b32.xlu0 %v890, 32
      %v946 = vpop.permute.xlu0 %945
      %947 = vrot.lane.b32.xlu0 %v891, 32
      %v948 = vpop.permute.xlu0 %947
      %949 = vrot.lane.b32.xlu0 %v892, 32
      %v950 = vpop.permute.xlu0 %949
      %951 = vrot.lane.b32.xlu0 %v893, 32
      %v952 = vpop.permute.xlu0 %951
      %953 = vrot.lane.b32.xlu0 %v894, 32
      %v954 = vpop.permute.xlu0 %953
      %955 = vrot.lane.b32.xlu0 %v895, 32
      %v956 = vpop.permute.xlu0 %955
      %957 = vrot.lane.b32.xlu0 %v896, 32
      %v958 = vpop.permute.xlu0 %957
      %959 = vrot.lane.b32.xlu0 %v897, 32
      %v960 = vpop.permute.xlu0 %959
      %961 = vrot.lane.b32.xlu0 %v898, 32
      %v962 = vpop.permute.xlu0 %961
      %963 = vrot.lane.b32.xlu0 %v899, 32
      %v964 = vpop.permute.xlu0 %963
      %965 = vrot.lane.b32.xlu0 %v900, 32
      %v966 = vpop.permute.xlu0 %965
      %967 = vrot.lane.b32.xlu0 %v901, 32
      %v968 = vpop.permute.xlu0 %967
      %969 = vrot.lane.b32.xlu0 %v902, 32
      %v970 = vpop.permute.xlu0 %969
      %971 = vrot.lane.b32.xlu0 %v903, 32
      %v972 = vpop.permute.xlu0 %971
      %973 = vrot.lane.b32.xlu0 %v904, 32
      %v974 = vpop.permute.xlu0 %973
      %975 = vrot.lane.b32.xlu0 %v905, 32
      %v976 = vpop.permute.xlu0 %975
      %977 = vrot.lane.b32.xlu0 %v906, 32
      %v978 = vpop.permute.xlu0 %977
      %979 = vrot.lane.b32.xlu0 %v907, 32
      %v980 = vpop.permute.xlu0 %979
      %981 = vrot.lane.b32.xlu0 %v908, 32
      %v982 = vpop.permute.xlu0 %981
      %983 = vrot.lane.b32.xlu0 %v909, 32
      %v984 = vpop.permute.xlu0 %983
      %985 = vrot.lane.b32.xlu0 %v910, 32
      %v986 = vpop.permute.xlu0 %985
      %987 = vrot.lane.b32.xlu0 %v911, 32
      %v988 = vpop.permute.xlu0 %987
      %989 = vrot.lane.b32.xlu0 %v912, 32
      %v990 = vpop.permute.xlu0 %989
      %vm1017 = vcmask 326912
      %1018 = vst.msk [vmem:[#allocation2] sm:$0xff] %vm1017, %v940
      %1019 = vst.msk [vmem:[#allocation2 + $0x8] sm:$0xff] %vm1017, %v942
      %1020 = vst.msk [vmem:[#allocation2 + $0x10] sm:$0xff] %vm1017, %v944
      %1021 = vst.msk [vmem:[#allocation2 + $0x18] sm:$0xff] %vm1017, %v946
      %1022 = vst.msk [vmem:[#allocation2 + $0x20] sm:$0xff] %vm1017, %v948
      %1023 = vst.msk [vmem:[#allocation2 + $0x28] sm:$0xff] %vm1017, %v950
      %1024 = vst.msk [vmem:[#allocation2 + $0x30] sm:$0xff] %vm1017, %v952
      %1025 = vst.msk [vmem:[#allocation2 + $0x38] sm:$0xff] %vm1017, %v954
      %1026 = vst.msk [vmem:[#allocation2 + $0x40] sm:$0xff] %vm1017, %v956
      %1027 = vst.msk [vmem:[#allocation2 + $0x48] sm:$0xff] %vm1017, %v958
      %1028 = vst.msk [vmem:[#allocation2 + $0x50] sm:$0xff] %vm1017, %v960
      %1029 = vst.msk [vmem:[#allocation2 + $0x58] sm:$0xff] %vm1017, %v962
      %1030 = vst.msk [vmem:[#allocation2 + $0x60] sm:$0xff] %vm1017, %v964
      %1031 = vst.msk [vmem:[#allocation2 + $0x68] sm:$0xff] %vm1017, %v966
      %1032 = vst.msk [vmem:[#allocation2 + $0x70] sm:$0xff] %vm1017, %v968
      %1033 = vst.msk [vmem:[#allocation2 + $0x78] sm:$0xff] %vm1017, %v970
      %1034 = vst.msk [vmem:[#allocation2 + $0x80] sm:$0xff] %vm1017, %v972
      %1035 = vst.msk [vmem:[#allocation2 + $0x88] sm:$0xff] %vm1017, %v974
      %1036 = vst.msk [vmem:[#allocation2 + $0x90] sm:$0xff] %vm1017, %v976
      %1037 = vst.msk [vmem:[#allocation2 + $0x98] sm:$0xff] %vm1017, %v978
      %1038 = vst.msk [vmem:[#allocation2 + $0xa0] sm:$0xff] %vm1017, %v980
      %1039 = vst.msk [vmem:[#allocation2 + $0xa8] sm:$0xff] %vm1017, %v982
      %1040 = vst.msk [vmem:[#allocation2 + $0xb0] sm:$0xff] %vm1017, %v984
      %1041 = vst.msk [vmem:[#allocation2 + $0xb8] sm:$0xff] %vm1017, %v986
      %1042 = vst.msk [vmem:[#allocation2 + $0xc0] sm:$0xff] %vm1017, %v988
      %1043 = vst.msk [vmem:[#allocation2 + $0xc8] sm:$0xff] %vm1017, %v990
      %v1044 = vld [vmem:[%s347 + $0x16] sm:$0xff]
      %v1045 = vld [vmem:[%s347 + $0x1e] sm:$0xff]
      %v1046 = vld [vmem:[%s347 + $0x26] sm:$0xff]
      %v1047 = vld [vmem:[%s347 + $0x2e] sm:$0xff]
      %v1048 = vld [vmem:[%s347 + $0x36] sm:$0xff]
      %v1049 = vld [vmem:[%s347 + $0x3e] sm:$0xff]
      %v1050 = vld [vmem:[%s347 + $0x46] sm:$0xff]
      %v1051 = vld [vmem:[%s347 + $0x4e] sm:$0xff]
      %v1052 = vld [vmem:[%s347 + $0x56] sm:$0xff]
      %v1053 = vld [vmem:[%s347 + $0x5e] sm:$0xff]
      %v1054 = vld [vmem:[%s347 + $0x66] sm:$0xff]
      %v1055 = vld [vmem:[%s347 + $0x6e] sm:$0xff]
      %v1056 = vld [vmem:[%s347 + $0x76] sm:$0xff]
      %v1057 = vld [vmem:[%s347 + $0x7e] sm:$0xff]
      %v1058 = vld [vmem:[%s347 + $0x86] sm:$0xff]
      %v1059 = vld [vmem:[%s347 + $0x8e] sm:$0xff]
      %v1060 = vld [vmem:[%s347 + $0x96] sm:$0xff]
      %v1061 = vld [vmem:[%s347 + $0x9e] sm:$0xff]
      %v1062 = vld [vmem:[%s347 + $0xa6] sm:$0xff]
      %v1063 = vld [vmem:[%s347 + $0xae] sm:$0xff]
      %v1064 = vld [vmem:[%s347 + $0xb6] sm:$0xff]
      %v1065 = vld [vmem:[%s347 + $0xbe] sm:$0xff]
      %v1066 = vld [vmem:[%s347 + $0xc6] sm:$0xff]
      %v1067 = vld [vmem:[%s347 + $0xce] sm:$0xff]
      %v1068 = vld [vmem:[%s347 + $0xd6] sm:$0xff]
      %v1069 = vld [vmem:[%s347 + $0xde] sm:$0xff]
      %1096 = vrot.lane.b32.xlu0 %v1044, 40
      %v1097 = vpop.permute.xlu0 %1096
      %1098 = vrot.lane.b32.xlu0 %v1045, 40
      %v1099 = vpop.permute.xlu0 %1098
      %1100 = vrot.lane.b32.xlu0 %v1046, 40
      %v1101 = vpop.permute.xlu0 %1100
      %1102 = vrot.lane.b32.xlu0 %v1047, 40
      %v1103 = vpop.permute.xlu0 %1102
      %1104 = vrot.lane.b32.xlu0 %v1048, 40
      %v1105 = vpop.permute.xlu0 %1104
      %1106 = vrot.lane.b32.xlu0 %v1049, 40
      %v1107 = vpop.permute.xlu0 %1106
      %1108 = vrot.lane.b32.xlu0 %v1050, 40
      %v1109 = vpop.permute.xlu0 %1108
      %1110 = vrot.lane.b32.xlu0 %v1051, 40
      %v1111 = vpop.permute.xlu0 %1110
      %1112 = vrot.lane.b32.xlu0 %v1052, 40
      %v1113 = vpop.permute.xlu0 %1112
      %1114 = vrot.lane.b32.xlu0 %v1053, 40
      %v1115 = vpop.permute.xlu0 %1114
      %1116 = vrot.lane.b32.xlu0 %v1054, 40
      %v1117 = vpop.permute.xlu0 %1116
      %1118 = vrot.lane.b32.xlu0 %v1055, 40
      %v1119 = vpop.permute.xlu0 %1118
      %1120 = vrot.lane.b32.xlu0 %v1056, 40
      %v1121 = vpop.permute.xlu0 %1120
      %1122 = vrot.lane.b32.xlu0 %v1057, 40
      %v1123 = vpop.permute.xlu0 %1122
      %1124 = vrot.lane.b32.xlu0 %v1058, 40
      %v1125 = vpop.permute.xlu0 %1124
      %1126 = vrot.lane.b32.xlu0 %v1059, 40
      %v1127 = vpop.permute.xlu0 %1126
      %1128 = vrot.lane.b32.xlu0 %v1060, 40
      %v1129 = vpop.permute.xlu0 %1128
      %1130 = vrot.lane.b32.xlu0 %v1061, 40
      %v1131 = vpop.permute.xlu0 %1130
      %1132 = vrot.lane.b32.xlu0 %v1062, 40
      %v1133 = vpop.permute.xlu0 %1132
      %1134 = vrot.lane.b32.xlu0 %v1063, 40
      %v1135 = vpop.permute.xlu0 %1134
      %1136 = vrot.lane.b32.xlu0 %v1064, 40
      %v1137 = vpop.permute.xlu0 %1136
      %1138 = vrot.lane.b32.xlu0 %v1065, 40
      %v1139 = vpop.permute.xlu0 %1138
      %1140 = vrot.lane.b32.xlu0 %v1066, 40
      %v1141 = vpop.permute.xlu0 %1140
      %1142 = vrot.lane.b32.xlu0 %v1067, 40
      %v1143 = vpop.permute.xlu0 %1142
      %1144 = vrot.lane.b32.xlu0 %v1068, 40
      %v1145 = vpop.permute.xlu0 %1144
      %1146 = vrot.lane.b32.xlu0 %v1069, 40
      %v1147 = vpop.permute.xlu0 %1146
      %vm1174 = vcmask 392512
      %1175 = vst.msk [vmem:[#allocation2] sm:$0xff] %vm1174, %v1097
      %1176 = vst.msk [vmem:[#allocation2 + $0x8] sm:$0xff] %vm1174, %v1099
      %1177 = vst.msk [vmem:[#allocation2 + $0x10] sm:$0xff] %vm1174, %v1101
      %1178 = vst.msk [vmem:[#allocation2 + $0x18] sm:$0xff] %vm1174, %v1103
      %1179 = vst.msk [vmem:[#allocation2 + $0x20] sm:$0xff] %vm1174, %v1105
      %1180 = vst.msk [vmem:[#allocation2 + $0x28] sm:$0xff] %vm1174, %v1107
      %1181 = vst.msk [vmem:[#allocation2 + $0x30] sm:$0xff] %vm1174, %v1109
      %1182 = vst.msk [vmem:[#allocation2 + $0x38] sm:$0xff] %vm1174, %v1111
      %1183 = vst.msk [vmem:[#allocation2 + $0x40] sm:$0xff] %vm1174, %v1113
      %1184 = vst.msk [vmem:[#allocation2 + $0x48] sm:$0xff] %vm1174, %v1115
      %1185 = vst.msk [vmem:[#allocation2 + $0x50] sm:$0xff] %vm1174, %v1117
      %1186 = vst.msk [vmem:[#allocation2 + $0x58] sm:$0xff] %vm1174, %v1119
      %1187 = vst.msk [vmem:[#allocation2 + $0x60] sm:$0xff] %vm1174, %v1121
      %1188 = vst.msk [vmem:[#allocation2 + $0x68] sm:$0xff] %vm1174, %v1123
      %1189 = vst.msk [vmem:[#allocation2 + $0x70] sm:$0xff] %vm1174, %v1125
      %1190 = vst.msk [vmem:[#allocation2 + $0x78] sm:$0xff] %vm1174, %v1127
      %1191 = vst.msk [vmem:[#allocation2 + $0x80] sm:$0xff] %vm1174, %v1129
      %1192 = vst.msk [vmem:[#allocation2 + $0x88] sm:$0xff] %vm1174, %v1131
      %1193 = vst.msk [vmem:[#allocation2 + $0x90] sm:$0xff] %vm1174, %v1133
      %1194 = vst.msk [vmem:[#allocation2 + $0x98] sm:$0xff] %vm1174, %v1135
      %1195 = vst.msk [vmem:[#allocation2 + $0xa0] sm:$0xff] %vm1174, %v1137
      %1196 = vst.msk [vmem:[#allocation2 + $0xa8] sm:$0xff] %vm1174, %v1139
      %1197 = vst.msk [vmem:[#allocation2 + $0xb0] sm:$0xff] %vm1174, %v1141
      %1198 = vst.msk [vmem:[#allocation2 + $0xb8] sm:$0xff] %vm1174, %v1143
      %1199 = vst.msk [vmem:[#allocation2 + $0xc0] sm:$0xff] %vm1174, %v1145
      %1200 = vst.msk [vmem:[#allocation2 + $0xc8] sm:$0xff] %vm1174, %v1147
      %v1201 = vld [vmem:[%s347 + $0x28] sm:$0xff]
      %v1202 = vld [vmem:[%s347 + $0x30] sm:$0xff]
      %v1203 = vld [vmem:[%s347 + $0x38] sm:$0xff]
      %v1204 = vld [vmem:[%s347 + $0x40] sm:$0xff]
      %v1205 = vld [vmem:[%s347 + $0x48] sm:$0xff]
      %v1206 = vld [vmem:[%s347 + $0x50] sm:$0xff]
      %v1207 = vld [vmem:[%s347 + $0x58] sm:$0xff]
      %v1208 = vld [vmem:[%s347 + $0x60] sm:$0xff]
      %v1209 = vld [vmem:[%s347 + $0x68] sm:$0xff]
      %v1210 = vld [vmem:[%s347 + $0x70] sm:$0xff]
      %v1211 = vld [vmem:[%s347 + $0x78] sm:$0xff]
      %v1212 = vld [vmem:[%s347 + $0x80] sm:$0xff]
      %v1213 = vld [vmem:[%s347 + $0x88] sm:$0xff]
      %v1214 = vld [vmem:[%s347 + $0x90] sm:$0xff]
      %v1215 = vld [vmem:[%s347 + $0x98] sm:$0xff]
      %v1216 = vld [vmem:[%s347 + $0xa0] sm:$0xff]
      %v1217 = vld [vmem:[%s347 + $0xa8] sm:$0xff]
      %v1218 = vld [vmem:[%s347 + $0xb0] sm:$0xff]
      %v1219 = vld [vmem:[%s347 + $0xb8] sm:$0xff]
      %v1220 = vld [vmem:[%s347 + $0xc0] sm:$0xff]
      %v1221 = vld [vmem:[%s347 + $0xc8] sm:$0xff]
      %v1222 = vld [vmem:[%s347 + $0xd0] sm:$0xff]
      %v1223 = vld [vmem:[%s347 + $0xd8] sm:$0xff]
      %v1224 = vld [vmem:[%s347 + $0xe0] sm:$0xff]
      %v1225 = vld [vmem:[%s347 + $0xe8] sm:$0xff]
      %v1226 = vld [vmem:[%s347 + $0xf0] sm:$0xff]
      %1253 = vrot.lane.b32.xlu0 %v1201, 48
      %v1254 = vpop.permute.xlu0 %1253
      %1255 = vrot.lane.b32.xlu0 %v1202, 48
      %v1256 = vpop.permute.xlu0 %1255
      %1257 = vrot.lane.b32.xlu0 %v1203, 48
      %v1258 = vpop.permute.xlu0 %1257
      %1259 = vrot.lane.b32.xlu0 %v1204, 48
      %v1260 = vpop.permute.xlu0 %1259
      %1261 = vrot.lane.b32.xlu0 %v1205, 48
      %v1262 = vpop.permute.xlu0 %1261
      %1263 = vrot.lane.b32.xlu0 %v1206, 48
      %v1264 = vpop.permute.xlu0 %1263
      %1265 = vrot.lane.b32.xlu0 %v1207, 48
      %v1266 = vpop.permute.xlu0 %1265
      %1267 = vrot.lane.b32.xlu0 %v1208, 48
      %v1268 = vpop.permute.xlu0 %1267
      %1269 = vrot.lane.b32.xlu0 %v1209, 48
      %v1270 = vpop.permute.xlu0 %1269
      %1271 = vrot.lane.b32.xlu0 %v1210, 48
      %v1272 = vpop.permute.xlu0 %1271
      %1273 = vrot.lane.b32.xlu0 %v1211, 48
      %v1274 = vpop.permute.xlu0 %1273
      %1275 = vrot.lane.b32.xlu0 %v1212, 48
      %v1276 = vpop.permute.xlu0 %1275
      %1277 = vrot.lane.b32.xlu0 %v1213, 48
      %v1278 = vpop.permute.xlu0 %1277
      %1279 = vrot.lane.b32.xlu0 %v1214, 48
      %v1280 = vpop.permute.xlu0 %1279
      %1281 = vrot.lane.b32.xlu0 %v1215, 48
      %v1282 = vpop.permute.xlu0 %1281
      %1283 = vrot.lane.b32.xlu0 %v1216, 48
      %v1284 = vpop.permute.xlu0 %1283
      %1285 = vrot.lane.b32.xlu0 %v1217, 48
      %v1286 = vpop.permute.xlu0 %1285
      %1287 = vrot.lane.b32.xlu0 %v1218, 48
      %v1288 = vpop.permute.xlu0 %1287
      %1289 = vrot.lane.b32.xlu0 %v1219, 48
      %v1290 = vpop.permute.xlu0 %1289
      %1291 = vrot.lane.b32.xlu0 %v1220, 48
      %v1292 = vpop.permute.xlu0 %1291
      %1293 = vrot.lane.b32.xlu0 %v1221, 48
      %v1294 = vpop.permute.xlu0 %1293
      %1295 = vrot.lane.b32.xlu0 %v1222, 48
      %v1296 = vpop.permute.xlu0 %1295
      %1297 = vrot.lane.b32.xlu0 %v1223, 48
      %v1298 = vpop.permute.xlu0 %1297
      %1299 = vrot.lane.b32.xlu0 %v1224, 48
      %v1300 = vpop.permute.xlu0 %1299
      %1301 = vrot.lane.b32.xlu0 %v1225, 48
      %v1302 = vpop.permute.xlu0 %1301
      %1303 = vrot.lane.b32.xlu0 %v1226, 48
      %v1304 = vpop.permute.xlu0 %1303
      %vm1331 = vcmask 458112
      %1332 = vst.msk [vmem:[#allocation2] sm:$0xff] %vm1331, %v1254
      %1333 = vst.msk [vmem:[#allocation2 + $0x8] sm:$0xff] %vm1331, %v1256
      %1334 = vst.msk [vmem:[#allocation2 + $0x10] sm:$0xff] %vm1331, %v1258
      %1335 = vst.msk [vmem:[#allocation2 + $0x18] sm:$0xff] %vm1331, %v1260
      %1336 = vst.msk [vmem:[#allocation2 + $0x20] sm:$0xff] %vm1331, %v1262
      %1337 = vst.msk [vmem:[#allocation2 + $0x28] sm:$0xff] %vm1331, %v1264
      %1338 = vst.msk [vmem:[#allocation2 + $0x30] sm:$0xff] %vm1331, %v1266
      %1339 = vst.msk [vmem:[#allocation2 + $0x38] sm:$0xff] %vm1331, %v1268
      %1340 = vst.msk [vmem:[#allocation2 + $0x40] sm:$0xff] %vm1331, %v1270
      %1341 = vst.msk [vmem:[#allocation2 + $0x48] sm:$0xff] %vm1331, %v1272
      %1342 = vst.msk [vmem:[#allocation2 + $0x50] sm:$0xff] %vm1331, %v1274
      %1343 = vst.msk [vmem:[#allocation2 + $0x58] sm:$0xff] %vm1331, %v1276
      %1344 = vst.msk [vmem:[#allocation2 + $0x60] sm:$0xff] %vm1331, %v1278
      %1345 = vst.msk [vmem:[#allocation2 + $0x68] sm:$0xff] %vm1331, %v1280
      %1346 = vst.msk [vmem:[#allocation2 + $0x70] sm:$0xff] %vm1331, %v1282
      %1347 = vst.msk [vmem:[#allocation2 + $0x78] sm:$0xff] %vm1331, %v1284
      %1348 = vst.msk [vmem:[#allocation2 + $0x80] sm:$0xff] %vm1331, %v1286
      %1349 = vst.msk [vmem:[#allocation2 + $0x88] sm:$0xff] %vm1331, %v1288
      %1350 = vst.msk [vmem:[#allocation2 + $0x90] sm:$0xff] %vm1331, %v1290
      %1351 = vst.msk [vmem:[#allocation2 + $0x98] sm:$0xff] %vm1331, %v1292
      %1352 = vst.msk [vmem:[#allocation2 + $0xa0] sm:$0xff] %vm1331, %v1294
      %1353 = vst.msk [vmem:[#allocation2 + $0xa8] sm:$0xff] %vm1331, %v1296
      %1354 = vst.msk [vmem:[#allocation2 + $0xb0] sm:$0xff] %vm1331, %v1298
      %1355 = vst.msk [vmem:[#allocation2 + $0xb8] sm:$0xff] %vm1331, %v1300
      %1356 = vst.msk [vmem:[#allocation2 + $0xc0] sm:$0xff] %vm1331, %v1302
      %1357 = vst.msk [vmem:[#allocation2 + $0xc8] sm:$0xff] %vm1331, %v1304
      %v1358 = vld [vmem:[%s347 + $0x29] sm:$0xff]
      %v1359 = vld [vmem:[%s347 + $0x31] sm:$0xff]
      %v1360 = vld [vmem:[%s347 + $0x39] sm:$0xff]
      %v1361 = vld [vmem:[%s347 + $0x41] sm:$0xff]
      %v1362 = vld [vmem:[%s347 + $0x49] sm:$0xff]
      %v1363 = vld [vmem:[%s347 + $0x51] sm:$0xff]
      %v1364 = vld [vmem:[%s347 + $0x59] sm:$0xff]
      %v1365 = vld [vmem:[%s347 + $0x61] sm:$0xff]
      %v1366 = vld [vmem:[%s347 + $0x69] sm:$0xff]
      %v1367 = vld [vmem:[%s347 + $0x71] sm:$0xff]
      %v1368 = vld [vmem:[%s347 + $0x79] sm:$0xff]
      %v1369 = vld [vmem:[%s347 + $0x81] sm:$0xff]
      %v1370 = vld [vmem:[%s347 + $0x89] sm:$0xff]
      %v1371 = vld [vmem:[%s347 + $0x91] sm:$0xff]
      %v1372 = vld [vmem:[%s347 + $0x99] sm:$0xff]
      %v1373 = vld [vmem:[%s347 + $0xa1] sm:$0xff]
      %v1374 = vld [vmem:[%s347 + $0xa9] sm:$0xff]
      %v1375 = vld [vmem:[%s347 + $0xb1] sm:$0xff]
      %v1376 = vld [vmem:[%s347 + $0xb9] sm:$0xff]
      %v1377 = vld [vmem:[%s347 + $0xc1] sm:$0xff]
      %v1378 = vld [vmem:[%s347 + $0xc9] sm:$0xff]
      %v1379 = vld [vmem:[%s347 + $0xd1] sm:$0xff]
      %v1380 = vld [vmem:[%s347 + $0xd9] sm:$0xff]
      %v1381 = vld [vmem:[%s347 + $0xe1] sm:$0xff]
      %v1382 = vld [vmem:[%s347 + $0xe9] sm:$0xff]
      %v1383 = vld [vmem:[%s347 + $0xf1] sm:$0xff]
      %1410 = vrot.lane.b32.xlu0 %v1358, 56
      %v1411 = vpop.permute.xlu0 %1410
      %1412 = vrot.lane.b32.xlu0 %v1359, 56
      %v1413 = vpop.permute.xlu0 %1412
      %1414 = vrot.lane.b32.xlu0 %v1360, 56
      %v1415 = vpop.permute.xlu0 %1414
      %1416 = vrot.lane.b32.xlu0 %v1361, 56
      %v1417 = vpop.permute.xlu0 %1416
      %1418 = vrot.lane.b32.xlu0 %v1362, 56
      %v1419 = vpop.permute.xlu0 %1418
      %1420 = vrot.lane.b32.xlu0 %v1363, 56
      %v1421 = vpop.permute.xlu0 %1420
      %1422 = vrot.lane.b32.xlu0 %v1364, 56
      %v1423 = vpop.permute.xlu0 %1422
      %1424 = vrot.lane.b32.xlu0 %v1365, 56
      %v1425 = vpop.permute.xlu0 %1424
      %1426 = vrot.lane.b32.xlu0 %v1366, 56
      %v1427 = vpop.permute.xlu0 %1426
      %1428 = vrot.lane.b32.xlu0 %v1367, 56
      %v1429 = vpop.permute.xlu0 %1428
      %1430 = vrot.lane.b32.xlu0 %v1368, 56
      %v1431 = vpop.permute.xlu0 %1430
      %1432 = vrot.lane.b32.xlu0 %v1369, 56
      %v1433 = vpop.permute.xlu0 %1432
      %1434 = vrot.lane.b32.xlu0 %v1370, 56
      %v1435 = vpop.permute.xlu0 %1434
      %1436 = vrot.lane.b32.xlu0 %v1371, 56
      %v1437 = vpop.permute.xlu0 %1436
      %1438 = vrot.lane.b32.xlu0 %v1372, 56
      %v1439 = vpop.permute.xlu0 %1438
      %1440 = vrot.lane.b32.xlu0 %v1373, 56
      %v1441 = vpop.permute.xlu0 %1440
      %1442 = vrot.lane.b32.xlu0 %v1374, 56
      %v1443 = vpop.permute.xlu0 %1442
      %1444 = vrot.lane.b32.xlu0 %v1375, 56
      %v1445 = vpop.permute.xlu0 %1444
      %1446 = vrot.lane.b32.xlu0 %v1376, 56
      %v1447 = vpop.permute.xlu0 %1446
      %1448 = vrot.lane.b32.xlu0 %v1377, 56
      %v1449 = vpop.permute.xlu0 %1448
      %1450 = vrot.lane.b32.xlu0 %v1378, 56
      %v1451 = vpop.permute.xlu0 %1450
      %1452 = vrot.lane.b32.xlu0 %v1379, 56
      %v1453 = vpop.permute.xlu0 %1452
      %1454 = vrot.lane.b32.xlu0 %v1380, 56
      %v1455 = vpop.permute.xlu0 %1454
      %1456 = vrot.lane.b32.xlu0 %v1381, 56
      %v1457 = vpop.permute.xlu0 %1456
      %1458 = vrot.lane.b32.xlu0 %v1382, 56
      %v1459 = vpop.permute.xlu0 %1458
      %1460 = vrot.lane.b32.xlu0 %v1383, 56
      %v1461 = vpop.permute.xlu0 %1460
      %vm1488 = vcmask 523712
      %1489 = vst.msk [vmem:[#allocation2] sm:$0xff] %vm1488, %v1411
      %1490 = vst.msk [vmem:[#allocation2 + $0x8] sm:$0xff] %vm1488, %v1413
      %1491 = vst.msk [vmem:[#allocation2 + $0x10] sm:$0xff] %vm1488, %v1415
      %1492 = vst.msk [vmem:[#allocation2 + $0x18] sm:$0xff] %vm1488, %v1417
      %1493 = vst.msk [vmem:[#allocation2 + $0x20] sm:$0xff] %vm1488, %v1419
      %1494 = vst.msk [vmem:[#allocation2 + $0x28] sm:$0xff] %vm1488, %v1421
      %1495 = vst.msk [vmem:[#allocation2 + $0x30] sm:$0xff] %vm1488, %v1423
      %1496 = vst.msk [vmem:[#allocation2 + $0x38] sm:$0xff] %vm1488, %v1425
      %1497 = vst.msk [vmem:[#allocation2 + $0x40] sm:$0xff] %vm1488, %v1427
      %1498 = vst.msk [vmem:[#allocation2 + $0x48] sm:$0xff] %vm1488, %v1429
      %1499 = vst.msk [vmem:[#allocation2 + $0x50] sm:$0xff] %vm1488, %v1431
      %1500 = vst.msk [vmem:[#allocation2 + $0x58] sm:$0xff] %vm1488, %v1433
      %1501 = vst.msk [vmem:[#allocation2 + $0x60] sm:$0xff] %vm1488, %v1435
      %1502 = vst.msk [vmem:[#allocation2 + $0x68] sm:$0xff] %vm1488, %v1437
      %1503 = vst.msk [vmem:[#allocation2 + $0x70] sm:$0xff] %vm1488, %v1439
      %1504 = vst.msk [vmem:[#allocation2 + $0x78] sm:$0xff] %vm1488, %v1441
      %1505 = vst.msk [vmem:[#allocation2 + $0x80] sm:$0xff] %vm1488, %v1443
      %1506 = vst.msk [vmem:[#allocation2 + $0x88] sm:$0xff] %vm1488, %v1445
      %1507 = vst.msk [vmem:[#allocation2 + $0x90] sm:$0xff] %vm1488, %v1447
      %1508 = vst.msk [vmem:[#allocation2 + $0x98] sm:$0xff] %vm1488, %v1449
      %1509 = vst.msk [vmem:[#allocation2 + $0xa0] sm:$0xff] %vm1488, %v1451
      %1510 = vst.msk [vmem:[#allocation2 + $0xa8] sm:$0xff] %vm1488, %v1453
      %1511 = vst.msk [vmem:[#allocation2 + $0xb0] sm:$0xff] %vm1488, %v1455
      %1512 = vst.msk [vmem:[#allocation2 + $0xb8] sm:$0xff] %vm1488, %v1457
      %1513 = vst.msk [vmem:[#allocation2 + $0xc0] sm:$0xff] %vm1488, %v1459
      %1514 = vst.msk [vmem:[#allocation2 + $0xc8] sm:$0xff] %vm1488, %v1461
      %v1515 = vld [vmem:[%s347 + $0x2a] sm:$0xff]
      %v1516 = vld [vmem:[%s347 + $0x32] sm:$0xff]
      %v1517 = vld [vmem:[%s347 + $0x3a] sm:$0xff]
      %v1518 = vld [vmem:[%s347 + $0x42] sm:$0xff]
      %v1519 = vld [vmem:[%s347 + $0x4a] sm:$0xff]
      %v1520 = vld [vmem:[%s347 + $0x52] sm:$0xff]
      %v1521 = vld [vmem:[%s347 + $0x5a] sm:$0xff]
      %v1522 = vld [vmem:[%s347 + $0x62] sm:$0xff]
      %v1523 = vld [vmem:[%s347 + $0x6a] sm:$0xff]
      %v1524 = vld [vmem:[%s347 + $0x72] sm:$0xff]
      %v1525 = vld [vmem:[%s347 + $0x7a] sm:$0xff]
      %v1526 = vld [vmem:[%s347 + $0x82] sm:$0xff]
      %v1527 = vld [vmem:[%s347 + $0x8a] sm:$0xff]
      %v1528 = vld [vmem:[%s347 + $0x92] sm:$0xff]
      %v1529 = vld [vmem:[%s347 + $0x9a] sm:$0xff]
      %v1530 = vld [vmem:[%s347 + $0xa2] sm:$0xff]
      %v1531 = vld [vmem:[%s347 + $0xaa] sm:$0xff]
      %v1532 = vld [vmem:[%s347 + $0xb2] sm:$0xff]
      %v1533 = vld [vmem:[%s347 + $0xba] sm:$0xff]
      %v1534 = vld [vmem:[%s347 + $0xc2] sm:$0xff]
      %v1535 = vld [vmem:[%s347 + $0xca] sm:$0xff]
      %v1536 = vld [vmem:[%s347 + $0xd2] sm:$0xff]
      %v1537 = vld [vmem:[%s347 + $0xda] sm:$0xff]
      %v1538 = vld [vmem:[%s347 + $0xe2] sm:$0xff]
      %v1539 = vld [vmem:[%s347 + $0xea] sm:$0xff]
      %v1540 = vld [vmem:[%s347 + $0xf2] sm:$0xff]
      %1567 = vrot.lane.b32.xlu0 %v1515, 64
      %v1568 = vpop.permute.xlu0 %1567
      %1569 = vrot.lane.b32.xlu0 %v1516, 64
      %v1570 = vpop.permute.xlu0 %1569
      %1571 = vrot.lane.b32.xlu0 %v1517, 64
      %v1572 = vpop.permute.xlu0 %1571
      %1573 = vrot.lane.b32.xlu0 %v1518, 64
      %v1574 = vpop.permute.xlu0 %1573
      %1575 = vrot.lane.b32.xlu0 %v1519, 64
      %v1576 = vpop.permute.xlu0 %1575
      %1577 = vrot.lane.b32.xlu0 %v1520, 64
      %v1578 = vpop.permute.xlu0 %1577
      %1579 = vrot.lane.b32.xlu0 %v1521, 64
      %v1580 = vpop.permute.xlu0 %1579
      %1581 = vrot.lane.b32.xlu0 %v1522, 64
      %v1582 = vpop.permute.xlu0 %1581
      %1583 = vrot.lane.b32.xlu0 %v1523, 64
      %v1584 = vpop.permute.xlu0 %1583
      %1585 = vrot.lane.b32.xlu0 %v1524, 64
      %v1586 = vpop.permute.xlu0 %1585
      %1587 = vrot.lane.b32.xlu0 %v1525, 64
      %v1588 = vpop.permute.xlu0 %1587
      %1589 = vrot.lane.b32.xlu0 %v1526, 64
      %v1590 = vpop.permute.xlu0 %1589
      %1591 = vrot.lane.b32.xlu0 %v1527, 64
      %v1592 = vpop.permute.xlu0 %1591
      %1593 = vrot.lane.b32.xlu0 %v1528, 64
      %v1594 = vpop.permute.xlu0 %1593
      %1595 = vrot.lane.b32.xlu0 %v1529, 64
      %v1596 = vpop.permute.xlu0 %1595
      %1597 = vrot.lane.b32.xlu0 %v1530, 64
      %v1598 = vpop.permute.xlu0 %1597
      %1599 = vrot.lane.b32.xlu0 %v1531, 64
      %v1600 = vpop.permute.xlu0 %1599
      %1601 = vrot.lane.b32.xlu0 %v1532, 64
      %v1602 = vpop.permute.xlu0 %1601
      %1603 = vrot.lane.b32.xlu0 %v1533, 64
      %v1604 = vpop.permute.xlu0 %1603
      %1605 = vrot.lane.b32.xlu0 %v1534, 64
      %v1606 = vpop.permute.xlu0 %1605
      %1607 = vrot.lane.b32.xlu0 %v1535, 64
      %v1608 = vpop.permute.xlu0 %1607
      %1609 = vrot.lane.b32.xlu0 %v1536, 64
      %v1610 = vpop.permute.xlu0 %1609
      %1611 = vrot.lane.b32.xlu0 %v1537, 64
      %v1612 = vpop.permute.xlu0 %1611
      %1613 = vrot.lane.b32.xlu0 %v1538, 64
      %v1614 = vpop.permute.xlu0 %1613
      %1615 = vrot.lane.b32.xlu0 %v1539, 64
      %v1616 = vpop.permute.xlu0 %1615
      %1617 = vrot.lane.b32.xlu0 %v1540, 64
      %v1618 = vpop.permute.xlu0 %1617
      %vm1645 = vcmask 589312
      %1646 = vst.msk [vmem:[#allocation2] sm:$0xff] %vm1645, %v1568
      %1647 = vst.msk [vmem:[#allocation2 + $0x8] sm:$0xff] %vm1645, %v1570
      %1648 = vst.msk [vmem:[#allocation2 + $0x10] sm:$0xff] %vm1645, %v1572
      %1649 = vst.msk [vmem:[#allocation2 + $0x18] sm:$0xff] %vm1645, %v1574
      %1650 = vst.msk [vmem:[#allocation2 + $0x20] sm:$0xff] %vm1645, %v1576
      %1651 = vst.msk [vmem:[#allocation2 + $0x28] sm:$0xff] %vm1645, %v1578
      %1652 = vst.msk [vmem:[#allocation2 + $0x30] sm:$0xff] %vm1645, %v1580
      %1653 = vst.msk [vmem:[#allocation2 + $0x38] sm:$0xff] %vm1645, %v1582
      %1654 = vst.msk [vmem:[#allocation2 + $0x40] sm:$0xff] %vm1645, %v1584
      %1655 = vst.msk [vmem:[#allocation2 + $0x48] sm:$0xff] %vm1645, %v1586
      %1656 = vst.msk [vmem:[#allocation2 + $0x50] sm:$0xff] %vm1645, %v1588
      %1657 = vst.msk [vmem:[#allocation2 + $0x58] sm:$0xff] %vm1645, %v1590
      %1658 = vst.msk [vmem:[#allocation2 + $0x60] sm:$0xff] %vm1645, %v1592
      %1659 = vst.msk [vmem:[#allocation2 + $0x68] sm:$0xff] %vm1645, %v1594
      %1660 = vst.msk [vmem:[#allocation2 + $0x70] sm:$0xff] %vm1645, %v1596
      %1661 = vst.msk [vmem:[#allocation2 + $0x78] sm:$0xff] %vm1645, %v1598
      %1662 = vst.msk [vmem:[#allocation2 + $0x80] sm:$0xff] %vm1645, %v1600
      %1663 = vst.msk [vmem:[#allocation2 + $0x88] sm:$0xff] %vm1645, %v1602
      %1664 = vst.msk [vmem:[#allocation2 + $0x90] sm:$0xff] %vm1645, %v1604
      %1665 = vst.msk [vmem:[#allocation2 + $0x98] sm:$0xff] %vm1645, %v1606
      %1666 = vst.msk [vmem:[#allocation2 + $0xa0] sm:$0xff] %vm1645, %v1608
      %1667 = vst.msk [vmem:[#allocation2 + $0xa8] sm:$0xff] %vm1645, %v1610
      %1668 = vst.msk [vmem:[#allocation2 + $0xb0] sm:$0xff] %vm1645, %v1612
      %1669 = vst.msk [vmem:[#allocation2 + $0xb8] sm:$0xff] %vm1645, %v1614
      %1670 = vst.msk [vmem:[#allocation2 + $0xc0] sm:$0xff] %vm1645, %v1616
      %1671 = vst.msk [vmem:[#allocation2 + $0xc8] sm:$0xff] %vm1645, %v1618
      %v1672 = vld [vmem:[#allocation2] sm:$0xff]
      %v1673 = vld [vmem:[#allocation2 + $0x8] sm:$0xff]
      %v1674 = vld [vmem:[#allocation2 + $0x10] sm:$0xff]
      %v1675 = vld [vmem:[#allocation2 + $0x18] sm:$0xff]
      %v1676 = vld [vmem:[#allocation2 + $0x20] sm:$0xff]
      %v1677 = vld [vmem:[#allocation2 + $0x28] sm:$0xff]
      %v1678 = vld [vmem:[#allocation2 + $0x30] sm:$0xff]
      %v1679 = vld [vmem:[#allocation2 + $0x38] sm:$0xff]
      %v1680 = vld [vmem:[#allocation2 + $0x40] sm:$0xff]
      %v1681 = vld [vmem:[#allocation2 + $0x48] sm:$0xff]
      %v1682 = vld [vmem:[#allocation2 + $0x50] sm:$0xff]
      %v1683 = vld [vmem:[#allocation2 + $0x58] sm:$0xff]
      %v1684 = vld [vmem:[#allocation2 + $0x60] sm:$0xff]
      %v1685 = vld [vmem:[#allocation2 + $0x68] sm:$0xff]
      %v1686 = vld [vmem:[#allocation2 + $0x70] sm:$0xff]
      %v1687 = vld [vmem:[#allocation2 + $0x78] sm:$0xff]
      %v1688 = vld [vmem:[#allocation2 + $0x80] sm:$0xff]
      %v1689 = vld [vmem:[#allocation2 + $0x88] sm:$0xff]
      %v1690 = vld [vmem:[#allocation2 + $0x90] sm:$0xff]
      %v1691 = vld [vmem:[#allocation2 + $0x98] sm:$0xff]
      %v1692 = vld [vmem:[#allocation2 + $0xa0] sm:$0xff]
      %v1693 = vld [vmem:[#allocation2 + $0xa8] sm:$0xff]
      %v1694 = vld [vmem:[#allocation2 + $0xb0] sm:$0xff]
      %v1695 = vld [vmem:[#allocation2 + $0xb8] sm:$0xff]
      %v1696 = vld [vmem:[#allocation2 + $0xc0] sm:$0xff]
      %v1697 = vld [vmem:[#allocation2 + $0xc8] sm:$0xff]
      %v1698 = vpack.c.bf16 %v1673, %v1672
      %v1699 = vpack.c.bf16 %v1675, %v1674
      %v1700 = vpack.c.bf16 %v1677, %v1676
      %v1701 = vpack.c.bf16 %v1679, %v1678
      %v1702 = vpack.c.bf16 %v1681, %v1680
      %v1703 = vpack.c.bf16 %v1683, %v1682
      %v1704 = vpack.c.bf16 %v1685, %v1684
      %v1705 = vpack.c.bf16 %v1687, %v1686
      %v1706 = vpack.c.bf16 %v1689, %v1688
      %v1707 = vpack.c.bf16 %v1691, %v1690
      %v1708 = vpack.c.bf16 %v1693, %v1692
      %v1709 = vpack.c.bf16 %v1695, %v1694
      %v1710 = vpack.c.bf16 %v1697, %v1696
      %v1711 = vld [vmem:[%s2] sm:$0xf]
      %v1712 = vld [vmem:[%s2 + $0x4] sm:$0xf]
      %v1713 = vld [vmem:[%s2 + $0x8] sm:$0xf]
      %v1714 = vld [vmem:[%s2 + $0xc] sm:$0xf]
      %v1715 = vld [vmem:[%s2 + $0x10] sm:$0xf]
      %v1716 = vld [vmem:[%s2 + $0x14] sm:$0xf]
      %v1717 = vld [vmem:[%s2 + $0x18] sm:$0xf]
      %v1718 = vld [vmem:[%s2 + $0x1c] sm:$0xf]
      %v1719 = vld [vmem:[%s2 + $0x20] sm:$0xf]
      %v1729 = vunpack.c.l.b16 %v1711
      %v1730 = vunpack.c.l.b16 %v1712
      %v1731 = vunpack.c.l.b16 %v1713
      %v1732 = vunpack.c.l.b16 %v1714
      %v1733 = vunpack.c.l.b16 %v1715
      %v1734 = vunpack.c.l.b16 %v1716
      %v1735 = vunpack.c.l.b16 %v1717
      %v1736 = vunpack.c.l.b16 %v1718
      %v1737 = vunpack.c.l.b16 %v1719
      %v1738 = vpack.c.b16 %v1730, %v1729
      %v1739 = vpack.c.b16 %v1732, %v1731
      %v1740 = vpack.c.b16 %v1734, %v1733
      %v1741 = vpack.c.b16 %v1736, %v1735
      %v1742 = vpack.c.b16 %v1737, %v1737
      %vm1747 = vcmask 588800
      %v1749 = vsel %vm1747, %v1698, 0
      %v1752 = vsel %vm1747, %v1699, 0
      %v1755 = vsel %vm1747, %v1700, 0
      %v1758 = vsel %vm1747, %v1701, 0
      %v1761 = vsel %vm1747, %v1702, 0
      %v1764 = vsel %vm1747, %v1703, 0
      %v1767 = vsel %vm1747, %v1704, 0
      %v1770 = vsel %vm1747, %v1705, 0
      %v1773 = vsel %vm1747, %v1706, 0
      %v1776 = vsel %vm1747, %v1707, 0
      %v1779 = vsel %vm1747, %v1708, 0
      %v1782 = vsel %vm1747, %v1709, 0
      %v1785 = vsel %vm1747, %v1710, 0
      %vm1787 = vcmask 1043456
      %v1789 = vsel %vm1787, %v1742, 0
      %1791 = vmatprep.subr.bf16.mxu0 0
      %1792 = vmatpush1.bf16.msra.mxu0 %v1738
      %1793 = vmatprep.subr.bf16.mxu0 0
      %1794 = vmatpush1.bf16.msra.mxu0 %v1739
      %1795 = vmatprep.subr.bf16.mxu0 0
      %1796 = vmatpush1.bf16.msra.mxu0 %v1740
      %1797 = vmatprep.subr.bf16.mxu0 0
      %1798 = vmatpush1.bf16.msra.mxu0 %v1741
      %1799 = vmatprep.subr.bf16.mxu0 0
      %1800 = vmatpush1.bf16.msra.mxu0 %v1789
      %1801 = vmatprep.subr.bf16.mxu0 0
      %1802 = vmatpush1.bf16.msra.mxu0 0
      %1803 = vmatprep.subr.bf16.mxu0 0
      %1804 = vmatpush1.bf16.msra.mxu0 0
      %1805 = vmatprep.subr.bf16.mxu0 0
      %1806 = vmatpush1.bf16.msra.mxu0 0
      %1807 = vmatprep.subr.bf16.mxu0 0
      %1808 = vmatpush1.bf16.msra.mxu0 0
      %1809 = vmatprep.subr.bf16.mxu0 0
      %1810 = vmatpush1.bf16.msra.mxu0 0
      %1811 = vmatprep.subr.bf16.mxu0 0
      %1812 = vmatpush1.bf16.msra.mxu0 0
      %1813 = vmatprep.subr.bf16.mxu0 0
      %1814 = vmatpush1.bf16.msra.mxu0 0
      %1815 = vmatprep.subr.bf16.mxu0 0
      %1816 = vmatpush1.bf16.msra.mxu0 0
      %1817 = vmatprep.subr.bf16.mxu0 0
      %1818 = vmatpush1.bf16.msra.mxu0 0
      %1819 = vmatprep.subr.bf16.mxu0 0
      %1820 = vmatpush1.bf16.msra.mxu0 0
      %1821 = vmatprep.subr.bf16.mxu0 0
      %1822 = vmatpush1.bf16.msra.mxu0 0
      %1823 = vmatprep.mubr.bf16.mxu0 0
      %1824 = vmatmul.mubr.bf16.gmra.mrb[0].mxu0 %v1749
      %v1825 = vpop.f32.mrb[0].mxu0
      %v1826 = vadd.f32 0.0, %v1825
      %v1827 = vpop.f32.mrb[0].mxu0
      %v1828 = vpop.f32.mrb[0].mxu0
      %v1829 = vadd.f32 0.0, %v1828
      %v1830 = vpop.f32.mrb[0].mxu0
      %1831 = vmatprep.mubr.bf16.mxu0 0
      %1832 = vmatmul.mubr.bf16.gmra.mrb[0].mxu0 %v1752
      %v1833 = vpop.f32.mrb[0].mxu0
      %v1834 = vadd.f32 0.0, %v1833
      %v1835 = vpop.f32.mrb[0].mxu0
      %v1836 = vpop.f32.mrb[0].mxu0
      %v1837 = vadd.f32 0.0, %v1836
      %v1838 = vpop.f32.mrb[0].mxu0
      %1839 = vmatprep.mubr.bf16.mxu0 0
      %1840 = vmatmul.mubr.bf16.gmra.mrb[0].mxu0 %v1755
      %v1841 = vpop.f32.mrb[0].mxu0
      %v1842 = vadd.f32 0.0, %v1841
      %v1843 = vpop.f32.mrb[0].mxu0
      %v1844 = vpop.f32.mrb[0].mxu0
      %v1845 = vadd.f32 0.0, %v1844
      %v1846 = vpop.f32.mrb[0].mxu0
      %1847 = vmatprep.mubr.bf16.mxu0 0
      %1848 = vmatmul.mubr.bf16.gmra.mrb[0].mxu0 %v1758
      %v1849 = vpop.f32.mrb[0].mxu0
      %v1850 = vadd.f32 0.0, %v1849
      %v1851 = vpop.f32.mrb[0].mxu0
      %v1852 = vpop.f32.mrb[0].mxu0
      %v1853 = vadd.f32 0.0, %v1852
      %v1854 = vpop.f32.mrb[0].mxu0
      %1855 = vmatprep.mubr.bf16.mxu0 0
      %1856 = vmatmul.mubr.bf16.gmra.mrb[0].mxu0 %v1761
      %v1857 = vpop.f32.mrb[0].mxu0
      %v1858 = vadd.f32 0.0, %v1857
      %v1859 = vpop.f32.mrb[0].mxu0
      %v1860 = vpop.f32.mrb[0].mxu0
      %v1861 = vadd.f32 0.0, %v1860
      %v1862 = vpop.f32.mrb[0].mxu0
      %1863 = vmatprep.mubr.bf16.mxu0 0
      %1864 = vmatmul.mubr.bf16.gmra.mrb[0].mxu0 %v1764
      %v1865 = vpop.f32.mrb[0].mxu0
      %v1866 = vadd.f32 0.0, %v1865
      %v1867 = vpop.f32.mrb[0].mxu0
      %v1868 = vpop.f32.mrb[0].mxu0
      %v1869 = vadd.f32 0.0, %v1868
      %v1870 = vpop.f32.mrb[0].mxu0
      %1871 = vmatprep.mubr.bf16.mxu0 0
      %1872 = vmatmul.mubr.bf16.gmra.mrb[0].mxu0 %v1767
      %v1873 = vpop.f32.mrb[0].mxu0
      %v1874 = vadd.f32 0.0, %v1873
      %v1875 = vpop.f32.mrb[0].mxu0
      %v1876 = vpop.f32.mrb[0].mxu0
      %v1877 = vadd.f32 0.0, %v1876
      %v1878 = vpop.f32.mrb[0].mxu0
      %1879 = vmatprep.mubr.bf16.mxu0 0
      %1880 = vmatmul.mubr.bf16.gmra.mrb[0].mxu0 %v1770
      %v1881 = vpop.f32.mrb[0].mxu0
      %v1882 = vadd.f32 0.0, %v1881
      %v1883 = vpop.f32.mrb[0].mxu0
      %v1884 = vpop.f32.mrb[0].mxu0
      %v1885 = vadd.f32 0.0, %v1884
      %v1886 = vpop.f32.mrb[0].mxu0
      %1887 = vmatprep.mubr.bf16.mxu0 0
      %1888 = vmatmul.mubr.bf16.gmra.mrb[0].mxu0 %v1773
      %v1889 = vpop.f32.mrb[0].mxu0
      %v1890 = vadd.f32 0.0, %v1889
      %v1891 = vpop.f32.mrb[0].mxu0
      %v1892 = vpop.f32.mrb[0].mxu0
      %v1893 = vadd.f32 0.0, %v1892
      %v1894 = vpop.f32.mrb[0].mxu0
      %1895 = vmatprep.mubr.bf16.mxu0 0
      %1896 = vmatmul.mubr.bf16.gmra.mrb[0].mxu0 %v1776
      %v1897 = vpop.f32.mrb[0].mxu0
      %v1898 = vadd.f32 0.0, %v1897
      %v1899 = vpop.f32.mrb[0].mxu0
      %v1900 = vpop.f32.mrb[0].mxu0
      %v1901 = vadd.f32 0.0, %v1900
      %v1902 = vpop.f32.mrb[0].mxu0
      %1903 = vmatprep.mubr.bf16.mxu0 0
      %1904 = vmatmul.mubr.bf16.gmra.mrb[0].mxu0 %v1779
      %v1905 = vpop.f32.mrb[0].mxu0
      %v1906 = vadd.f32 0.0, %v1905
      %v1907 = vpop.f32.mrb[0].mxu0
      %v1908 = vpop.f32.mrb[0].mxu0
      %v1909 = vadd.f32 0.0, %v1908
      %v1910 = vpop.f32.mrb[0].mxu0
      %1911 = vmatprep.mubr.bf16.mxu0 0
      %1912 = vmatmul.mubr.bf16.gmra.mrb[0].mxu0 %v1782
      %v1913 = vpop.f32.mrb[0].mxu0
      %v1914 = vadd.f32 0.0, %v1913
      %v1915 = vpop.f32.mrb[0].mxu0
      %v1916 = vpop.f32.mrb[0].mxu0
      %v1917 = vadd.f32 0.0, %v1916
      %v1918 = vpop.f32.mrb[0].mxu0
      %1919 = vmatprep.mubr.bf16.mxu0 0
      %1920 = vmatmul.mubr.bf16.gmra.mrb[0].mxu0 %v1785
      %v1921 = vpop.f32.mrb[0].mxu0
      %v1922 = vadd.f32 0.0, %v1921
      %v1923 = vpop.f32.mrb[0].mxu0
      %v1924 = vpop.f32.mrb[0].mxu0
      %v1925 = vadd.f32 0.0, %v1924
      %v1926 = vpop.f32.mrb[0].mxu0
      %1927 = vdwg.mxu0
      %v1928 = vld [vmem:[%s3] sm:$0x1]
      %v1930 = vlaneseq
      %v1931 = vshrl.u32 %v1930, 7
      %v1932 = vsub.s32 0, %v1931
      %v1933 = vrot.slane %v1928, %v1932
      %v1935 = vmul.f32 %v1826, %v1933
      %v1936 = vmul.f32 %v1829, %v1933
      %v1937 = vmul.f32 %v1834, %v1933
      %v1938 = vmul.f32 %v1837, %v1933
      %v1939 = vmul.f32 %v1842, %v1933
      %v1940 = vmul.f32 %v1845, %v1933
      %v1941 = vmul.f32 %v1850, %v1933
      %v1942 = vmul.f32 %v1853, %v1933
      %v1943 = vmul.f32 %v1858, %v1933
      %v1944 = vmul.f32 %v1861, %v1933
      %v1945 = vmul.f32 %v1866, %v1933
      %v1946 = vmul.f32 %v1869, %v1933
      %v1947 = vmul.f32 %v1874, %v1933
      %v1948 = vmul.f32 %v1877, %v1933
      %v1949 = vmul.f32 %v1882, %v1933
      %v1950 = vmul.f32 %v1885, %v1933
      %v1951 = vmul.f32 %v1890, %v1933
      %v1952 = vmul.f32 %v1893, %v1933
      %v1953 = vmul.f32 %v1898, %v1933
      %v1954 = vmul.f32 %v1901, %v1933
      %v1955 = vmul.f32 %v1906, %v1933
      %v1956 = vmul.f32 %v1909, %v1933
      %v1957 = vmul.f32 %v1914, %v1933
      %v1958 = vmul.f32 %v1917, %v1933
      %v1959 = vmul.f32 %v1922, %v1933
      %v1960 = vmul.f32 %v1925, %v1933
      %v1961 = vld [vmem:[%s4] sm:$0x1]
      %v1963 = vlaneseq
      %v1964 = vshrl.u32 %v1963, 7
      %v1965 = vsub.s32 0, %v1964
      %v1966 = vrot.slane %v1961, %v1965
      %v1968 = vadd.f32 %v1935, %v1966
      %v1969 = vadd.f32 %v1936, %v1966
      %v1970 = vadd.f32 %v1937, %v1966
      %v1971 = vadd.f32 %v1938, %v1966
      %v1972 = vadd.f32 %v1939, %v1966
      %v1973 = vadd.f32 %v1940, %v1966
      %v1974 = vadd.f32 %v1941, %v1966
      %v1975 = vadd.f32 %v1942, %v1966
      %v1976 = vadd.f32 %v1943, %v1966
      %v1977 = vadd.f32 %v1944, %v1966
      %v1978 = vadd.f32 %v1945, %v1966
      %v1979 = vadd.f32 %v1946, %v1966
      %v1980 = vadd.f32 %v1947, %v1966
      %v1981 = vadd.f32 %v1948, %v1966
      %v1982 = vadd.f32 %v1949, %v1966
      %v1983 = vadd.f32 %v1950, %v1966
      %v1984 = vadd.f32 %v1951, %v1966
      %v1985 = vadd.f32 %v1952, %v1966
      %v1986 = vadd.f32 %v1953, %v1966
      %v1987 = vadd.f32 %v1954, %v1966
      %v1988 = vadd.f32 %v1955, %v1966
      %v1989 = vadd.f32 %v1956, %v1966
      %v1990 = vadd.f32 %v1957, %v1966
      %v1991 = vadd.f32 %v1958, %v1966
      %v1992 = vadd.f32 %v1959, %v1966
      %v1993 = vadd.f32 %v1960, %v1966
      %v1994 = vmax.f32 %v1968, 0.0
      %v1995 = vmax.f32 %v1969, 0.0
      %v1996 = vmax.f32 %v1970, 0.0
      %v1997 = vmax.f32 %v1971, 0.0
      %v1998 = vmax.f32 %v1972, 0.0
      %v1999 = vmax.f32 %v1973, 0.0
      %v2000 = vmax.f32 %v1974, 0.0
      %v2001 = vmax.f32 %v1975, 0.0
      %v2002 = vmax.f32 %v1976, 0.0
      %v2003 = vmax.f32 %v1977, 0.0
      %v2004 = vmax.f32 %v1978, 0.0
      %v2005 = vmax.f32 %v1979, 0.0
      %v2006 = vmax.f32 %v1980, 0.0
      %v2007 = vmax.f32 %v1981, 0.0
      %v2008 = vmax.f32 %v1982, 0.0
      %v2009 = vmax.f32 %v1983, 0.0
      %v2010 = vmax.f32 %v1984, 0.0
      %v2011 = vmax.f32 %v1985, 0.0
      %v2012 = vmax.f32 %v1986, 0.0
      %v2013 = vmax.f32 %v1987, 0.0
      %v2014 = vmax.f32 %v1988, 0.0
      %v2015 = vmax.f32 %v1989, 0.0
      %v2016 = vmax.f32 %v1990, 0.0
      %v2017 = vmax.f32 %v1991, 0.0
      %v2018 = vmax.f32 %v1992, 0.0
      %v2019 = vmax.f32 %v1993, 0.0
      %v2020 = vld [vmem:[%s352] sm:$0xff]
      %v2021 = vld [vmem:[%s352 + $0x8] sm:$0xff]
      %v2022 = vld [vmem:[%s352 + $0x10] sm:$0xff]
      %v2023 = vld [vmem:[%s352 + $0x18] sm:$0xff]
      %v2024 = vld [vmem:[%s352 + $0x20] sm:$0xff]
      %v2025 = vld [vmem:[%s352 + $0x28] sm:$0xff]
      %v2026 = vld [vmem:[%s352 + $0x30] sm:$0xff]
      %v2027 = vld [vmem:[%s352 + $0x38] sm:$0xff]
      %v2028 = vld [vmem:[%s352 + $0x40] sm:$0xff]
      %v2029 = vld [vmem:[%s352 + $0x48] sm:$0xff]
      %v2030 = vld [vmem:[%s352 + $0x50] sm:$0xff]
      %v2031 = vld [vmem:[%s352 + $0x58] sm:$0xff]
      %v2032 = vld [vmem:[%s352 + $0x60] sm:$0xff]
      %v2033 = vld [vmem:[%s352 + $0x68] sm:$0xff]
      %v2034 = vld [vmem:[%s352 + $0x70] sm:$0xff]
      %v2035 = vld [vmem:[%s352 + $0x78] sm:$0xff]
      %v2036 = vld [vmem:[%s352 + $0x80] sm:$0xff]
      %v2037 = vld [vmem:[%s352 + $0x88] sm:$0xff]
      %v2038 = vld [vmem:[%s352 + $0x90] sm:$0xff]
      %v2039 = vld [vmem:[%s352 + $0x98] sm:$0xff]
      %v2040 = vld [vmem:[%s352 + $0xa0] sm:$0xff]
      %v2041 = vld [vmem:[%s352 + $0xa8] sm:$0xff]
      %v2042 = vld [vmem:[%s352 + $0xb0] sm:$0xff]
      %v2043 = vld [vmem:[%s352 + $0xb8] sm:$0xff]
      %v2044 = vld [vmem:[%s352 + $0xc0] sm:$0xff]
      %v2045 = vld [vmem:[%s352 + $0xc8] sm:$0xff]
      %2047 = vset.pattern.permute.xlu0 0
      %2048 = vperm.xlu0 %2047, %v2020
      %v2049 = vpop.permute.xlu0 %2048
      %2052 = vset.pattern.permute.xlu0 0
      %2053 = vperm.xlu0 %2052, %v2021
      %v2054 = vpop.permute.xlu0 %2053
      %2057 = vset.pattern.permute.xlu0 0
      %2058 = vperm.xlu0 %2057, %v2022
      %v2059 = vpop.permute.xlu0 %2058
      %2062 = vset.pattern.permute.xlu0 0
      %2063 = vperm.xlu0 %2062, %v2023
      %v2064 = vpop.permute.xlu0 %2063
      %2067 = vset.pattern.permute.xlu0 0
      %2068 = vperm.xlu0 %2067, %v2024
      %v2069 = vpop.permute.xlu0 %2068
      %2072 = vset.pattern.permute.xlu0 0
      %2073 = vperm.xlu0 %2072, %v2025
      %v2074 = vpop.permute.xlu0 %2073
      %2077 = vset.pattern.permute.xlu0 0
      %2078 = vperm.xlu0 %2077, %v2026
      %v2079 = vpop.permute.xlu0 %2078
      %2082 = vset.pattern.permute.xlu0 0
      %2083 = vperm.xlu0 %2082, %v2027
      %v2084 = vpop.permute.xlu0 %2083
      %2087 = vset.pattern.permute.xlu0 0
      %2088 = vperm.xlu0 %2087, %v2028
      %v2089 = vpop.permute.xlu0 %2088
      %2092 = vset.pattern.permute.xlu0 0
      %2093 = vperm.xlu0 %2092, %v2029
      %v2094 = vpop.permute.xlu0 %2093
      %2097 = vset.pattern.permute.xlu0 0
      %2098 = vperm.xlu0 %2097, %v2030
      %v2099 = vpop.permute.xlu0 %2098
      %2102 = vset.pattern.permute.xlu0 0
      %2103 = vperm.xlu0 %2102, %v2031
      %v2104 = vpop.permute.xlu0 %2103
      %2107 = vset.pattern.permute.xlu0 0
      %2108 = vperm.xlu0 %2107, %v2032
      %v2109 = vpop.permute.xlu0 %2108
      %2112 = vset.pattern.permute.xlu0 0
      %2113 = vperm.xlu0 %2112, %v2033
      %v2114 = vpop.permute.xlu0 %2113
      %2117 = vset.pattern.permute.xlu0 0
      %2118 = vperm.xlu0 %2117, %v2034
      %v2119 = vpop.permute.xlu0 %2118
      %2122 = vset.pattern.permute.xlu0 0
      %2123 = vperm.xlu0 %2122, %v2035
      %v2124 = vpop.permute.xlu0 %2123
      %2127 = vset.pattern.permute.xlu0 0
      %2128 = vperm.xlu0 %2127, %v2036
      %v2129 = vpop.permute.xlu0 %2128
      %2132 = vset.pattern.permute.xlu0 0
      %2133 = vperm.xlu0 %2132, %v2037
      %v2134 = vpop.permute.xlu0 %2133
      %2137 = vset.pattern.permute.xlu0 0
      %2138 = vperm.xlu0 %2137, %v2038
      %v2139 = vpop.permute.xlu0 %2138
      %2142 = vset.pattern.permute.xlu0 0
      %2143 = vperm.xlu0 %2142, %v2039
      %v2144 = vpop.permute.xlu0 %2143
      %2147 = vset.pattern.permute.xlu0 0
      %2148 = vperm.xlu0 %2147, %v2040
      %v2149 = vpop.permute.xlu0 %2148
      %2152 = vset.pattern.permute.xlu0 0
      %2153 = vperm.xlu0 %2152, %v2041
      %v2154 = vpop.permute.xlu0 %2153
      %2157 = vset.pattern.permute.xlu0 0
      %2158 = vperm.xlu0 %2157, %v2042
      %v2159 = vpop.permute.xlu0 %2158
      %2162 = vset.pattern.permute.xlu0 0
      %2163 = vperm.xlu0 %2162, %v2043
      %v2164 = vpop.permute.xlu0 %2163
      %2167 = vset.pattern.permute.xlu0 0
      %2168 = vperm.xlu0 %2167, %v2044
      %v2169 = vpop.permute.xlu0 %2168
      %2172 = vset.pattern.permute.xlu0 0
      %2173 = vperm.xlu0 %2172, %v2045
      %v2174 = vpop.permute.xlu0 %2173
      %v2176 = vmul.f32 %v1994, %v2049
      %v2177 = vmul.f32 %v1995, %v2054
      %v2178 = vmul.f32 %v1996, %v2059
      %v2179 = vmul.f32 %v1997, %v2064
      %v2180 = vmul.f32 %v1998, %v2069
      %v2181 = vmul.f32 %v1999, %v2074
      %v2182 = vmul.f32 %v2000, %v2079
      %v2183 = vmul.f32 %v2001, %v2084
      %v2184 = vmul.f32 %v2002, %v2089
      %v2185 = vmul.f32 %v2003, %v2094
      %v2186 = vmul.f32 %v2004, %v2099
      %v2187 = vmul.f32 %v2005, %v2104
      %v2188 = vmul.f32 %v2006, %v2109
      %v2189 = vmul.f32 %v2007, %v2114
      %v2190 = vmul.f32 %v2008, %v2119
      %v2191 = vmul.f32 %v2009, %v2124
      %v2192 = vmul.f32 %v2010, %v2129
      %v2193 = vmul.f32 %v2011, %v2134
      %v2194 = vmul.f32 %v2012, %v2139
      %v2195 = vmul.f32 %v2013, %v2144
      %v2196 = vmul.f32 %v2014, %v2149
      %v2197 = vmul.f32 %v2015, %v2154
      %v2198 = vmul.f32 %v2016, %v2159
      %v2199 = vmul.f32 %v2017, %v2164
      %v2200 = vmul.f32 %v2018, %v2169
      %v2201 = vmul.f32 %v2019, %v2174
      %2202 = vst.msk [vmem:[#allocation3] sm:$0xff] %vm389, %v2176
      %2203 = vst.msk [vmem:[#allocation3 + $0x8] sm:$0xff] %vm389, %v2177
      %2204 = vst.msk [vmem:[#allocation3 + $0x10] sm:$0xff] %vm389, %v2178
      %2205 = vst.msk [vmem:[#allocation3 + $0x18] sm:$0xff] %vm389, %v2179
      %2206 = vst.msk [vmem:[#allocation3 + $0x20] sm:$0xff] %vm389, %v2180
      %2207 = vst.msk [vmem:[#allocation3 + $0x28] sm:$0xff] %vm389, %v2181
      %2208 = vst.msk [vmem:[#allocation3 + $0x30] sm:$0xff] %vm389, %v2182
      %2209 = vst.msk [vmem:[#allocation3 + $0x38] sm:$0xff] %vm389, %v2183
      %2210 = vst.msk [vmem:[#allocation3 + $0x40] sm:$0xff] %vm389, %v2184
      %2211 = vst.msk [vmem:[#allocation3 + $0x48] sm:$0xff] %vm389, %v2185
      %2212 = vst.msk [vmem:[#allocation3 + $0x50] sm:$0xff] %vm389, %v2186
      %2213 = vst.msk [vmem:[#allocation3 + $0x58] sm:$0xff] %vm389, %v2187
      %2214 = vst.msk [vmem:[#allocation3 + $0x60] sm:$0xff] %vm389, %v2188
      %2215 = vst.msk [vmem:[#allocation3 + $0x68] sm:$0xff] %vm389, %v2189
      %2216 = vst.msk [vmem:[#allocation3 + $0x70] sm:$0xff] %vm389, %v2190
      %2217 = vst.msk [vmem:[#allocation3 + $0x78] sm:$0xff] %vm389, %v2191
      %2218 = vst.msk [vmem:[#allocation3 + $0x80] sm:$0xff] %vm389, %v2192
      %2219 = vst.msk [vmem:[#allocation3 + $0x88] sm:$0xff] %vm389, %v2193
      %2220 = vst.msk [vmem:[#allocation3 + $0x90] sm:$0xff] %vm389, %v2194
      %2221 = vst.msk [vmem:[#allocation3 + $0x98] sm:$0xff] %vm389, %v2195
      %2222 = vst.msk [vmem:[#allocation3 + $0xa0] sm:$0xff] %vm389, %v2196
      %2223 = vst.msk [vmem:[#allocation3 + $0xa8] sm:$0xff] %vm389, %v2197
      %2224 = vst.msk [vmem:[#allocation3 + $0xb0] sm:$0xff] %vm389, %v2198
      %2225 = vst.msk [vmem:[#allocation3 + $0xb8] sm:$0xff] %vm389, %v2199
      %2226 = vst.msk [vmem:[#allocation3 + $0xc0] sm:$0xff] %vm389, %v2200
      %2227 = vst.msk [vmem:[#allocation3 + $0xc8] sm:$0xff] %vm389, %v2201
      %v2228 = vld [vmem:[#allocation3] sm:$0xff]
      %v2229 = vld [vmem:[#allocation3 + $0x8] sm:$0xff]
      %v2230 = vld [vmem:[#allocation3 + $0x10] sm:$0xff]
      %v2231 = vld [vmem:[#allocation3 + $0x18] sm:$0xff]
      %v2232 = vld [vmem:[#allocation3 + $0x20] sm:$0xff]
      %v2233 = vld [vmem:[#allocation3 + $0x28] sm:$0xff]
      %v2234 = vld [vmem:[#allocation3 + $0x30] sm:$0xff]
      %v2235 = vld [vmem:[#allocation3 + $0x38] sm:$0xff]
      %v2236 = vld [vmem:[#allocation3 + $0x40] sm:$0xff]
      %v2237 = vld [vmem:[#allocation3 + $0x48] sm:$0xff]
      %v2238 = vld [vmem:[#allocation3 + $0x50] sm:$0xff]
      %v2239 = vld [vmem:[#allocation3 + $0x58] sm:$0xff]
      %v2240 = vld [vmem:[#allocation3 + $0x60] sm:$0xff]
      %v2241 = vld [vmem:[#allocation3 + $0x68] sm:$0xff]
      %v2242 = vld [vmem:[#allocation3 + $0x70] sm:$0xff]
      %v2243 = vld [vmem:[#allocation3 + $0x78] sm:$0xff]
      %v2244 = vld [vmem:[#allocation3 + $0x80] sm:$0xff]
      %v2245 = vld [vmem:[#allocation3 + $0x88] sm:$0xff]
      %v2246 = vld [vmem:[#allocation3 + $0x90] sm:$0xff]
      %v2247 = vld [vmem:[#allocation3 + $0x98] sm:$0xff]
      %2248 = vst.msk [vmem:[#allocation4] sm:$0xff] %vm389, %v2228
      %2249 = vst.msk [vmem:[#allocation4 + $0x8] sm:$0xff] %vm389, %v2229
      %2250 = vst.msk [vmem:[#allocation4 + $0x10] sm:$0xff] %vm389, %v2230
      %2251 = vst.msk [vmem:[#allocation4 + $0x18] sm:$0xff] %vm389, %v2231
      %2252 = vst.msk [vmem:[#allocation4 + $0x20] sm:$0xff] %vm389, %v2232
      %2253 = vst.msk [vmem:[#allocation4 + $0x28] sm:$0xff] %vm389, %v2233
      %2254 = vst.msk [vmem:[#allocation4 + $0x30] sm:$0xff] %vm389, %v2234
      %2255 = vst.msk [vmem:[#allocation4 + $0x38] sm:$0xff] %vm389, %v2235
      %2256 = vst.msk [vmem:[#allocation4 + $0x40] sm:$0xff] %vm389, %v2236
      %2257 = vst.msk [vmem:[#allocation4 + $0x48] sm:$0xff] %vm389, %v2237
      %2258 = vst.msk [vmem:[#allocation4 + $0x50] sm:$0xff] %vm389, %v2238
      %2259 = vst.msk [vmem:[#allocation4 + $0x58] sm:$0xff] %vm389, %v2239
      %2260 = vst.msk [vmem:[#allocation4 + $0x60] sm:$0xff] %vm389, %v2240
      %2261 = vst.msk [vmem:[#allocation4 + $0x68] sm:$0xff] %vm389, %v2241
      %2262 = vst.msk [vmem:[#allocation4 + $0x70] sm:$0xff] %vm389, %v2242
      %2263 = vst.msk [vmem:[#allocation4 + $0x78] sm:$0xff] %vm389, %v2243
      %2264 = vst.msk [vmem:[#allocation4 + $0x80] sm:$0xff] %vm389, %v2244
      %2265 = vst.msk [vmem:[#allocation4 + $0x88] sm:$0xff] %vm389, %v2245
      %2266 = vst.msk [vmem:[#allocation4 + $0x90] sm:$0xff] %vm389, %v2246
      %2267 = vst.msk [vmem:[#allocation4 + $0x98] sm:$0xff] %vm389, %v2247
      %v2268 = vld [vmem:[#allocation3 + $0x1] sm:$0xff]
      %v2269 = vld [vmem:[#allocation3 + $0x9] sm:$0xff]
      %v2270 = vld [vmem:[#allocation3 + $0x11] sm:$0xff]
      %v2271 = vld [vmem:[#allocation3 + $0x19] sm:$0xff]
      %v2272 = vld [vmem:[#allocation3 + $0x21] sm:$0xff]
      %v2273 = vld [vmem:[#allocation3 + $0x29] sm:$0xff]
      %v2274 = vld [vmem:[#allocation3 + $0x31] sm:$0xff]
      %v2275 = vld [vmem:[#allocation3 + $0x39] sm:$0xff]
      %v2276 = vld [vmem:[#allocation3 + $0x41] sm:$0xff]
      %v2277 = vld [vmem:[#allocation3 + $0x49] sm:$0xff]
      %v2278 = vld [vmem:[#allocation3 + $0x51] sm:$0xff]
      %v2279 = vld [vmem:[#allocation3 + $0x59] sm:$0xff]
      %v2280 = vld [vmem:[#allocation3 + $0x61] sm:$0xff]
      %v2281 = vld [vmem:[#allocation3 + $0x69] sm:$0xff]
      %v2282 = vld [vmem:[#allocation3 + $0x71] sm:$0xff]
      %v2283 = vld [vmem:[#allocation3 + $0x79] sm:$0xff]
      %v2284 = vld [vmem:[#allocation3 + $0x81] sm:$0xff]
      %v2285 = vld [vmem:[#allocation3 + $0x89] sm:$0xff]
      %v2286 = vld [vmem:[#allocation3 + $0x91] sm:$0xff]
      %v2287 = vld [vmem:[#allocation3 + $0x99] sm:$0xff]
      %2308 = vrot.lane.b32.xlu0 %v2268, 8
      %v2309 = vpop.permute.xlu0 %2308
      %2310 = vrot.lane.b32.xlu0 %v2269, 8
      %v2311 = vpop.permute.xlu0 %2310
      %2312 = vrot.lane.b32.xlu0 %v2270, 8
      %v2313 = vpop.permute.xlu0 %2312
      %2314 = vrot.lane.b32.xlu0 %v2271, 8
      %v2315 = vpop.permute.xlu0 %2314
      %2316 = vrot.lane.b32.xlu0 %v2272, 8
      %v2317 = vpop.permute.xlu0 %2316
      %2318 = vrot.lane.b32.xlu0 %v2273, 8
      %v2319 = vpop.permute.xlu0 %2318
      %2320 = vrot.lane.b32.xlu0 %v2274, 8
      %v2321 = vpop.permute.xlu0 %2320
      %2322 = vrot.lane.b32.xlu0 %v2275, 8
      %v2323 = vpop.permute.xlu0 %2322
      %2324 = vrot.lane.b32.xlu0 %v2276, 8
      %v2325 = vpop.permute.xlu0 %2324
      %2326 = vrot.lane.b32.xlu0 %v2277, 8
      %v2327 = vpop.permute.xlu0 %2326
      %2328 = vrot.lane.b32.xlu0 %v2278, 8
      %v2329 = vpop.permute.xlu0 %2328
      %2330 = vrot.lane.b32.xlu0 %v2279, 8
      %v2331 = vpop.permute.xlu0 %2330
      %2332 = vrot.lane.b32.xlu0 %v2280, 8
      %v2333 = vpop.permute.xlu0 %2332
      %2334 = vrot.lane.b32.xlu0 %v2281, 8
      %v2335 = vpop.permute.xlu0 %2334
      %2336 = vrot.lane.b32.xlu0 %v2282, 8
      %v2337 = vpop.permute.xlu0 %2336
      %2338 = vrot.lane.b32.xlu0 %v2283, 8
      %v2339 = vpop.permute.xlu0 %2338
      %2340 = vrot.lane.b32.xlu0 %v2284, 8
      %v2341 = vpop.permute.xlu0 %2340
      %2342 = vrot.lane.b32.xlu0 %v2285, 8
      %v2343 = vpop.permute.xlu0 %2342
      %2344 = vrot.lane.b32.xlu0 %v2286, 8
      %v2345 = vpop.permute.xlu0 %2344
      %2346 = vrot.lane.b32.xlu0 %v2287, 8
      %v2347 = vpop.permute.xlu0 %2346
      %2368 = vst.msk [vmem:[#allocation4] sm:$0xff] %vm546, %v2309
      %2369 = vst.msk [vmem:[#allocation4 + $0x8] sm:$0xff] %vm546, %v2311
      %2370 = vst.msk [vmem:[#allocation4 + $0x10] sm:$0xff] %vm546, %v2313
      %2371 = vst.msk [vmem:[#allocation4 + $0x18] sm:$0xff] %vm546, %v2315
      %2372 = vst.msk [vmem:[#allocation4 + $0x20] sm:$0xff] %vm546, %v2317
      %2373 = vst.msk [vmem:[#allocation4 + $0x28] sm:$0xff] %vm546, %v2319
      %2374 = vst.msk [vmem:[#allocation4 + $0x30] sm:$0xff] %vm546, %v2321
      %2375 = vst.msk [vmem:[#allocation4 + $0x38] sm:$0xff] %vm546, %v2323
      %2376 = vst.msk [vmem:[#allocation4 + $0x40] sm:$0xff] %vm546, %v2325
      %2377 = vst.msk [vmem:[#allocation4 + $0x48] sm:$0xff] %vm546, %v2327
      %2378 = vst.msk [vmem:[#allocation4 + $0x50] sm:$0xff] %vm546, %v2329
      %2379 = vst.msk [vmem:[#allocation4 + $0x58] sm:$0xff] %vm546, %v2331
      %2380 = vst.msk [vmem:[#allocation4 + $0x60] sm:$0xff] %vm546, %v2333
      %2381 = vst.msk [vmem:[#allocation4 + $0x68] sm:$0xff] %vm546, %v2335
      %2382 = vst.msk [vmem:[#allocation4 + $0x70] sm:$0xff] %vm546, %v2337
      %2383 = vst.msk [vmem:[#allocation4 + $0x78] sm:$0xff] %vm546, %v2339
      %2384 = vst.msk [vmem:[#allocation4 + $0x80] sm:$0xff] %vm546, %v2341
      %2385 = vst.msk [vmem:[#allocation4 + $0x88] sm:$0xff] %vm546, %v2343
      %2386 = vst.msk [vmem:[#allocation4 + $0x90] sm:$0xff] %vm546, %v2345
      %2387 = vst.msk [vmem:[#allocation4 + $0x98] sm:$0xff] %vm546, %v2347
      %v2388 = vld [vmem:[#allocation3 + $0x2] sm:$0xff]
      %v2389 = vld [vmem:[#allocation3 + $0xa] sm:$0xff]
      %v2390 = vld [vmem:[#allocation3 + $0x12] sm:$0xff]
      %v2391 = vld [vmem:[#allocation3 + $0x1a] sm:$0xff]
      %v2392 = vld [vmem:[#allocation3 + $0x22] sm:$0xff]
      %v2393 = vld [vmem:[#allocation3 + $0x2a] sm:$0xff]
      %v2394 = vld [vmem:[#allocation3 + $0x32] sm:$0xff]
      %v2395 = vld [vmem:[#allocation3 + $0x3a] sm:$0xff]
      %v2396 = vld [vmem:[#allocation3 + $0x42] sm:$0xff]
      %v2397 = vld [vmem:[#allocation3 + $0x4a] sm:$0xff]
      %v2398 = vld [vmem:[#allocation3 + $0x52] sm:$0xff]
      %v2399 = vld [vmem:[#allocation3 + $0x5a] sm:$0xff]
      %v2400 = vld [vmem:[#allocation3 + $0x62] sm:$0xff]
      %v2401 = vld [vmem:[#allocation3 + $0x6a] sm:$0xff]
      %v2402 = vld [vmem:[#allocation3 + $0x72] sm:$0xff]
      %v2403 = vld [vmem:[#allocation3 + $0x7a] sm:$0xff]
      %v2404 = vld [vmem:[#allocation3 + $0x82] sm:$0xff]
      %v2405 = vld [vmem:[#allocation3 + $0x8a] sm:$0xff]
      %v2406 = vld [vmem:[#allocation3 + $0x92] sm:$0xff]
      %v2407 = vld [vmem:[#allocation3 + $0x9a] sm:$0xff]
      %2428 = vrot.lane.b32.xlu0 %v2388, 16
      %v2429 = vpop.permute.xlu0 %2428
      %2430 = vrot.lane.b32.xlu0 %v2389, 16
      %v2431 = vpop.permute.xlu0 %2430
      %2432 = vrot.lane.b32.xlu0 %v2390, 16
      %v2433 = vpop.permute.xlu0 %2432
      %2434 = vrot.lane.b32.xlu0 %v2391, 16
      %v2435 = vpop.permute.xlu0 %2434
      %2436 = vrot.lane.b32.xlu0 %v2392, 16
      %v2437 = vpop.permute.xlu0 %2436
      %2438 = vrot.lane.b32.xlu0 %v2393, 16
      %v2439 = vpop.permute.xlu0 %2438
      %2440 = vrot.lane.b32.xlu0 %v2394, 16
      %v2441 = vpop.permute.xlu0 %2440
      %2442 = vrot.lane.b32.xlu0 %v2395, 16
      %v2443 = vpop.permute.xlu0 %2442
      %2444 = vrot.lane.b32.xlu0 %v2396, 16
      %v2445 = vpop.permute.xlu0 %2444
      %2446 = vrot.lane.b32.xlu0 %v2397, 16
      %v2447 = vpop.permute.xlu0 %2446
      %2448 = vrot.lane.b32.xlu0 %v2398, 16
      %v2449 = vpop.permute.xlu0 %2448
      %2450 = vrot.lane.b32.xlu0 %v2399, 16
      %v2451 = vpop.permute.xlu0 %2450
      %2452 = vrot.lane.b32.xlu0 %v2400, 16
      %v2453 = vpop.permute.xlu0 %2452
      %2454 = vrot.lane.b32.xlu0 %v2401, 16
      %v2455 = vpop.permute.xlu0 %2454
      %2456 = vrot.lane.b32.xlu0 %v2402, 16
      %v2457 = vpop.permute.xlu0 %2456
      %2458 = vrot.lane.b32.xlu0 %v2403, 16
      %v2459 = vpop.permute.xlu0 %2458
      %2460 = vrot.lane.b32.xlu0 %v2404, 16
      %v2461 = vpop.permute.xlu0 %2460
      %2462 = vrot.lane.b32.xlu0 %v2405, 16
      %v2463 = vpop.permute.xlu0 %2462
      %2464 = vrot.lane.b32.xlu0 %v2406, 16
      %v2465 = vpop.permute.xlu0 %2464
      %2466 = vrot.lane.b32.xlu0 %v2407, 16
      %v2467 = vpop.permute.xlu0 %2466
      %2488 = vst.msk [vmem:[#allocation4] sm:$0xff] %vm703, %v2429
      %2489 = vst.msk [vmem:[#allocation4 + $0x8] sm:$0xff] %vm703, %v2431
      %2490 = vst.msk [vmem:[#allocation4 + $0x10] sm:$0xff] %vm703, %v2433
      %2491 = vst.msk [vmem:[#allocation4 + $0x18] sm:$0xff] %vm703, %v2435
      %2492 = vst.msk [vmem:[#allocation4 + $0x20] sm:$0xff] %vm703, %v2437
      %2493 = vst.msk [vmem:[#allocation4 + $0x28] sm:$0xff] %vm703, %v2439
      %2494 = vst.msk [vmem:[#allocation4 + $0x30] sm:$0xff] %vm703, %v2441
      %2495 = vst.msk [vmem:[#allocation4 + $0x38] sm:$0xff] %vm703, %v2443
      %2496 = vst.msk [vmem:[#allocation4 + $0x40] sm:$0xff] %vm703, %v2445
      %2497 = vst.msk [vmem:[#allocation4 + $0x48] sm:$0xff] %vm703, %v2447
      %2498 = vst.msk [vmem:[#allocation4 + $0x50] sm:$0xff] %vm703, %v2449
      %2499 = vst.msk [vmem:[#allocation4 + $0x58] sm:$0xff] %vm703, %v2451
      %2500 = vst.msk [vmem:[#allocation4 + $0x60] sm:$0xff] %vm703, %v2453
      %2501 = vst.msk [vmem:[#allocation4 + $0x68] sm:$0xff] %vm703, %v2455
      %2502 = vst.msk [vmem:[#allocation4 + $0x70] sm:$0xff] %vm703, %v2457
      %2503 = vst.msk [vmem:[#allocation4 + $0x78] sm:$0xff] %vm703, %v2459
      %2504 = vst.msk [vmem:[#allocation4 + $0x80] sm:$0xff] %vm703, %v2461
      %2505 = vst.msk [vmem:[#allocation4 + $0x88] sm:$0xff] %vm703, %v2463
      %2506 = vst.msk [vmem:[#allocation4 + $0x90] sm:$0xff] %vm703, %v2465
      %2507 = vst.msk [vmem:[#allocation4 + $0x98] sm:$0xff] %vm703, %v2467
      %v2508 = vld [vmem:[#allocation3 + $0x14] sm:$0xff]
      %v2509 = vld [vmem:[#allocation3 + $0x1c] sm:$0xff]
      %v2510 = vld [vmem:[#allocation3 + $0x24] sm:$0xff]
      %v2511 = vld [vmem:[#allocation3 + $0x2c] sm:$0xff]
      %v2512 = vld [vmem:[#allocation3 + $0x34] sm:$0xff]
      %v2513 = vld [vmem:[#allocation3 + $0x3c] sm:$0xff]
      %v2514 = vld [vmem:[#allocation3 + $0x44] sm:$0xff]
      %v2515 = vld [vmem:[#allocation3 + $0x4c] sm:$0xff]
      %v2516 = vld [vmem:[#allocation3 + $0x54] sm:$0xff]
      %v2517 = vld [vmem:[#allocation3 + $0x5c] sm:$0xff]
      %v2518 = vld [vmem:[#allocation3 + $0x64] sm:$0xff]
      %v2519 = vld [vmem:[#allocation3 + $0x6c] sm:$0xff]
      %v2520 = vld [vmem:[#allocation3 + $0x74] sm:$0xff]
      %v2521 = vld [vmem:[#allocation3 + $0x7c] sm:$0xff]
      %v2522 = vld [vmem:[#allocation3 + $0x84] sm:$0xff]
      %v2523 = vld [vmem:[#allocation3 + $0x8c] sm:$0xff]
      %v2524 = vld [vmem:[#allocation3 + $0x94] sm:$0xff]
      %v2525 = vld [vmem:[#allocation3 + $0x9c] sm:$0xff]
      %v2526 = vld [vmem:[#allocation3 + $0xa4] sm:$0xff]
      %v2527 = vld [vmem:[#allocation3 + $0xac] sm:$0xff]
      %2548 = vrot.lane.b32.xlu0 %v2508, 24
      %v2549 = vpop.permute.xlu0 %2548
      %2550 = vrot.lane.b32.xlu0 %v2509, 24
      %v2551 = vpop.permute.xlu0 %2550
      %2552 = vrot.lane.b32.xlu0 %v2510, 24
      %v2553 = vpop.permute.xlu0 %2552
      %2554 = vrot.lane.b32.xlu0 %v2511, 24
      %v2555 = vpop.permute.xlu0 %2554
      %2556 = vrot.lane.b32.xlu0 %v2512, 24
      %v2557 = vpop.permute.xlu0 %2556
      %2558 = vrot.lane.b32.xlu0 %v2513, 24
      %v2559 = vpop.permute.xlu0 %2558
      %2560 = vrot.lane.b32.xlu0 %v2514, 24
      %v2561 = vpop.permute.xlu0 %2560
      %2562 = vrot.lane.b32.xlu0 %v2515, 24
      %v2563 = vpop.permute.xlu0 %2562
      %2564 = vrot.lane.b32.xlu0 %v2516, 24
      %v2565 = vpop.permute.xlu0 %2564
      %2566 = vrot.lane.b32.xlu0 %v2517, 24
      %v2567 = vpop.permute.xlu0 %2566
      %2568 = vrot.lane.b32.xlu0 %v2518, 24
      %v2569 = vpop.permute.xlu0 %2568
      %2570 = vrot.lane.b32.xlu0 %v2519, 24
      %v2571 = vpop.permute.xlu0 %2570
      %2572 = vrot.lane.b32.xlu0 %v2520, 24
      %v2573 = vpop.permute.xlu0 %2572
      %2574 = vrot.lane.b32.xlu0 %v2521, 24
      %v2575 = vpop.permute.xlu0 %2574
      %2576 = vrot.lane.b32.xlu0 %v2522, 24
      %v2577 = vpop.permute.xlu0 %2576
      %2578 = vrot.lane.b32.xlu0 %v2523, 24
      %v2579 = vpop.permute.xlu0 %2578
      %2580 = vrot.lane.b32.xlu0 %v2524, 24
      %v2581 = vpop.permute.xlu0 %2580
      %2582 = vrot.lane.b32.xlu0 %v2525, 24
      %v2583 = vpop.permute.xlu0 %2582
      %2584 = vrot.lane.b32.xlu0 %v2526, 24
      %v2585 = vpop.permute.xlu0 %2584
      %2586 = vrot.lane.b32.xlu0 %v2527, 24
      %v2587 = vpop.permute.xlu0 %2586
      %2608 = vst.msk [vmem:[#allocation4] sm:$0xff] %vm860, %v2549
      %2609 = vst.msk [vmem:[#allocation4 + $0x8] sm:$0xff] %vm860, %v2551
      %2610 = vst.msk [vmem:[#allocation4 + $0x10] sm:$0xff] %vm860, %v2553
      %2611 = vst.msk [vmem:[#allocation4 + $0x18] sm:$0xff] %vm860, %v2555
      %2612 = vst.msk [vmem:[#allocation4 + $0x20] sm:$0xff] %vm860, %v2557
      %2613 = vst.msk [vmem:[#allocation4 + $0x28] sm:$0xff] %vm860, %v2559
      %2614 = vst.msk [vmem:[#allocation4 + $0x30] sm:$0xff] %vm860, %v2561
      %2615 = vst.msk [vmem:[#allocation4 + $0x38] sm:$0xff] %vm860, %v2563
      %2616 = vst.msk [vmem:[#allocation4 + $0x40] sm:$0xff] %vm860, %v2565
      %2617 = vst.msk [vmem:[#allocation4 + $0x48] sm:$0xff] %vm860, %v2567
      %2618 = vst.msk [vmem:[#allocation4 + $0x50] sm:$0xff] %vm860, %v2569
      %2619 = vst.msk [vmem:[#allocation4 + $0x58] sm:$0xff] %vm860, %v2571
      %2620 = vst.msk [vmem:[#allocation4 + $0x60] sm:$0xff] %vm860, %v2573
      %2621 = vst.msk [vmem:[#allocation4 + $0x68] sm:$0xff] %vm860, %v2575
      %2622 = vst.msk [vmem:[#allocation4 + $0x70] sm:$0xff] %vm860, %v2577
      %2623 = vst.msk [vmem:[#allocation4 + $0x78] sm:$0xff] %vm860, %v2579
      %2624 = vst.msk [vmem:[#allocation4 + $0x80] sm:$0xff] %vm860, %v2581
      %2625 = vst.msk [vmem:[#allocation4 + $0x88] sm:$0xff] %vm860, %v2583
      %2626 = vst.msk [vmem:[#allocation4 + $0x90] sm:$0xff] %vm860, %v2585
      %2627 = vst.msk [vmem:[#allocation4 + $0x98] sm:$0xff] %vm860, %v2587
      %v2628 = vld [vmem:[#allocation3 + $0x15] sm:$0xff]
      %v2629 = vld [vmem:[#allocation3 + $0x1d] sm:$0xff]
      %v2630 = vld [vmem:[#allocation3 + $0x25] sm:$0xff]
      %v2631 = vld [vmem:[#allocation3 + $0x2d] sm:$0xff]
      %v2632 = vld [vmem:[#allocation3 + $0x35] sm:$0xff]
      %v2633 = vld [vmem:[#allocation3 + $0x3d] sm:$0xff]
      %v2634 = vld [vmem:[#allocation3 + $0x45] sm:$0xff]
      %v2635 = vld [vmem:[#allocation3 + $0x4d] sm:$0xff]
      %v2636 = vld [vmem:[#allocation3 + $0x55] sm:$0xff]
      %v2637 = vld [vmem:[#allocation3 + $0x5d] sm:$0xff]
      %v2638 = vld [vmem:[#allocation3 + $0x65] sm:$0xff]
      %v2639 = vld [vmem:[#allocation3 + $0x6d] sm:$0xff]
      %v2640 = vld [vmem:[#allocation3 + $0x75] sm:$0xff]
      %v2641 = vld [vmem:[#allocation3 + $0x7d] sm:$0xff]
      %v2642 = vld [vmem:[#allocation3 + $0x85] sm:$0xff]
      %v2643 = vld [vmem:[#allocation3 + $0x8d] sm:$0xff]
      %v2644 = vld [vmem:[#allocation3 + $0x95] sm:$0xff]
      %v2645 = vld [vmem:[#allocation3 + $0x9d] sm:$0xff]
      %v2646 = vld [vmem:[#allocation3 + $0xa5] sm:$0xff]
      %v2647 = vld [vmem:[#allocation3 + $0xad] sm:$0xff]
      %2668 = vrot.lane.b32.xlu0 %v2628, 32
      %v2669 = vpop.permute.xlu0 %2668
      %2670 = vrot.lane.b32.xlu0 %v2629, 32
      %v2671 = vpop.permute.xlu0 %2670
      %2672 = vrot.lane.b32.xlu0 %v2630, 32
      %v2673 = vpop.permute.xlu0 %2672
      %2674 = vrot.lane.b32.xlu0 %v2631, 32
      %v2675 = vpop.permute.xlu0 %2674
      %2676 = vrot.lane.b32.xlu0 %v2632, 32
      %v2677 = vpop.permute.xlu0 %2676
      %2678 = vrot.lane.b32.xlu0 %v2633, 32
      %v2679 = vpop.permute.xlu0 %2678
      %2680 = vrot.lane.b32.xlu0 %v2634, 32
      %v2681 = vpop.permute.xlu0 %2680
      %2682 = vrot.lane.b32.xlu0 %v2635, 32
      %v2683 = vpop.permute.xlu0 %2682
      %2684 = vrot.lane.b32.xlu0 %v2636, 32
      %v2685 = vpop.permute.xlu0 %2684
      %2686 = vrot.lane.b32.xlu0 %v2637, 32
      %v2687 = vpop.permute.xlu0 %2686
      %2688 = vrot.lane.b32.xlu0 %v2638, 32
      %v2689 = vpop.permute.xlu0 %2688
      %2690 = vrot.lane.b32.xlu0 %v2639, 32
      %v2691 = vpop.permute.xlu0 %2690
      %2692 = vrot.lane.b32.xlu0 %v2640, 32
      %v2693 = vpop.permute.xlu0 %2692
      %2694 = vrot.lane.b32.xlu0 %v2641, 32
      %v2695 = vpop.permute.xlu0 %2694
      %2696 = vrot.lane.b32.xlu0 %v2642, 32
      %v2697 = vpop.permute.xlu0 %2696
      %2698 = vrot.lane.b32.xlu0 %v2643, 32
      %v2699 = vpop.permute.xlu0 %2698
      %2700 = vrot.lane.b32.xlu0 %v2644, 32
      %v2701 = vpop.permute.xlu0 %2700
      %2702 = vrot.lane.b32.xlu0 %v2645, 32
      %v2703 = vpop.permute.xlu0 %2702
      %2704 = vrot.lane.b32.xlu0 %v2646, 32
      %v2705 = vpop.permute.xlu0 %2704
      %2706 = vrot.lane.b32.xlu0 %v2647, 32
      %v2707 = vpop.permute.xlu0 %2706
      %2728 = vst.msk [vmem:[#allocation4] sm:$0xff] %vm1017, %v2669
      %2729 = vst.msk [vmem:[#allocation4 + $0x8] sm:$0xff] %vm1017, %v2671
      %2730 = vst.msk [vmem:[#allocation4 + $0x10] sm:$0xff] %vm1017, %v2673
      %2731 = vst.msk [vmem:[#allocation4 + $0x18] sm:$0xff] %vm1017, %v2675
      %2732 = vst.msk [vmem:[#allocation4 + $0x20] sm:$0xff] %vm1017, %v2677
      %2733 = vst.msk [vmem:[#allocation4 + $0x28] sm:$0xff] %vm1017, %v2679
      %2734 = vst.msk [vmem:[#allocation4 + $0x30] sm:$0xff] %vm1017, %v2681
      %2735 = vst.msk [vmem:[#allocation4 + $0x38] sm:$0xff] %vm1017, %v2683
      %2736 = vst.msk [vmem:[#allocation4 + $0x40] sm:$0xff] %vm1017, %v2685
      %2737 = vst.msk [vmem:[#allocation4 + $0x48] sm:$0xff] %vm1017, %v2687
      %2738 = vst.msk [vmem:[#allocation4 + $0x50] sm:$0xff] %vm1017, %v2689
      %2739 = vst.msk [vmem:[#allocation4 + $0x58] sm:$0xff] %vm1017, %v2691
      %2740 = vst.msk [vmem:[#allocation4 + $0x60] sm:$0xff] %vm1017, %v2693
      %2741 = vst.msk [vmem:[#allocation4 + $0x68] sm:$0xff] %vm1017, %v2695
      %2742 = vst.msk [vmem:[#allocation4 + $0x70] sm:$0xff] %vm1017, %v2697
      %2743 = vst.msk [vmem:[#allocation4 + $0x78] sm:$0xff] %vm1017, %v2699
      %2744 = vst.msk [vmem:[#allocation4 + $0x80] sm:$0xff] %vm1017, %v2701
      %2745 = vst.msk [vmem:[#allocation4 + $0x88] sm:$0xff] %vm1017, %v2703
      %2746 = vst.msk [vmem:[#allocation4 + $0x90] sm:$0xff] %vm1017, %v2705
      %2747 = vst.msk [vmem:[#allocation4 + $0x98] sm:$0xff] %vm1017, %v2707
      %v2748 = vld [vmem:[#allocation3 + $0x16] sm:$0xff]
      %v2749 = vld [vmem:[#allocation3 + $0x1e] sm:$0xff]
      %v2750 = vld [vmem:[#allocation3 + $0x26] sm:$0xff]
      %v2751 = vld [vmem:[#allocation3 + $0x2e] sm:$0xff]
      %v2752 = vld [vmem:[#allocation3 + $0x36] sm:$0xff]
      %v2753 = vld [vmem:[#allocation3 + $0x3e] sm:$0xff]
      %v2754 = vld [vmem:[#allocation3 + $0x46] sm:$0xff]
      %v2755 = vld [vmem:[#allocation3 + $0x4e] sm:$0xff]
      %v2756 = vld [vmem:[#allocation3 + $0x56] sm:$0xff]
      %v2757 = vld [vmem:[#allocation3 + $0x5e] sm:$0xff]
      %v2758 = vld [vmem:[#allocation3 + $0x66] sm:$0xff]
      %v2759 = vld [vmem:[#allocation3 + $0x6e] sm:$0xff]
      %v2760 = vld [vmem:[#allocation3 + $0x76] sm:$0xff]
      %v2761 = vld [vmem:[#allocation3 + $0x7e] sm:$0xff]
      %v2762 = vld [vmem:[#allocation3 + $0x86] sm:$0xff]
      %v2763 = vld [vmem:[#allocation3 + $0x8e] sm:$0xff]
      %v2764 = vld [vmem:[#allocation3 + $0x96] sm:$0xff]
      %v2765 = vld [vmem:[#allocation3 + $0x9e] sm:$0xff]
      %v2766 = vld [vmem:[#allocation3 + $0xa6] sm:$0xff]
      %v2767 = vld [vmem:[#allocation3 + $0xae] sm:$0xff]
      %2788 = vrot.lane.b32.xlu0 %v2748, 40
      %v2789 = vpop.permute.xlu0 %2788
      %2790 = vrot.lane.b32.xlu0 %v2749, 40
      %v2791 = vpop.permute.xlu0 %2790
      %2792 = vrot.lane.b32.xlu0 %v2750, 40
      %v2793 = vpop.permute.xlu0 %2792
      %2794 = vrot.lane.b32.xlu0 %v2751, 40
      %v2795 = vpop.permute.xlu0 %2794
      %2796 = vrot.lane.b32.xlu0 %v2752, 40
      %v2797 = vpop.permute.xlu0 %2796
      %2798 = vrot.lane.b32.xlu0 %v2753, 40
      %v2799 = vpop.permute.xlu0 %2798
      %2800 = vrot.lane.b32.xlu0 %v2754, 40
      %v2801 = vpop.permute.xlu0 %2800
      %2802 = vrot.lane.b32.xlu0 %v2755, 40
      %v2803 = vpop.permute.xlu0 %2802
      %2804 = vrot.lane.b32.xlu0 %v2756, 40
      %v2805 = vpop.permute.xlu0 %2804
      %2806 = vrot.lane.b32.xlu0 %v2757, 40
      %v2807 = vpop.permute.xlu0 %2806
      %2808 = vrot.lane.b32.xlu0 %v2758, 40
      %v2809 = vpop.permute.xlu0 %2808
      %2810 = vrot.lane.b32.xlu0 %v2759, 40
      %v2811 = vpop.permute.xlu0 %2810
      %2812 = vrot.lane.b32.xlu0 %v2760, 40
      %v2813 = vpop.permute.xlu0 %2812
      %2814 = vrot.lane.b32.xlu0 %v2761, 40
      %v2815 = vpop.permute.xlu0 %2814
      %2816 = vrot.lane.b32.xlu0 %v2762, 40
      %v2817 = vpop.permute.xlu0 %2816
      %2818 = vrot.lane.b32.xlu0 %v2763, 40
      %v2819 = vpop.permute.xlu0 %2818
      %2820 = vrot.lane.b32.xlu0 %v2764, 40
      %v2821 = vpop.permute.xlu0 %2820
      %2822 = vrot.lane.b32.xlu0 %v2765, 40
      %v2823 = vpop.permute.xlu0 %2822
      %2824 = vrot.lane.b32.xlu0 %v2766, 40
      %v2825 = vpop.permute.xlu0 %2824
      %2826 = vrot.lane.b32.xlu0 %v2767, 40
      %v2827 = vpop.permute.xlu0 %2826
      %2848 = vst.msk [vmem:[#allocation4] sm:$0xff] %vm1174, %v2789
      %2849 = vst.msk [vmem:[#allocation4 + $0x8] sm:$0xff] %vm1174, %v2791
      %2850 = vst.msk [vmem:[#allocation4 + $0x10] sm:$0xff] %vm1174, %v2793
      %2851 = vst.msk [vmem:[#allocation4 + $0x18] sm:$0xff] %vm1174, %v2795
      %2852 = vst.msk [vmem:[#allocation4 + $0x20] sm:$0xff] %vm1174, %v2797
      %2853 = vst.msk [vmem:[#allocation4 + $0x28] sm:$0xff] %vm1174, %v2799
      %2854 = vst.msk [vmem:[#allocation4 + $0x30] sm:$0xff] %vm1174, %v2801
      %2855 = vst.msk [vmem:[#allocation4 + $0x38] sm:$0xff] %vm1174, %v2803
      %2856 = vst.msk [vmem:[#allocation4 + $0x40] sm:$0xff] %vm1174, %v2805
      %2857 = vst.msk [vmem:[#allocation4 + $0x48] sm:$0xff] %vm1174, %v2807
      %2858 = vst.msk [vmem:[#allocation4 + $0x50] sm:$0xff] %vm1174, %v2809
      %2859 = vst.msk [vmem:[#allocation4 + $0x58] sm:$0xff] %vm1174, %v2811
      %2860 = vst.msk [vmem:[#allocation4 + $0x60] sm:$0xff] %vm1174, %v2813
      %2861 = vst.msk [vmem:[#allocation4 + $0x68] sm:$0xff] %vm1174, %v2815
      %2862 = vst.msk [vmem:[#allocation4 + $0x70] sm:$0xff] %vm1174, %v2817
      %2863 = vst.msk [vmem:[#allocation4 + $0x78] sm:$0xff] %vm1174, %v2819
      %2864 = vst.msk [vmem:[#allocation4 + $0x80] sm:$0xff] %vm1174, %v2821
      %2865 = vst.msk [vmem:[#allocation4 + $0x88] sm:$0xff] %vm1174, %v2823
      %2866 = vst.msk [vmem:[#allocation4 + $0x90] sm:$0xff] %vm1174, %v2825
      %2867 = vst.msk [vmem:[#allocation4 + $0x98] sm:$0xff] %vm1174, %v2827
      %v2868 = vld [vmem:[#allocation3 + $0x28] sm:$0xff]
      %v2869 = vld [vmem:[#allocation3 + $0x30] sm:$0xff]
      %v2870 = vld [vmem:[#allocation3 + $0x38] sm:$0xff]
      %v2871 = vld [vmem:[#allocation3 + $0x40] sm:$0xff]
      %v2872 = vld [vmem:[#allocation3 + $0x48] sm:$0xff]
      %v2873 = vld [vmem:[#allocation3 + $0x50] sm:$0xff]
      %v2874 = vld [vmem:[#allocation3 + $0x58] sm:$0xff]
      %v2875 = vld [vmem:[#allocation3 + $0x60] sm:$0xff]
      %v2876 = vld [vmem:[#allocation3 + $0x68] sm:$0xff]
      %v2877 = vld [vmem:[#allocation3 + $0x70] sm:$0xff]
      %v2878 = vld [vmem:[#allocation3 + $0x78] sm:$0xff]
      %v2879 = vld [vmem:[#allocation3 + $0x80] sm:$0xff]
      %v2880 = vld [vmem:[#allocation3 + $0x88] sm:$0xff]
      %v2881 = vld [vmem:[#allocation3 + $0x90] sm:$0xff]
      %v2882 = vld [vmem:[#allocation3 + $0x98] sm:$0xff]
      %v2883 = vld [vmem:[#allocation3 + $0xa0] sm:$0xff]
      %v2884 = vld [vmem:[#allocation3 + $0xa8] sm:$0xff]
      %v2885 = vld [vmem:[#allocation3 + $0xb0] sm:$0xff]
      %v2886 = vld [vmem:[#allocation3 + $0xb8] sm:$0xff]
      %v2887 = vld [vmem:[#allocation3 + $0xc0] sm:$0xff]
      %2908 = vrot.lane.b32.xlu0 %v2868, 48
      %v2909 = vpop.permute.xlu0 %2908
      %2910 = vrot.lane.b32.xlu0 %v2869, 48
      %v2911 = vpop.permute.xlu0 %2910
      %2912 = vrot.lane.b32.xlu0 %v2870, 48
      %v2913 = vpop.permute.xlu0 %2912
      %2914 = vrot.lane.b32.xlu0 %v2871, 48
      %v2915 = vpop.permute.xlu0 %2914
      %2916 = vrot.lane.b32.xlu0 %v2872, 48
      %v2917 = vpop.permute.xlu0 %2916
      %2918 = vrot.lane.b32.xlu0 %v2873, 48
      %v2919 = vpop.permute.xlu0 %2918
      %2920 = vrot.lane.b32.xlu0 %v2874, 48
      %v2921 = vpop.permute.xlu0 %2920
      %2922 = vrot.lane.b32.xlu0 %v2875, 48
      %v2923 = vpop.permute.xlu0 %2922
      %2924 = vrot.lane.b32.xlu0 %v2876, 48
      %v2925 = vpop.permute.xlu0 %2924
      %2926 = vrot.lane.b32.xlu0 %v2877, 48
      %v2927 = vpop.permute.xlu0 %2926
      %2928 = vrot.lane.b32.xlu0 %v2878, 48
      %v2929 = vpop.permute.xlu0 %2928
      %2930 = vrot.lane.b32.xlu0 %v2879, 48
      %v2931 = vpop.permute.xlu0 %2930
      %2932 = vrot.lane.b32.xlu0 %v2880, 48
      %v2933 = vpop.permute.xlu0 %2932
      %2934 = vrot.lane.b32.xlu0 %v2881, 48
      %v2935 = vpop.permute.xlu0 %2934
      %2936 = vrot.lane.b32.xlu0 %v2882, 48
      %v2937 = vpop.permute.xlu0 %2936
      %2938 = vrot.lane.b32.xlu0 %v2883, 48
      %v2939 = vpop.permute.xlu0 %2938
      %2940 = vrot.lane.b32.xlu0 %v2884, 48
      %v2941 = vpop.permute.xlu0 %2940
      %2942 = vrot.lane.b32.xlu0 %v2885, 48
      %v2943 = vpop.permute.xlu0 %2942
      %2944 = vrot.lane.b32.xlu0 %v2886, 48
      %v2945 = vpop.permute.xlu0 %2944
      %2946 = vrot.lane.b32.xlu0 %v2887, 48
      %v2947 = vpop.permute.xlu0 %2946
      %2968 = vst.msk [vmem:[#allocation4] sm:$0xff] %vm1331, %v2909
      %2969 = vst.msk [vmem:[#allocation4 + $0x8] sm:$0xff] %vm1331, %v2911
      %2970 = vst.msk [vmem:[#allocation4 + $0x10] sm:$0xff] %vm1331, %v2913
      %2971 = vst.msk [vmem:[#allocation4 + $0x18] sm:$0xff] %vm1331, %v2915
      %2972 = vst.msk [vmem:[#allocation4 + $0x20] sm:$0xff] %vm1331, %v2917
      %2973 = vst.msk [vmem:[#allocation4 + $0x28] sm:$0xff] %vm1331, %v2919
      %2974 = vst.msk [vmem:[#allocation4 + $0x30] sm:$0xff] %vm1331, %v2921
      %2975 = vst.msk [vmem:[#allocation4 + $0x38] sm:$0xff] %vm1331, %v2923
      %2976 = vst.msk [vmem:[#allocation4 + $0x40] sm:$0xff] %vm1331, %v2925
      %2977 = vst.msk [vmem:[#allocation4 + $0x48] sm:$0xff] %vm1331, %v2927
      %2978 = vst.msk [vmem:[#allocation4 + $0x50] sm:$0xff] %vm1331, %v2929
      %2979 = vst.msk [vmem:[#allocation4 + $0x58] sm:$0xff] %vm1331, %v2931
      %2980 = vst.msk [vmem:[#allocation4 + $0x60] sm:$0xff] %vm1331, %v2933
      %2981 = vst.msk [vmem:[#allocation4 + $0x68] sm:$0xff] %vm1331, %v2935
      %2982 = vst.msk [vmem:[#allocation4 + $0x70] sm:$0xff] %vm1331, %v2937
      %2983 = vst.msk [vmem:[#allocation4 + $0x78] sm:$0xff] %vm1331, %v2939
      %2984 = vst.msk [vmem:[#allocation4 + $0x80] sm:$0xff] %vm1331, %v2941
      %2985 = vst.msk [vmem:[#allocation4 + $0x88] sm:$0xff] %vm1331, %v2943
      %2986 = vst.msk [vmem:[#allocation4 + $0x90] sm:$0xff] %vm1331, %v2945
      %2987 = vst.msk [vmem:[#allocation4 + $0x98] sm:$0xff] %vm1331, %v2947
      %v2988 = vld [vmem:[#allocation3 + $0x29] sm:$0xff]
      %v2989 = vld [vmem:[#allocation3 + $0x31] sm:$0xff]
      %v2990 = vld [vmem:[#allocation3 + $0x39] sm:$0xff]
      %v2991 = vld [vmem:[#allocation3 + $0x41] sm:$0xff]
      %v2992 = vld [vmem:[#allocation3 + $0x49] sm:$0xff]
      %v2993 = vld [vmem:[#allocation3 + $0x51] sm:$0xff]
      %v2994 = vld [vmem:[#allocation3 + $0x59] sm:$0xff]
      %v2995 = vld [vmem:[#allocation3 + $0x61] sm:$0xff]
      %v2996 = vld [vmem:[#allocation3 + $0x69] sm:$0xff]
      %v2997 = vld [vmem:[#allocation3 + $0x71] sm:$0xff]
      %v2998 = vld [vmem:[#allocation3 + $0x79] sm:$0xff]
      %v2999 = vld [vmem:[#allocation3 + $0x81] sm:$0xff]
      %v3000 = vld [vmem:[#allocation3 + $0x89] sm:$0xff]
      %v3001 = vld [vmem:[#allocation3 + $0x91] sm:$0xff]
      %v3002 = vld [vmem:[#allocation3 + $0x99] sm:$0xff]
      %v3003 = vld [vmem:[#allocation3 + $0xa1] sm:$0xff]
      %v3004 = vld [vmem:[#allocation3 + $0xa9] sm:$0xff]
      %v3005 = vld [vmem:[#allocation3 + $0xb1] sm:$0xff]
      %v3006 = vld [vmem:[#allocation3 + $0xb9] sm:$0xff]
      %v3007 = vld [vmem:[#allocation3 + $0xc1] sm:$0xff]
      %3028 = vrot.lane.b32.xlu0 %v2988, 56
      %v3029 = vpop.permute.xlu0 %3028
      %3030 = vrot.lane.b32.xlu0 %v2989, 56
      %v3031 = vpop.permute.xlu0 %3030
      %3032 = vrot.lane.b32.xlu0 %v2990, 56
      %v3033 = vpop.permute.xlu0 %3032
      %3034 = vrot.lane.b32.xlu0 %v2991, 56
      %v3035 = vpop.permute.xlu0 %3034
      %3036 = vrot.lane.b32.xlu0 %v2992, 56
      %v3037 = vpop.permute.xlu0 %3036
      %3038 = vrot.lane.b32.xlu0 %v2993, 56
      %v3039 = vpop.permute.xlu0 %3038
      %3040 = vrot.lane.b32.xlu0 %v2994, 56
      %v3041 = vpop.permute.xlu0 %3040
      %3042 = vrot.lane.b32.xlu0 %v2995, 56
      %v3043 = vpop.permute.xlu0 %3042
      %3044 = vrot.lane.b32.xlu0 %v2996, 56
      %v3045 = vpop.permute.xlu0 %3044
      %3046 = vrot.lane.b32.xlu0 %v2997, 56
      %v3047 = vpop.permute.xlu0 %3046
      %3048 = vrot.lane.b32.xlu0 %v2998, 56
      %v3049 = vpop.permute.xlu0 %3048
      %3050 = vrot.lane.b32.xlu0 %v2999, 56
      %v3051 = vpop.permute.xlu0 %3050
      %3052 = vrot.lane.b32.xlu0 %v3000, 56
      %v3053 = vpop.permute.xlu0 %3052
      %3054 = vrot.lane.b32.xlu0 %v3001, 56
      %v3055 = vpop.permute.xlu0 %3054
      %3056 = vrot.lane.b32.xlu0 %v3002, 56
      %v3057 = vpop.permute.xlu0 %3056
      %3058 = vrot.lane.b32.xlu0 %v3003, 56
      %v3059 = vpop.permute.xlu0 %3058
      %3060 = vrot.lane.b32.xlu0 %v3004, 56
      %v3061 = vpop.permute.xlu0 %3060
      %3062 = vrot.lane.b32.xlu0 %v3005, 56
      %v3063 = vpop.permute.xlu0 %3062
      %3064 = vrot.lane.b32.xlu0 %v3006, 56
      %v3065 = vpop.permute.xlu0 %3064
      %3066 = vrot.lane.b32.xlu0 %v3007, 56
      %v3067 = vpop.permute.xlu0 %3066
      %3088 = vst.msk [vmem:[#allocation4] sm:$0xff] %vm1488, %v3029
      %3089 = vst.msk [vmem:[#allocation4 + $0x8] sm:$0xff] %vm1488, %v3031
      %3090 = vst.msk [vmem:[#allocation4 + $0x10] sm:$0xff] %vm1488, %v3033
      %3091 = vst.msk [vmem:[#allocation4 + $0x18] sm:$0xff] %vm1488, %v3035
      %3092 = vst.msk [vmem:[#allocation4 + $0x20] sm:$0xff] %vm1488, %v3037
      %3093 = vst.msk [vmem:[#allocation4 + $0x28] sm:$0xff] %vm1488, %v3039
      %3094 = vst.msk [vmem:[#allocation4 + $0x30] sm:$0xff] %vm1488, %v3041
      %3095 = vst.msk [vmem:[#allocation4 + $0x38] sm:$0xff] %vm1488, %v3043
      %3096 = vst.msk [vmem:[#allocation4 + $0x40] sm:$0xff] %vm1488, %v3045
      %3097 = vst.msk [vmem:[#allocation4 + $0x48] sm:$0xff] %vm1488, %v3047
      %3098 = vst.msk [vmem:[#allocation4 + $0x50] sm:$0xff] %vm1488, %v3049
      %3099 = vst.msk [vmem:[#allocation4 + $0x58] sm:$0xff] %vm1488, %v3051
      %3100 = vst.msk [vmem:[#allocation4 + $0x60] sm:$0xff] %vm1488, %v3053
      %3101 = vst.msk [vmem:[#allocation4 + $0x68] sm:$0xff] %vm1488, %v3055
      %3102 = vst.msk [vmem:[#allocation4 + $0x70] sm:$0xff] %vm1488, %v3057
      %3103 = vst.msk [vmem:[#allocation4 + $0x78] sm:$0xff] %vm1488, %v3059
      %3104 = vst.msk [vmem:[#allocation4 + $0x80] sm:$0xff] %vm1488, %v3061
      %3105 = vst.msk [vmem:[#allocation4 + $0x88] sm:$0xff] %vm1488, %v3063
      %3106 = vst.msk [vmem:[#allocation4 + $0x90] sm:$0xff] %vm1488, %v3065
      %3107 = vst.msk [vmem:[#allocation4 + $0x98] sm:$0xff] %vm1488, %v3067
      %v3108 = vld [vmem:[#allocation3 + $0x2a] sm:$0xff]
      %v3109 = vld [vmem:[#allocation3 + $0x32] sm:$0xff]
      %v3110 = vld [vmem:[#allocation3 + $0x3a] sm:$0xff]
      %v3111 = vld [vmem:[#allocation3 + $0x42] sm:$0xff]
      %v3112 = vld [vmem:[#allocation3 + $0x4a] sm:$0xff]
      %v3113 = vld [vmem:[#allocation3 + $0x52] sm:$0xff]
      %v3114 = vld [vmem:[#allocation3 + $0x5a] sm:$0xff]
      %v3115 = vld [vmem:[#allocation3 + $0x62] sm:$0xff]
      %v3116 = vld [vmem:[#allocation3 + $0x6a] sm:$0xff]
      %v3117 = vld [vmem:[#allocation3 + $0x72] sm:$0xff]
      %v3118 = vld [vmem:[#allocation3 + $0x7a] sm:$0xff]
      %v3119 = vld [vmem:[#allocation3 + $0x82] sm:$0xff]
      %v3120 = vld [vmem:[#allocation3 + $0x8a] sm:$0xff]
      %v3121 = vld [vmem:[#allocation3 + $0x92] sm:$0xff]
      %v3122 = vld [vmem:[#allocation3 + $0x9a] sm:$0xff]
      %v3123 = vld [vmem:[#allocation3 + $0xa2] sm:$0xff]
      %v3124 = vld [vmem:[#allocation3 + $0xaa] sm:$0xff]
      %v3125 = vld [vmem:[#allocation3 + $0xb2] sm:$0xff]
      %v3126 = vld [vmem:[#allocation3 + $0xba] sm:$0xff]
      %v3127 = vld [vmem:[#allocation3 + $0xc2] sm:$0xff]
      %3148 = vrot.lane.b32.xlu0 %v3108, 64
      %v3149 = vpop.permute.xlu0 %3148
      %3150 = vrot.lane.b32.xlu0 %v3109, 64
      %v3151 = vpop.permute.xlu0 %3150
      %3152 = vrot.lane.b32.xlu0 %v3110, 64
      %v3153 = vpop.permute.xlu0 %3152
      %3154 = vrot.lane.b32.xlu0 %v3111, 64
      %v3155 = vpop.permute.xlu0 %3154
      %3156 = vrot.lane.b32.xlu0 %v3112, 64
      %v3157 = vpop.permute.xlu0 %3156
      %3158 = vrot.lane.b32.xlu0 %v3113, 64
      %v3159 = vpop.permute.xlu0 %3158
      %3160 = vrot.lane.b32.xlu0 %v3114, 64
      %v3161 = vpop.permute.xlu0 %3160
      %3162 = vrot.lane.b32.xlu0 %v3115, 64
      %v3163 = vpop.permute.xlu0 %3162
      %3164 = vrot.lane.b32.xlu0 %v3116, 64
      %v3165 = vpop.permute.xlu0 %3164
      %3166 = vrot.lane.b32.xlu0 %v3117, 64
      %v3167 = vpop.permute.xlu0 %3166
      %3168 = vrot.lane.b32.xlu0 %v3118, 64
      %v3169 = vpop.permute.xlu0 %3168
      %3170 = vrot.lane.b32.xlu0 %v3119, 64
      %v3171 = vpop.permute.xlu0 %3170
      %3172 = vrot.lane.b32.xlu0 %v3120, 64
      %v3173 = vpop.permute.xlu0 %3172
      %3174 = vrot.lane.b32.xlu0 %v3121, 64
      %v3175 = vpop.permute.xlu0 %3174
      %3176 = vrot.lane.b32.xlu0 %v3122, 64
      %v3177 = vpop.permute.xlu0 %3176
      %3178 = vrot.lane.b32.xlu0 %v3123, 64
      %v3179 = vpop.permute.xlu0 %3178
      %3180 = vrot.lane.b32.xlu0 %v3124, 64
      %v3181 = vpop.permute.xlu0 %3180
      %3182 = vrot.lane.b32.xlu0 %v3125, 64
      %v3183 = vpop.permute.xlu0 %3182
      %3184 = vrot.lane.b32.xlu0 %v3126, 64
      %v3185 = vpop.permute.xlu0 %3184
      %3186 = vrot.lane.b32.xlu0 %v3127, 64
      %v3187 = vpop.permute.xlu0 %3186
      %3208 = vst.msk [vmem:[#allocation4] sm:$0xff] %vm1645, %v3149
      %3209 = vst.msk [vmem:[#allocation4 + $0x8] sm:$0xff] %vm1645, %v3151
      %3210 = vst.msk [vmem:[#allocation4 + $0x10] sm:$0xff] %vm1645, %v3153
      %3211 = vst.msk [vmem:[#allocation4 + $0x18] sm:$0xff] %vm1645, %v3155
      %3212 = vst.msk [vmem:[#allocation4 + $0x20] sm:$0xff] %vm1645, %v3157
      %3213 = vst.msk [vmem:[#allocation4 + $0x28] sm:$0xff] %vm1645, %v3159
      %3214 = vst.msk [vmem:[#allocation4 + $0x30] sm:$0xff] %vm1645, %v3161
      %3215 = vst.msk [vmem:[#allocation4 + $0x38] sm:$0xff] %vm1645, %v3163
      %3216 = vst.msk [vmem:[#allocation4 + $0x40] sm:$0xff] %vm1645, %v3165
      %3217 = vst.msk [vmem:[#allocation4 + $0x48] sm:$0xff] %vm1645, %v3167
      %3218 = vst.msk [vmem:[#allocation4 + $0x50] sm:$0xff] %vm1645, %v3169
      %3219 = vst.msk [vmem:[#allocation4 + $0x58] sm:$0xff] %vm1645, %v3171
      %3220 = vst.msk [vmem:[#allocation4 + $0x60] sm:$0xff] %vm1645, %v3173
      %3221 = vst.msk [vmem:[#allocation4 + $0x68] sm:$0xff] %vm1645, %v3175
      %3222 = vst.msk [vmem:[#allocation4 + $0x70] sm:$0xff] %vm1645, %v3177
      %3223 = vst.msk [vmem:[#allocation4 + $0x78] sm:$0xff] %vm1645, %v3179
      %3224 = vst.msk [vmem:[#allocation4 + $0x80] sm:$0xff] %vm1645, %v3181
      %3225 = vst.msk [vmem:[#allocation4 + $0x88] sm:$0xff] %vm1645, %v3183
      %3226 = vst.msk [vmem:[#allocation4 + $0x90] sm:$0xff] %vm1645, %v3185
      %3227 = vst.msk [vmem:[#allocation4 + $0x98] sm:$0xff] %vm1645, %v3187
      %v3228 = vld [vmem:[#allocation4] sm:$0xff]
      %v3229 = vld [vmem:[#allocation4 + $0x8] sm:$0xff]
      %v3230 = vld [vmem:[#allocation4 + $0x10] sm:$0xff]
      %v3231 = vld [vmem:[#allocation4 + $0x18] sm:$0xff]
      %v3232 = vld [vmem:[#allocation4 + $0x20] sm:$0xff]
      %v3233 = vld [vmem:[#allocation4 + $0x28] sm:$0xff]
      %v3234 = vld [vmem:[#allocation4 + $0x30] sm:$0xff]
      %v3235 = vld [vmem:[#allocation4 + $0x38] sm:$0xff]
      %v3236 = vld [vmem:[#allocation4 + $0x40] sm:$0xff]
      %v3237 = vld [vmem:[#allocation4 + $0x48] sm:$0xff]
      %v3238 = vld [vmem:[#allocation4 + $0x50] sm:$0xff]
      %v3239 = vld [vmem:[#allocation4 + $0x58] sm:$0xff]
      %v3240 = vld [vmem:[#allocation4 + $0x60] sm:$0xff]
      %v3241 = vld [vmem:[#allocation4 + $0x68] sm:$0xff]
      %v3242 = vld [vmem:[#allocation4 + $0x70] sm:$0xff]
      %v3243 = vld [vmem:[#allocation4 + $0x78] sm:$0xff]
      %v3244 = vld [vmem:[#allocation4 + $0x80] sm:$0xff]
      %v3245 = vld [vmem:[#allocation4 + $0x88] sm:$0xff]
      %v3246 = vld [vmem:[#allocation4 + $0x90] sm:$0xff]
      %v3247 = vld [vmem:[#allocation4 + $0x98] sm:$0xff]
      %v3248 = vpack.c.bf16 %v3229, %v3228
      %v3249 = vpack.c.bf16 %v3231, %v3230
      %v3250 = vpack.c.bf16 %v3233, %v3232
      %v3251 = vpack.c.bf16 %v3235, %v3234
      %v3252 = vpack.c.bf16 %v3237, %v3236
      %v3253 = vpack.c.bf16 %v3239, %v3238
      %v3254 = vpack.c.bf16 %v3241, %v3240
      %v3255 = vpack.c.bf16 %v3243, %v3242
      %v3256 = vpack.c.bf16 %v3245, %v3244
      %v3257 = vpack.c.bf16 %v3247, %v3246
      %v3258 = vld [vmem:[%s5] sm:$0xf]
      %v3259 = vld [vmem:[%s5 + $0x4] sm:$0xf]
      %v3260 = vld [vmem:[%s5 + $0x8] sm:$0xf]
      %v3261 = vld [vmem:[%s5 + $0xc] sm:$0xf]
      %v3262 = vld [vmem:[%s5 + $0x10] sm:$0xf]
      %v3263 = vld [vmem:[%s5 + $0x14] sm:$0xf]
      %v3264 = vld [vmem:[%s5 + $0x18] sm:$0xf]
      %v3265 = vld [vmem:[%s5 + $0x1c] sm:$0xf]
      %v3266 = vld [vmem:[%s5 + $0x20] sm:$0xf]
      %v3276 = vunpack.c.l.b16 %v3258
      %v3277 = vunpack.c.l.b16 %v3259
      %v3278 = vunpack.c.l.b16 %v3260
      %v3279 = vunpack.c.l.b16 %v3261
      %v3280 = vunpack.c.l.b16 %v3262
      %v3281 = vunpack.c.l.b16 %v3263
      %v3282 = vunpack.c.l.b16 %v3264
      %v3283 = vunpack.c.l.b16 %v3265
      %v3284 = vunpack.c.l.b16 %v3266
      %v3285 = vpack.c.b16 %v3277, %v3276
      %v3286 = vpack.c.b16 %v3279, %v3278
      %v3287 = vpack.c.b16 %v3281, %v3280
      %v3288 = vpack.c.b16 %v3283, %v3282
      %v3289 = vpack.c.b16 %v3284, %v3284
      %v3295 = vsel %vm1747, %v3248, 0
      %v3298 = vsel %vm1747, %v3249, 0
      %v3301 = vsel %vm1747, %v3250, 0
      %v3304 = vsel %vm1747, %v3251, 0
      %v3307 = vsel %vm1747, %v3252, 0
      %v3310 = vsel %vm1747, %v3253, 0
      %v3313 = vsel %vm1747, %v3254, 0
      %v3316 = vsel %vm1747, %v3255, 0
      %v3319 = vsel %vm1747, %v3256, 0
      %v3322 = vsel %vm1747, %v3257, 0
      %v3325 = vsel %vm1787, %v3289, 0
      %3327 = vmatprep.subr.bf16.mxu0 0
      %3328 = vmatpush1.bf16.msra.mxu0 %v3285
      %3329 = vmatprep.subr.bf16.mxu0 0
      %3330 = vmatpush1.bf16.msra.mxu0 %v3286
      %3331 = vmatprep.subr.bf16.mxu0 0
      %3332 = vmatpush1.bf16.msra.mxu0 %v3287
      %3333 = vmatprep.subr.bf16.mxu0 0
      %3334 = vmatpush1.bf16.msra.mxu0 %v3288
      %3335 = vmatprep.subr.bf16.mxu0 0
      %3336 = vmatpush1.bf16.msra.mxu0 %v3325
      %3337 = vmatprep.subr.bf16.mxu0 0
      %3338 = vmatpush1.bf16.msra.mxu0 0
      %3339 = vmatprep.subr.bf16.mxu0 0
      %3340 = vmatpush1.bf16.msra.mxu0 0
      %3341 = vmatprep.subr.bf16.mxu0 0
      %3342 = vmatpush1.bf16.msra.mxu0 0
      %3343 = vmatprep.subr.bf16.mxu0 0
      %3344 = vmatpush1.bf16.msra.mxu0 0
      %3345 = vmatprep.subr.bf16.mxu0 0
      %3346 = vmatpush1.bf16.msra.mxu0 0
      %3347 = vmatprep.subr.bf16.mxu0 0
      %3348 = vmatpush1.bf16.msra.mxu0 0
      %3349 = vmatprep.subr.bf16.mxu0 0
      %3350 = vmatpush1.bf16.msra.mxu0 0
      %3351 = vmatprep.subr.bf16.mxu0 0
      %3352 = vmatpush1.bf16.msra.mxu0 0
      %3353 = vmatprep.subr.bf16.mxu0 0
      %3354 = vmatpush1.bf16.msra.mxu0 0
      %3355 = vmatprep.subr.bf16.mxu0 0
      %3356 = vmatpush1.bf16.msra.mxu0 0
      %3357 = vmatprep.subr.bf16.mxu0 0
      %3358 = vmatpush1.bf16.msra.mxu0 0
      %3359 = vmatprep.mubr.bf16.mxu0 0
      %3360 = vmatmul.mubr.bf16.gmra.mrb[0].mxu0 %v3295
      %v3361 = vpop.f32.mrb[0].mxu0
      %v3362 = vadd.f32 0.0, %v3361
      %v3363 = vpop.f32.mrb[0].mxu0
      %v3364 = vpop.f32.mrb[0].mxu0
      %v3365 = vadd.f32 0.0, %v3364
      %v3366 = vpop.f32.mrb[0].mxu0
      %3367 = vmatprep.mubr.bf16.mxu0 0
      %3368 = vmatmul.mubr.bf16.gmra.mrb[0].mxu0 %v3298
      %v3369 = vpop.f32.mrb[0].mxu0
      %v3370 = vadd.f32 0.0, %v3369
      %v3371 = vpop.f32.mrb[0].mxu0
      %v3372 = vpop.f32.mrb[0].mxu0
      %v3373 = vadd.f32 0.0, %v3372
      %v3374 = vpop.f32.mrb[0].mxu0
      %3375 = vmatprep.mubr.bf16.mxu0 0
      %3376 = vmatmul.mubr.bf16.gmra.mrb[0].mxu0 %v3301
      %v3377 = vpop.f32.mrb[0].mxu0
      %v3378 = vadd.f32 0.0, %v3377
      %v3379 = vpop.f32.mrb[0].mxu0
      %v3380 = vpop.f32.mrb[0].mxu0
      %v3381 = vadd.f32 0.0, %v3380
      %v3382 = vpop.f32.mrb[0].mxu0
      %3383 = vmatprep.mubr.bf16.mxu0 0
      %3384 = vmatmul.mubr.bf16.gmra.mrb[0].mxu0 %v3304
      %v3385 = vpop.f32.mrb[0].mxu0
      %v3386 = vadd.f32 0.0, %v3385
      %v3387 = vpop.f32.mrb[0].mxu0
      %v3388 = vpop.f32.mrb[0].mxu0
      %v3389 = vadd.f32 0.0, %v3388
      %v3390 = vpop.f32.mrb[0].mxu0
      %3391 = vmatprep.mubr.bf16.mxu0 0
      %3392 = vmatmul.mubr.bf16.gmra.mrb[0].mxu0 %v3307
      %v3393 = vpop.f32.mrb[0].mxu0
      %v3394 = vadd.f32 0.0, %v3393
      %v3395 = vpop.f32.mrb[0].mxu0
      %v3396 = vpop.f32.mrb[0].mxu0
      %v3397 = vadd.f32 0.0, %v3396
      %v3398 = vpop.f32.mrb[0].mxu0
      %3399 = vmatprep.mubr.bf16.mxu0 0
      %3400 = vmatmul.mubr.bf16.gmra.mrb[0].mxu0 %v3310
      %v3401 = vpop.f32.mrb[0].mxu0
      %v3402 = vadd.f32 0.0, %v3401
      %v3403 = vpop.f32.mrb[0].mxu0
      %v3404 = vpop.f32.mrb[0].mxu0
      %v3405 = vadd.f32 0.0, %v3404
      %v3406 = vpop.f32.mrb[0].mxu0
      %3407 = vmatprep.mubr.bf16.mxu0 0
      %3408 = vmatmul.mubr.bf16.gmra.mrb[0].mxu0 %v3313
      %v3409 = vpop.f32.mrb[0].mxu0
      %v3410 = vadd.f32 0.0, %v3409
      %v3411 = vpop.f32.mrb[0].mxu0
      %v3412 = vpop.f32.mrb[0].mxu0
      %v3413 = vadd.f32 0.0, %v3412
      %v3414 = vpop.f32.mrb[0].mxu0
      %3415 = vmatprep.mubr.bf16.mxu0 0
      %3416 = vmatmul.mubr.bf16.gmra.mrb[0].mxu0 %v3316
      %v3417 = vpop.f32.mrb[0].mxu0
      %v3418 = vadd.f32 0.0, %v3417
      %v3419 = vpop.f32.mrb[0].mxu0
      %v3420 = vpop.f32.mrb[0].mxu0
      %v3421 = vadd.f32 0.0, %v3420
      %v3422 = vpop.f32.mrb[0].mxu0
      %3423 = vmatprep.mubr.bf16.mxu0 0
      %3424 = vmatmul.mubr.bf16.gmra.mrb[0].mxu0 %v3319
      %v3425 = vpop.f32.mrb[0].mxu0
      %v3426 = vadd.f32 0.0, %v3425
      %v3427 = vpop.f32.mrb[0].mxu0
      %v3428 = vpop.f32.mrb[0].mxu0
      %v3429 = vadd.f32 0.0, %v3428
      %v3430 = vpop.f32.mrb[0].mxu0
      %3431 = vmatprep.mubr.bf16.mxu0 0
      %3432 = vmatmul.mubr.bf16.gmra.mrb[0].mxu0 %v3322
      %v3433 = vpop.f32.mrb[0].mxu0
      %v3434 = vadd.f32 0.0, %v3433
      %v3435 = vpop.f32.mrb[0].mxu0
      %v3436 = vpop.f32.mrb[0].mxu0
      %v3437 = vadd.f32 0.0, %v3436
      %v3438 = vpop.f32.mrb[0].mxu0
      %3439 = vdwg.mxu0
      %v3440 = vld [vmem:[%s6] sm:$0x1]
      %v3442 = vlaneseq
      %v3443 = vshrl.u32 %v3442, 7
      %v3444 = vsub.s32 0, %v3443
      %v3445 = vrot.slane %v3440, %v3444
      %v3447 = vmul.f32 %v3362, %v3445
      %v3448 = vmul.f32 %v3365, %v3445
      %v3449 = vmul.f32 %v3370, %v3445
      %v3450 = vmul.f32 %v3373, %v3445
      %v3451 = vmul.f32 %v3378, %v3445
      %v3452 = vmul.f32 %v3381, %v3445
      %v3453 = vmul.f32 %v3386, %v3445
      %v3454 = vmul.f32 %v3389, %v3445
      %v3455 = vmul.f32 %v3394, %v3445
      %v3456 = vmul.f32 %v3397, %v3445
      %v3457 = vmul.f32 %v3402, %v3445
      %v3458 = vmul.f32 %v3405, %v3445
      %v3459 = vmul.f32 %v3410, %v3445
      %v3460 = vmul.f32 %v3413, %v3445
      %v3461 = vmul.f32 %v3418, %v3445
      %v3462 = vmul.f32 %v3421, %v3445
      %v3463 = vmul.f32 %v3426, %v3445
      %v3464 = vmul.f32 %v3429, %v3445
      %v3465 = vmul.f32 %v3434, %v3445
      %v3466 = vmul.f32 %v3437, %v3445
      %v3467 = vld [vmem:[%s7] sm:$0x1]
      %v3469 = vlaneseq
      %v3470 = vshrl.u32 %v3469, 7
      %v3471 = vsub.s32 0, %v3470
      %v3472 = vrot.slane %v3467, %v3471
      %v3474 = vadd.f32 %v3447, %v3472
      %v3475 = vadd.f32 %v3448, %v3472
      %v3476 = vadd.f32 %v3449, %v3472
      %v3477 = vadd.f32 %v3450, %v3472
      %v3478 = vadd.f32 %v3451, %v3472
      %v3479 = vadd.f32 %v3452, %v3472
      %v3480 = vadd.f32 %v3453, %v3472
      %v3481 = vadd.f32 %v3454, %v3472
      %v3482 = vadd.f32 %v3455, %v3472
      %v3483 = vadd.f32 %v3456, %v3472
      %v3484 = vadd.f32 %v3457, %v3472
      %v3485 = vadd.f32 %v3458, %v3472
      %v3486 = vadd.f32 %v3459, %v3472
      %v3487 = vadd.f32 %v3460, %v3472
      %v3488 = vadd.f32 %v3461, %v3472
      %v3489 = vadd.f32 %v3462, %v3472
      %v3490 = vadd.f32 %v3463, %v3472
      %v3491 = vadd.f32 %v3464, %v3472
      %v3492 = vadd.f32 %v3465, %v3472
      %v3493 = vadd.f32 %v3466, %v3472
      %v3494 = vmax.f32 %v3474, 0.0
      %v3495 = vmax.f32 %v3475, 0.0
      %v3496 = vmax.f32 %v3476, 0.0
      %v3497 = vmax.f32 %v3477, 0.0
      %v3498 = vmax.f32 %v3478, 0.0
      %v3499 = vmax.f32 %v3479, 0.0
      %v3500 = vmax.f32 %v3480, 0.0
      %v3501 = vmax.f32 %v3481, 0.0
      %v3502 = vmax.f32 %v3482, 0.0
      %v3503 = vmax.f32 %v3483, 0.0
      %v3504 = vmax.f32 %v3484, 0.0
      %v3505 = vmax.f32 %v3485, 0.0
      %v3506 = vmax.f32 %v3486, 0.0
      %v3507 = vmax.f32 %v3487, 0.0
      %v3508 = vmax.f32 %v3488, 0.0
      %v3509 = vmax.f32 %v3489, 0.0
      %v3510 = vmax.f32 %v3490, 0.0
      %v3511 = vmax.f32 %v3491, 0.0
      %v3512 = vmax.f32 %v3492, 0.0
      %v3513 = vmax.f32 %v3493, 0.0
      %3514 = vst [vmem:[%s361] sm:$0xff] %v3494
      %3515 = vst [vmem:[%s361 + $0x8] sm:$0xff] %v3495
      %3516 = vst [vmem:[%s361 + $0x10] sm:$0xff] %v3496
      %3517 = vst [vmem:[%s361 + $0x18] sm:$0xff] %v3497
      %3518 = vst [vmem:[%s361 + $0x20] sm:$0xff] %v3498
      %3519 = vst [vmem:[%s361 + $0x28] sm:$0xff] %v3499
      %3520 = vst [vmem:[%s361 + $0x30] sm:$0xff] %v3500
      %3521 = vst [vmem:[%s361 + $0x38] sm:$0xff] %v3501
      %3522 = vst [vmem:[%s361 + $0x40] sm:$0xff] %v3502
      %3523 = vst [vmem:[%s361 + $0x48] sm:$0xff] %v3503
      %3524 = vst [vmem:[%s361 + $0x50] sm:$0xff] %v3504
      %3525 = vst [vmem:[%s361 + $0x58] sm:$0xff] %v3505
      %3526 = vst [vmem:[%s361 + $0x60] sm:$0xff] %v3506
      %3527 = vst [vmem:[%s361 + $0x68] sm:$0xff] %v3507
      %3528 = vst [vmem:[%s361 + $0x70] sm:$0xff] %v3508
      %3529 = vst [vmem:[%s361 + $0x78] sm:$0xff] %v3509
      %3530 = vst [vmem:[%s361 + $0x80] sm:$0xff] %v3510
      %3531 = vst [vmem:[%s361 + $0x88] sm:$0xff] %v3511
      %3532 = vst [vmem:[%s361 + $0x90] sm:$0xff] %v3512
      %3533 = vst [vmem:[%s361 + $0x98] sm:$0xff] %v3513
      %p3534 = scmp.lt.s32.totalorder %s23, 1
      %s3535 = scalar_select %p3534, %s23, 1
      %p3536 = scmp.lt.s32.totalorder %s24, 1
      %s3537 = scalar_select %p3536, %s24, 1
      %s3538 = smul.addr %s3537, 20
      %s3539 = smul.addr %s3535, 40
      %s3540 = sadd.s32 %s3538, %s3539
      %s3541 = smul.addr %s3540, 8
      %s3542 = scalar_lea.vmem %s8, %s3541
      // Predicated region
      $region53: #{up_modified_forward.1} parent=51 // pred_check
        %p3543 = pneg %p231
      $region54: #{up_modified_forward.1} parent=51 // pred_check_branch
        %3545 = sbr.rel (%p3543) target = $region56
      $region55: #{up_modified_forward.1} parent=51 // pred_region
        _
      $region56: #{up_modified_forward.1} parent=51 // pred_fallthru
        _
    $region52: #{up_modified_forward.1} parent=5 // pred_fallthru
      _
    %p3546 = scmp.le.s32.totalorder 2, %s14
    // Predicated region
    $region57: #{up_modified_forward.1} parent=5 // pred_check
      %p3547 = pneg %p3546
    $region58: #{up_modified_forward.1} parent=5 // pred_check_branch
      %3549 = sbr.rel (%p3547) target = $region60
    $region59: #{up_modified_forward.1} parent=5 // pred_region
      %s3550 = ssub.s32 %s14, 2
      // Predicated region
      $region61: #{up_modified_forward.1} parent=59 // pred_check
        %p3551 = pneg %p237
      $region62: #{up_modified_forward.1} parent=59 // pred_check_branch
        %3553 = sbr.rel (%p3551) target = $region64
      $region63: #{up_modified_forward.1} parent=59 // pred_region
        %p3554 = scmp.lt.s32.totalorder %s25, 1
        %s3555 = scalar_select %p3554, %s25, 1
        %p3556 = scmp.lt.s32.totalorder %s26, 1
        %s3557 = scalar_select %p3556, %s26, 1
        %s3558 = smul.addr %s3557, 20
        %s3559 = smul.addr %s3555, 40
        %s3560 = sadd.s32 %s3558, %s3559
        %s3561 = smul.addr %s3560, 8
        %s3562 = scalar_lea.vmem %s8, %s3561
      $region64: #{up_modified_forward.1} parent=59 // pred_fallthru
        _
    $region60: #{up_modified_forward.1} parent=5 // pred_fallthru
      _
  $region6: #{up_modified_forward.1} parent=0 // loop_footer
    %s18 = sadd.s32 1, %s14
  $region7: #{up_modified_forward.1} parent=0 // loop_footer_branch
    %13 = sbr.rel target = $region3
  $region8: #{up_modified_forward.1} parent=0 // loop_exit
    _

</llo_original>
